<compile_context>
chip_gen: v7x
topology: tpu7x:2x2x1
jax: 0.10.0
libtpu: 0.0.40
codegen_flags: <defaults>
</compile_context>

<pallas_src>
import functools

import jax
import jax.numpy as jnp
from jax import lax
from jax.experimental import pallas as pl
from jax.experimental.pallas import tpu as pltpu

NUM_FILTERS = 32
KSIZE = 3
STRIDES = (2, 1, 1, 1)
_ROWS_PER_BLOCK_CAP = 4096          # cap on M per grid step (staging tile ~2.3 MiB)


def conv2d_size_out(size, kernel_size=KSIZE, stride=1):
    # same as utils.conv2d_size_out in the PyTorch code
    return (size - (kernel_size - 1) - 1) // stride + 1


def _round_up(x, m):
    return ((x + m - 1) // m) * m


def _plan(h, w):
    """Static geometry.  Activations are stored row-flat with row = i*w1 + j
    (w1 = width after layer 1); a stride-1 3x3 conv is then 9 row-shifted taps
    with shift = kh*w1 + kw.  Returns spatial sizes, w1, the uniform per-sample
    row stride R and the guard-row count."""
    hs, ws = [h], [w]
    for s in STRIDES:
        hs.append(conv2d_size_out(hs[-1], KSIZE, s))
        ws.append(conv2d_size_out(ws[-1], KSIZE, s))
    assert hs[-1] >= 1 and ws[-1] >= 1, "observation too small for 4 conv layers"
    w1 = ws[1]
    off_max = (KSIZE - 1) * w1 + (KSIZE - 1)            # largest tap shift
    need = [(hs[l] - 1) * w1 + ws[l] for l in range(1, 5)]
    # Invariants guaranteeing that valid output rows of layer l only read valid
    # rows of layer l-1 of the *same* sample, and that any cross-sample reads
    # land exclusively in invalid (discarded) rows.
    for l in range(1, 4):
        assert need[l] == need[l - 1] - off_max
    r = _round_up(need[0], 8)                           # per-sample row stride
    guard = _round_up(off_max, 8)
    assert r >= need[0] and guard >= off_max
    return hs, ws, w1, r, guard


# ---------------------------------------------------------------------------
# Fused Pallas kernel: 4 x (conv3x3 + bias + ReLU), whole batch block per step
# ---------------------------------------------------------------------------
def _encoder_kernel(m_rows, w1_width, p_ref, w1_ref, w234_ref, b_ref, o_ref,
                    act_a, act_b, stage):
    m = m_rows
    f = NUM_FILTERS

    # zero the guard tails so row-shifted reads past the last sample's valid
    # rows never see uninitialised VMEM (they only feed discarded rows anyway)
    g = act_a.shape[0] - m
    zero_tail = jnp.zeros((g, f), jnp.bfloat16)
    act_a[m:, :] = zero_tail
    act_b[m:, :] = zero_tail

    # ---- layer 1: one (M, K1) @ (K1, 32) MXU matmul over stride-2 patches ----
    y = jnp.dot(p_ref[...], w1_ref[...], preferred_element_type=jnp.float32)
    act_a[0:m, :] = jnp.maximum(y + b_ref[0:1, :], 0.0).astype(jnp.bfloat16)

    # ---- layers 2..4: fused-K 3x3 conv: 9 taps -> (M, 288) staging -> 1 dot ----
    def conv3x3_relu(src, w_idx):
        for kh in range(KSIZE):
            for kw in range(KSIZE):
                t = kh * KSIZE + kw
                shift = kh * w1_width + kw
                stage[:, t * f:(t + 1) * f] = src[shift:shift + m, :]
        y = jnp.dot(stage[...], w234_ref[w_idx],
                    preferred_element_type=jnp.float32)
        return jnp.maximum(y + b_ref[w_idx + 1:w_idx + 2, :], 0.0)

    act_b[0:m, :] = conv3x3_relu(act_a, 0).astype(jnp.bfloat16)   # layer 2
    act_a[0:m, :] = conv3x3_relu(act_b, 1).astype(jnp.bfloat16)   # layer 3
    o_ref[...] = conv3x3_relu(act_a, 2)                           # layer 4 (f32)


# ---------------------------------------------------------------------------
# Parameters (deterministic synthetic init; stands in for utils.weight_init)
# ---------------------------------------------------------------------------
def init_encoder_params(key, in_channels):
    params = []
    c_in = in_channels
    for _ in range(4):
        key, kw_, kb_ = jax.random.split(key, 3)
        fan_in = KSIZE * KSIZE * c_in
        w = jax.random.normal(kw_, (KSIZE, KSIZE, c_in, NUM_FILTERS), jnp.float32)
        w = w / jnp.sqrt(jnp.float32(fan_in))
        b = 0.1 * jax.random.normal(kb_, (NUM_FILTERS,), jnp.float32)
        params.append((w, b))
        c_in = NUM_FILTERS
    return params


def pack_params(params, max_val=100.0):
    """One-time packing: lane-pad layer-1 K, reshape layers 2-4 to (3, 288, 32)
    for the fused-K matmuls, stack biases, cast MXU operands to bf16."""
    c_in = params[0][0].shape[2]
    k1 = KSIZE * KSIZE * c_in
    k1p = _round_up(k1, 128)                                     # lane-aligned K
    w1 = params[0][0].reshape(k1, NUM_FILTERS)
    w1p = jnp.pad(w1, ((0, k1p - k1), (0, 0))).astype(jnp.bfloat16)       # (K1p, F)
    w234 = jnp.stack(
        [w.reshape(KSIZE * KSIZE * NUM_FILTERS, NUM_FILTERS) for (w, _) in params[1:]]
    ).astype(jnp.bfloat16)                                       # (3, 9F, F)
    b_all = jnp.stack([b for (_, b) in params]).astype(jnp.float32)       # (4, F)
    inv_max = jnp.float32(1.0 / max_val)
    return w1p, w234, b_all, inv_max


# ---------------------------------------------------------------------------
# Encoder forward (matches Encoder.forward semantics)
# ---------------------------------------------------------------------------
@jax.jit
def encoder_forward(obs_nchw, packed_params):
    w1p, w234, b_all, inv_max = packed_params
    n, c_in, h, w = obs_nchw.shape
    hs, ws, w1_width, r, guard = _plan(h, w)
    h1, w1_ = hs[1], ws[1]
    k1 = KSIZE * KSIZE * c_in
    k1p = w1p.shape[0]

    # batch blocking: >=2 blocks when batch permits (v7x: 2 TCs), cap rows/block
    num_blocks = min(n, max(2 if n >= 2 else 1, -(-(n * r) // _ROWS_PER_BLOCK_CAP)))
    b_blk = -(-n // num_blocks)
    num_blocks = -(-n // b_blk)
    n_pad = num_blocks * b_blk
    m_blk = b_blk * r

    # layer-1 im2col (stride 2): scale in f32 before the bf16 cast, then pure
    # data rearrangement; one pad covers row padding, batch padding and K padding
    x = (jnp.transpose(obs_nchw, (0, 2, 3, 1)) * inv_max).astype(jnp.bfloat16)
    cols = [x[:, i:i + 2 * h1:2, j:j + 2 * w1_:2, :]
            for i in range(KSIZE) for j in range(KSIZE)]
    p = jnp.concatenate(cols, axis=-1).reshape(n, h1 * w1_, k1)
    p = jnp.pad(p, ((0, n_pad - n), (0, r - h1 * w1_), (0, k1p - k1)))
    p = p.reshape(n_pad * r, k1p)                                # (n_pad*R, K1p)

    kernel = functools.partial(_encoder_kernel, m_blk, w1_width)
    out = pl.pallas_call(
        kernel,
        out_shape=jax.ShapeDtypeStruct((n_pad * r, NUM_FILTERS), jnp.float32),
        grid=(num_blocks,),
        in_specs=[
            pl.BlockSpec((m_blk, k1p), lambda i: (i, 0)),
            pl.BlockSpec((k1p, NUM_FILTERS), lambda i: (0, 0)),
            pl.BlockSpec((3, KSIZE * KSIZE * NUM_FILTERS, NUM_FILTERS),
                         lambda i: (0, 0, 0)),
            pl.BlockSpec((4, NUM_FILTERS), lambda i: (0, 0)),
        ],
        out_specs=pl.BlockSpec((m_blk, NUM_FILTERS), lambda i: (i, 0)),
        scratch_shapes=[
            pltpu.VMEM((m_blk + guard, NUM_FILTERS), jnp.bfloat16),   # act A
            pltpu.VMEM((m_blk + guard, NUM_FILTERS), jnp.bfloat16),   # act B
            pltpu.VMEM((m_blk, KSIZE * KSIZE * NUM_FILTERS), jnp.bfloat16),  # stage
        ],
        compiler_params=pltpu.CompilerParams(dimension_semantics=("parallel",)),
    )(p, w1p, w234, b_all)

    # extract valid rows and flatten channel-major (== h.view(N, -1) on NCHW),
    # using only cheap reshape/slice ops (no gather)
    h4, w4 = hs[4], ws[4]
    feat = out.reshape(n_pad, r, NUM_FILTERS)[:n, :h4 * w1_width]
    feat = feat.reshape(n, h4, w1_width, NUM_FILTERS)[:, :, :w4, :]
    return jnp.transpose(feat, (0, 3, 1, 2)).reshape(n, -1)


# ---------------------------------------------------------------------------
# Pure-JAX references (for correctness checks only)
# ---------------------------------------------------------------------------
def encoder_reference(obs_nchw, params, max_val, *, matmul_dtype, precision=None):
    """matmul_dtype=bfloat16 mirrors the kernel's MXU numerics (bf16 operands,
    f32 accumulation); float32 + HIGHEST is the exact fp32 semantics of the
    original PyTorch module."""
    x = jnp.transpose(obs_nchw, (0, 2, 3, 1)).astype(jnp.float32) / jnp.float32(max_val)
    for layer, (w, b) in enumerate(params):
        y = lax.conv_general_dilated(
            x.astype(matmul_dtype), w.astype(matmul_dtype),
            window_strides=(STRIDES[layer], STRIDES[layer]),
            padding="VALID",
            dimension_numbers=("NHWC", "HWIO", "NHWC"),
            preferred_element_type=jnp.float32,
            precision=precision,
        )
        x = jnp.maximum(y + b.reshape(1, 1, 1, -1), 0.0)
    return jnp.transpose(x, (0, 3, 1, 2)).reshape(x.shape[0], -1)


if __name__ == "__main__":
    key = jax.random.PRNGKey(0)
    k_obs, k_par = jax.random.split(key)

    batch = 2
    obs_shape = (4, 16, 16)          # (C, H, W), PyTorch convention
    max_val = 100.0
    obs = jax.random.uniform(k_obs, (batch,) + obs_shape, jnp.float32,
                             minval=0.0, maxval=max_val)

    params = init_encoder_params(k_par, obs_shape[0])
    packed = pack_params(params, max_val=max_val)

    h = encoder_forward(obs, packed)
    h = jax.block_until_ready(h)

    # repr_dim check: num_filters * cw * cw
    cw = obs_shape[-1]
    for s in STRIDES:
        cw = conv2d_size_out(cw, KSIZE, s)
    assert h.shape == (batch, NUM_FILTERS * cw * cw), h.shape

    # (1) structural check against a reference with identical MXU numerics
    ref_bf16 = encoder_reference(obs, params, max_val, matmul_dtype=jnp.bfloat16)
    assert jnp.allclose(h, ref_bf16, rtol=1e-2, atol=1e-2), \
        float(jnp.max(jnp.abs(h - ref_bf16)))

    # (2) fidelity check against full-f32 semantics of the PyTorch module
    ref_f32 = encoder_reference(obs, params, max_val, matmul_dtype=jnp.float32,
                                precision=lax.Precision.HIGHEST)
    assert jnp.allclose(h, ref_f32, rtol=5e-2, atol=5e-2), \
        float(jnp.max(jnp.abs(h - ref_f32)))

    print("KERNEL_OK")
</pallas_src>

<mosaic_0001>
module attributes {stable_mosaic.version = 11 : i64} {
  func.func @_encoder_kernel(%arg0: i32, %arg1: memref<56x128xbf16, #tpu.memory_space<vmem>>, %arg2: memref<128x32xbf16, #tpu.memory_space<vmem>>, %arg3: memref<3x288x32xbf16, #tpu.memory_space<vmem>>, %arg4: memref<4x32xf32, #tpu.memory_space<vmem>>, %arg5: memref<56x32xf32, #tpu.memory_space<vmem>>, %arg6: memref<72x32xbf16, #tpu.memory_space<vmem>>, %arg7: memref<72x32xbf16, #tpu.memory_space<vmem>>, %arg8: memref<56x288xbf16, #tpu.memory_space<vmem>>) attributes {dimension_semantics = [#tpu.dimension_semantics<parallel>], iteration_bounds = array<i64: 2>, scalar_prefetch = 0 : i64, scratch_operands = 3 : i64, tpu.core_type = #tpu.core_type<tc>, window_params = [{transform_indices = @transform_0, window_bounds = array<i64: 56, 128>}, {pipeline_mode = #tpu.pipeline_mode<synchronous>, transform_indices = @transform_1, window_bounds = array<i64: 128, 32>}, {pipeline_mode = #tpu.pipeline_mode<synchronous>, transform_indices = @transform_2, window_bounds = array<i64: 3, 288, 32>}, {pipeline_mode = #tpu.pipeline_mode<synchronous>, transform_indices = @transform_3, window_bounds = array<i64: 4, 32>}, {transform_indices = @transform_4, window_bounds = array<i64: 56, 32>}]} {
    %cst = arith.constant 0.000000e+00 : bf16
    %0 = vector.broadcast %cst : bf16 to vector<16x32xbf16>
    %c56 = arith.constant 56 : index
    %c0 = arith.constant 0 : index
    %1 = vector.load %arg6[%c56, %c0] : memref<72x32xbf16, #tpu.memory_space<vmem>>, vector<16x32xbf16>
    tpu.vector_store %arg6[%c56, %c0], %0 {strides = array<i32>} : memref<72x32xbf16, #tpu.memory_space<vmem>>, vector<16x32xbf16>,
    %c56_0 = arith.constant 56 : index
    %c0_1 = arith.constant 0 : index
    %2 = vector.load %arg7[%c56_0, %c0_1] : memref<72x32xbf16, #tpu.memory_space<vmem>>, vector<16x32xbf16>
    tpu.vector_store %arg7[%c56_0, %c0_1], %0 {strides = array<i32>} : memref<72x32xbf16, #tpu.memory_space<vmem>>, vector<16x32xbf16>,
    %c0_2 = arith.constant 0 : index
    %c0_3 = arith.constant 0 : index
    %3 = vector.load %arg1[%c0_2, %c0_3] : memref<56x128xbf16, #tpu.memory_space<vmem>>, vector<56x128xbf16>
    %c0_4 = arith.constant 0 : index
    %c0_5 = arith.constant 0 : index
    %4 = vector.load %arg2[%c0_4, %c0_5] : memref<128x32xbf16, #tpu.memory_space<vmem>>, vector<128x32xbf16>
    %cst_6 = arith.constant dense<0.000000e+00> : vector<56x32xf32>
    %5 = tpu.matmul %3, %4, %cst_6 {dimension_numbers = #tpu.dot_dimension_numbers<[1], [0], [0], [1], [0, 0, 1, 1], [], []>} : vector<56x128xbf16>, vector<128x32xbf16>, vector<56x32xf32> -> vector<56x32xf32>
    %c0_7 = arith.constant 0 : index
    %c0_8 = arith.constant 0 : index
    %6 = vector.load %arg4[%c0_7, %c0_8] : memref<4x32xf32, #tpu.memory_space<vmem>>, vector<1x32xf32>
    %7 = vector.broadcast %6 : vector<1x32xf32> to vector<56x32xf32>
    %8 = arith.addf %5, %7 : vector<56x32xf32>
    %cst_9 = arith.constant 0.000000e+00 : f32
    %9 = vector.broadcast %cst_9 : f32 to vector<56x32xf32>
    %10 = arith.maximumf %8, %9 : vector<56x32xf32>
    %11 = arith.truncf %10 : vector<56x32xf32> to vector<56x32xbf16>
    %c0_10 = arith.constant 0 : index
    %c0_11 = arith.constant 0 : index
    %12 = vector.load %arg6[%c0_10, %c0_11] : memref<72x32xbf16, #tpu.memory_space<vmem>>, vector<56x32xbf16>
    tpu.vector_store %arg6[%c0_10, %c0_11], %11 {strides = array<i32>} : memref<72x32xbf16, #tpu.memory_space<vmem>>, vector<56x32xbf16>,
    %c0_12 = arith.constant 0 : index
    %c0_13 = arith.constant 0 : index
    %13 = vector.load %arg6[%c0_12, %c0_13] : memref<72x32xbf16, #tpu.memory_space<vmem>>, vector<56x32xbf16>
    %c0_14 = arith.constant 0 : index
    %c0_15 = arith.constant 0 : index
    %14 = vector.load %arg8[%c0_14, %c0_15] : memref<56x288xbf16, #tpu.memory_space<vmem>>, vector<56x32xbf16>
    tpu.vector_store %arg8[%c0_14, %c0_15], %13 {strides = array<i32>} : memref<56x288xbf16, #tpu.memory_space<vmem>>, vector<56x32xbf16>,
    %c1 = arith.constant 1 : index
    %c0_16 = arith.constant 0 : index
    %15 = vector.load %arg6[%c1, %c0_16] : memref<72x32xbf16, #tpu.memory_space<vmem>>, vector<56x32xbf16>
    %c0_17 = arith.constant 0 : index
    %c32 = arith.constant 32 : index
    %16 = vector.load %arg8[%c0_17, %c32] : memref<56x288xbf16, #tpu.memory_space<vmem>>, vector<56x32xbf16>
    tpu.vector_store %arg8[%c0_17, %c32], %15 {strides = array<i32>} : memref<56x288xbf16, #tpu.memory_space<vmem>>, vector<56x32xbf16>,
    %c2 = arith.constant 2 : index
    %c0_18 = arith.constant 0 : index
    %17 = vector.load %arg6[%c2, %c0_18] : memref<72x32xbf16, #tpu.memory_space<vmem>>, vector<56x32xbf16>
    %c0_19 = arith.constant 0 : index
    %c64 = arith.constant 64 : index
    %18 = vector.load %arg8[%c0_19, %c64] : memref<56x288xbf16, #tpu.memory_space<vmem>>, vector<56x32xbf16>
    tpu.vector_store %arg8[%c0_19, %c64], %17 {strides = array<i32>} : memref<56x288xbf16, #tpu.memory_space<vmem>>, vector<56x32xbf16>,
    %c7 = arith.constant 7 : index
    %c0_20 = arith.constant 0 : index
    %19 = vector.load %arg6[%c7, %c0_20] : memref<72x32xbf16, #tpu.memory_space<vmem>>, vector<56x32xbf16>
    %c0_21 = arith.constant 0 : index
    %c96 = arith.constant 96 : index
    %20 = vector.load %arg8[%c0_21, %c96] : memref<56x288xbf16, #tpu.memory_space<vmem>>, vector<56x32xbf16>
    tpu.vector_store %arg8[%c0_21, %c96], %19 {strides = array<i32>} : memref<56x288xbf16, #tpu.memory_space<vmem>>, vector<56x32xbf16>,
    %c8 = arith.constant 8 : index
    %c0_22 = arith.constant 0 : index
    %21 = vector.load %arg6[%c8, %c0_22] : memref<72x32xbf16, #tpu.memory_space<vmem>>, vector<56x32xbf16>
    %c0_23 = arith.constant 0 : index
    %c128 = arith.constant 128 : index
    %22 = vector.load %arg8[%c0_23, %c128] : memref<56x288xbf16, #tpu.memory_space<vmem>>, vector<56x32xbf16>
    tpu.vector_store %arg8[%c0_23, %c128], %21 {strides = array<i32>} : memref<56x288xbf16, #tpu.memory_space<vmem>>, vector<56x32xbf16>,
    %c9 = arith.constant 9 : index
    %c0_24 = arith.constant 0 : index
    %23 = vector.load %arg6[%c9, %c0_24] : memref<72x32xbf16, #tpu.memory_space<vmem>>, vector<56x32xbf16>
    %c0_25 = arith.constant 0 : index
    %c160 = arith.constant 160 : index
    %24 = vector.load %arg8[%c0_25, %c160] : memref<56x288xbf16, #tpu.memory_space<vmem>>, vector<56x32xbf16>
    tpu.vector_store %arg8[%c0_25, %c160], %23 {strides = array<i32>} : memref<56x288xbf16, #tpu.memory_space<vmem>>, vector<56x32xbf16>,
    %c14 = arith.constant 14 : index
    %c0_26 = arith.constant 0 : index
    %25 = vector.load %arg6[%c14, %c0_26] : memref<72x32xbf16, #tpu.memory_space<vmem>>, vector<56x32xbf16>
    %c0_27 = arith.constant 0 : index
    %c192 = arith.constant 192 : index
    %26 = vector.load %arg8[%c0_27, %c192] : memref<56x288xbf16, #tpu.memory_space<vmem>>, vector<56x32xbf16>
    tpu.vector_store %arg8[%c0_27, %c192], %25 {strides = array<i32>} : memref<56x288xbf16, #tpu.memory_space<vmem>>, vector<56x32xbf16>,
    %c15 = arith.constant 15 : index
    %c0_28 = arith.constant 0 : index
    %27 = vector.load %arg6[%c15, %c0_28] : memref<72x32xbf16, #tpu.memory_space<vmem>>, vector<56x32xbf16>
    %c0_29 = arith.constant 0 : index
    %c224 = arith.constant 224 : index
    %28 = vector.load %arg8[%c0_29, %c224] : memref<56x288xbf16, #tpu.memory_space<vmem>>, vector<56x32xbf16>
    tpu.vector_store %arg8[%c0_29, %c224], %27 {strides = array<i32>} : memref<56x288xbf16, #tpu.memory_space<vmem>>, vector<56x32xbf16>,
    %c16 = arith.constant 16 : index
    %c0_30 = arith.constant 0 : index
    %29 = vector.load %arg6[%c16, %c0_30] : memref<72x32xbf16, #tpu.memory_space<vmem>>, vector<56x32xbf16>
    %c0_31 = arith.constant 0 : index
    %c256 = arith.constant 256 : index
    %30 = vector.load %arg8[%c0_31, %c256] : memref<56x288xbf16, #tpu.memory_space<vmem>>, vector<56x32xbf16>
    tpu.vector_store %arg8[%c0_31, %c256], %29 {strides = array<i32>} : memref<56x288xbf16, #tpu.memory_space<vmem>>, vector<56x32xbf16>,
    %c0_32 = arith.constant 0 : index
    %c0_33 = arith.constant 0 : index
    %31 = vector.load %arg8[%c0_32, %c0_33] : memref<56x288xbf16, #tpu.memory_space<vmem>>, vector<56x288xbf16>
    %c0_34 = arith.constant 0 : index
    %c0_35 = arith.constant 0 : index
    %c0_36 = arith.constant 0 : index
    %32 = vector.load %arg3[%c0_34, %c0_35, %c0_36] : memref<3x288x32xbf16, #tpu.memory_space<vmem>>, vector<1x288x32xbf16>
    %33 = vector.shape_cast %32 : vector<1x288x32xbf16> to vector<288x32xbf16>
    %cst_37 = arith.constant dense<0.000000e+00> : vector<56x32xf32>
    %34 = tpu.matmul %31, %33, %cst_37 {dimension_numbers = #tpu.dot_dimension_numbers<[1], [0], [0], [1], [0, 0, 1, 1], [], []>} : vector<56x288xbf16>, vector<288x32xbf16>, vector<56x32xf32> -> vector<56x32xf32>
    %c1_38 = arith.constant 1 : index
    %c0_39 = arith.constant 0 : index
    %35 = vector.load %arg4[%c1_38, %c0_39] : memref<4x32xf32, #tpu.memory_space<vmem>>, vector<1x32xf32>
    %36 = vector.broadcast %35 : vector<1x32xf32> to vector<56x32xf32>
    %37 = arith.addf %34, %36 : vector<56x32xf32>
    %cst_40 = arith.constant 0.000000e+00 : f32
    %38 = vector.broadcast %cst_40 : f32 to vector<56x32xf32>
    %39 = arith.maximumf %37, %38 : vector<56x32xf32>
    %40 = arith.truncf %39 : vector<56x32xf32> to vector<56x32xbf16>
    %c0_41 = arith.constant 0 : index
    %c0_42 = arith.constant 0 : index
    %41 = vector.load %arg7[%c0_41, %c0_42] : memref<72x32xbf16, #tpu.memory_space<vmem>>, vector<56x32xbf16>
    tpu.vector_store %arg7[%c0_41, %c0_42], %40 {strides = array<i32>} : memref<72x32xbf16, #tpu.memory_space<vmem>>, vector<56x32xbf16>,
    %c0_43 = arith.constant 0 : index
    %c0_44 = arith.constant 0 : index
    %42 = vector.load %arg7[%c0_43, %c0_44] : memref<72x32xbf16, #tpu.memory_space<vmem>>, vector<56x32xbf16>
    %c0_45 = arith.constant 0 : index
    %c0_46 = arith.constant 0 : index
    %43 = vector.load %arg8[%c0_45, %c0_46] : memref<56x288xbf16, #tpu.memory_space<vmem>>, vector<56x32xbf16>
    tpu.vector_store %arg8[%c0_45, %c0_46], %42 {strides = array<i32>} : memref<56x288xbf16, #tpu.memory_space<vmem>>, vector<56x32xbf16>,
    %c1_47 = arith.constant 1 : index
    %c0_48 = arith.constant 0 : index
    %44 = vector.load %arg7[%c1_47, %c0_48] : memref<72x32xbf16, #tpu.memory_space<vmem>>, vector<56x32xbf16>
    %c0_49 = arith.constant 0 : index
    %c32_50 = arith.constant 32 : index
    %45 = vector.load %arg8[%c0_49, %c32_50] : memref<56x288xbf16, #tpu.memory_space<vmem>>, vector<56x32xbf16>
    tpu.vector_store %arg8[%c0_49, %c32_50], %44 {strides = array<i32>} : memref<56x288xbf16, #tpu.memory_space<vmem>>, vector<56x32xbf16>,
    %c2_51 = arith.constant 2 : index
    %c0_52 = arith.constant 0 : index
    %46 = vector.load %arg7[%c2_51, %c0_52] : memref<72x32xbf16, #tpu.memory_space<vmem>>, vector<56x32xbf16>
    %c0_53 = arith.constant 0 : index
    %c64_54 = arith.constant 64 : index
    %47 = vector.load %arg8[%c0_53, %c64_54] : memref<56x288xbf16, #tpu.memory_space<vmem>>, vector<56x32xbf16>
    tpu.vector_store %arg8[%c0_53, %c64_54], %46 {strides = array<i32>} : memref<56x288xbf16, #tpu.memory_space<vmem>>, vector<56x32xbf16>,
    %c7_55 = arith.constant 7 : index
    %c0_56 = arith.constant 0 : index
    %48 = vector.load %arg7[%c7_55, %c0_56] : memref<72x32xbf16, #tpu.memory_space<vmem>>, vector<56x32xbf16>
    %c0_57 = arith.constant 0 : index
    %c96_58 = arith.constant 96 : index
    %49 = vector.load %arg8[%c0_57, %c96_58] : memref<56x288xbf16, #tpu.memory_space<vmem>>, vector<56x32xbf16>
    tpu.vector_store %arg8[%c0_57, %c96_58], %48 {strides = array<i32>} : memref<56x288xbf16, #tpu.memory_space<vmem>>, vector<56x32xbf16>,
    %c8_59 = arith.constant 8 : index
    %c0_60 = arith.constant 0 : index
    %50 = vector.load %arg7[%c8_59, %c0_60] : memref<72x32xbf16, #tpu.memory_space<vmem>>, vector<56x32xbf16>
    %c0_61 = arith.constant 0 : index
    %c128_62 = arith.constant 128 : index
    %51 = vector.load %arg8[%c0_61, %c128_62] : memref<56x288xbf16, #tpu.memory_space<vmem>>, vector<56x32xbf16>
    tpu.vector_store %arg8[%c0_61, %c128_62], %50 {strides = array<i32>} : memref<56x288xbf16, #tpu.memory_space<vmem>>, vector<56x32xbf16>,
    %c9_63 = arith.constant 9 : index
    %c0_64 = arith.constant 0 : index
    %52 = vector.load %arg7[%c9_63, %c0_64] : memref<72x32xbf16, #tpu.memory_space<vmem>>, vector<56x32xbf16>
    %c0_65 = arith.constant 0 : index
    %c160_66 = arith.constant 160 : index
    %53 = vector.load %arg8[%c0_65, %c160_66] : memref<56x288xbf16, #tpu.memory_space<vmem>>, vector<56x32xbf16>
    tpu.vector_store %arg8[%c0_65, %c160_66], %52 {strides = array<i32>} : memref<56x288xbf16, #tpu.memory_space<vmem>>, vector<56x32xbf16>,
    %c14_67 = arith.constant 14 : index
    %c0_68 = arith.constant 0 : index
    %54 = vector.load %arg7[%c14_67, %c0_68] : memref<72x32xbf16, #tpu.memory_space<vmem>>, vector<56x32xbf16>
    %c0_69 = arith.constant 0 : index
    %c192_70 = arith.constant 192 : index
    %55 = vector.load %arg8[%c0_69, %c192_70] : memref<56x288xbf16, #tpu.memory_space<vmem>>, vector<56x32xbf16>
    tpu.vector_store %arg8[%c0_69, %c192_70], %54 {strides = array<i32>} : memref<56x288xbf16, #tpu.memory_space<vmem>>, vector<56x32xbf16>,
    %c15_71 = arith.constant 15 : index
    %c0_72 = arith.constant 0 : index
    %56 = vector.load %arg7[%c15_71, %c0_72] : memref<72x32xbf16, #tpu.memory_space<vmem>>, vector<56x32xbf16>
    %c0_73 = arith.constant 0 : index
    %c224_74 = arith.constant 224 : index
    %57 = vector.load %arg8[%c0_73, %c224_74] : memref<56x288xbf16, #tpu.memory_space<vmem>>, vector<56x32xbf16>
    tpu.vector_store %arg8[%c0_73, %c224_74], %56 {strides = array<i32>} : memref<56x288xbf16, #tpu.memory_space<vmem>>, vector<56x32xbf16>,
    %c16_75 = arith.constant 16 : index
    %c0_76 = arith.constant 0 : index
    %58 = vector.load %arg7[%c16_75, %c0_76] : memref<72x32xbf16, #tpu.memory_space<vmem>>, vector<56x32xbf16>
    %c0_77 = arith.constant 0 : index
    %c256_78 = arith.constant 256 : index
    %59 = vector.load %arg8[%c0_77, %c256_78] : memref<56x288xbf16, #tpu.memory_space<vmem>>, vector<56x32xbf16>
    tpu.vector_store %arg8[%c0_77, %c256_78], %58 {strides = array<i32>} : memref<56x288xbf16, #tpu.memory_space<vmem>>, vector<56x32xbf16>,
    %c0_79 = arith.constant 0 : index
    %c0_80 = arith.constant 0 : index
    %60 = vector.load %arg8[%c0_79, %c0_80] : memref<56x288xbf16, #tpu.memory_space<vmem>>, vector<56x288xbf16>
    %c1_81 = arith.constant 1 : index
    %c0_82 = arith.constant 0 : index
    %c0_83 = arith.constant 0 : index
    %61 = vector.load %arg3[%c1_81, %c0_82, %c0_83] : memref<3x288x32xbf16, #tpu.memory_space<vmem>>, vector<1x288x32xbf16>
    %62 = vector.shape_cast %61 : vector<1x288x32xbf16> to vector<288x32xbf16>
    %cst_84 = arith.constant dense<0.000000e+00> : vector<56x32xf32>
    %63 = tpu.matmul %60, %62, %cst_84 {dimension_numbers = #tpu.dot_dimension_numbers<[1], [0], [0], [1], [0, 0, 1, 1], [], []>} : vector<56x288xbf16>, vector<288x32xbf16>, vector<56x32xf32> -> vector<56x32xf32>
    %c2_85 = arith.constant 2 : index
    %c0_86 = arith.constant 0 : index
    %64 = vector.load %arg4[%c2_85, %c0_86] : memref<4x32xf32, #tpu.memory_space<vmem>>, vector<1x32xf32>
    %65 = vector.broadcast %64 : vector<1x32xf32> to vector<56x32xf32>
    %66 = arith.addf %63, %65 : vector<56x32xf32>
    %cst_87 = arith.constant 0.000000e+00 : f32
    %67 = vector.broadcast %cst_87 : f32 to vector<56x32xf32>
    %68 = arith.maximumf %66, %67 : vector<56x32xf32>
    %69 = arith.truncf %68 : vector<56x32xf32> to vector<56x32xbf16>
    %c0_88 = arith.constant 0 : index
    %c0_89 = arith.constant 0 : index
    %70 = vector.load %arg6[%c0_88, %c0_89] : memref<72x32xbf16, #tpu.memory_space<vmem>>, vector<56x32xbf16>
    tpu.vector_store %arg6[%c0_88, %c0_89], %69 {strides = array<i32>} : memref<72x32xbf16, #tpu.memory_space<vmem>>, vector<56x32xbf16>,
    %c0_90 = arith.constant 0 : index
    %c0_91 = arith.constant 0 : index
    %71 = vector.load %arg6[%c0_90, %c0_91] : memref<72x32xbf16, #tpu.memory_space<vmem>>, vector<56x32xbf16>
    %c0_92 = arith.constant 0 : index
    %c0_93 = arith.constant 0 : index
    %72 = vector.load %arg8[%c0_92, %c0_93] : memref<56x288xbf16, #tpu.memory_space<vmem>>, vector<56x32xbf16>
    tpu.vector_store %arg8[%c0_92, %c0_93], %71 {strides = array<i32>} : memref<56x288xbf16, #tpu.memory_space<vmem>>, vector<56x32xbf16>,
    %c1_94 = arith.constant 1 : index
    %c0_95 = arith.constant 0 : index
    %73 = vector.load %arg6[%c1_94, %c0_95] : memref<72x32xbf16, #tpu.memory_space<vmem>>, vector<56x32xbf16>
    %c0_96 = arith.constant 0 : index
    %c32_97 = arith.constant 32 : index
    %74 = vector.load %arg8[%c0_96, %c32_97] : memref<56x288xbf16, #tpu.memory_space<vmem>>, vector<56x32xbf16>
    tpu.vector_store %arg8[%c0_96, %c32_97], %73 {strides = array<i32>} : memref<56x288xbf16, #tpu.memory_space<vmem>>, vector<56x32xbf16>,
    %c2_98 = arith.constant 2 : index
    %c0_99 = arith.constant 0 : index
    %75 = vector.load %arg6[%c2_98, %c0_99] : memref<72x32xbf16, #tpu.memory_space<vmem>>, vector<56x32xbf16>
    %c0_100 = arith.constant 0 : index
    %c64_101 = arith.constant 64 : index
    %76 = vector.load %arg8[%c0_100, %c64_101] : memref<56x288xbf16, #tpu.memory_space<vmem>>, vector<56x32xbf16>
    tpu.vector_store %arg8[%c0_100, %c64_101], %75 {strides = array<i32>} : memref<56x288xbf16, #tpu.memory_space<vmem>>, vector<56x32xbf16>,
    %c7_102 = arith.constant 7 : index
    %c0_103 = arith.constant 0 : index
    %77 = vector.load %arg6[%c7_102, %c0_103] : memref<72x32xbf16, #tpu.memory_space<vmem>>, vector<56x32xbf16>
    %c0_104 = arith.constant 0 : index
    %c96_105 = arith.constant 96 : index
    %78 = vector.load %arg8[%c0_104, %c96_105] : memref<56x288xbf16, #tpu.memory_space<vmem>>, vector<56x32xbf16>
    tpu.vector_store %arg8[%c0_104, %c96_105], %77 {strides = array<i32>} : memref<56x288xbf16, #tpu.memory_space<vmem>>, vector<56x32xbf16>,
    %c8_106 = arith.constant 8 : index
    %c0_107 = arith.constant 0 : index
    %79 = vector.load %arg6[%c8_106, %c0_107] : memref<72x32xbf16, #tpu.memory_space<vmem>>, vector<56x32xbf16>
    %c0_108 = arith.constant 0 : index
    %c128_109 = arith.constant 128 : index
    %80 = vector.load %arg8[%c0_108, %c128_109] : memref<56x288xbf16, #tpu.memory_space<vmem>>, vector<56x32xbf16>
    tpu.vector_store %arg8[%c0_108, %c128_109], %79 {strides = array<i32>} : memref<56x288xbf16, #tpu.memory_space<vmem>>, vector<56x32xbf16>,
    %c9_110 = arith.constant 9 : index
    %c0_111 = arith.constant 0 : index
    %81 = vector.load %arg6[%c9_110, %c0_111] : memref<72x32xbf16, #tpu.memory_space<vmem>>, vector<56x32xbf16>
    %c0_112 = arith.constant 0 : index
    %c160_113 = arith.constant 160 : index
    %82 = vector.load %arg8[%c0_112, %c160_113] : memref<56x288xbf16, #tpu.memory_space<vmem>>, vector<56x32xbf16>
    tpu.vector_store %arg8[%c0_112, %c160_113], %81 {strides = array<i32>} : memref<56x288xbf16, #tpu.memory_space<vmem>>, vector<56x32xbf16>,
    %c14_114 = arith.constant 14 : index
    %c0_115 = arith.constant 0 : index
    %83 = vector.load %arg6[%c14_114, %c0_115] : memref<72x32xbf16, #tpu.memory_space<vmem>>, vector<56x32xbf16>
    %c0_116 = arith.constant 0 : index
    %c192_117 = arith.constant 192 : index
    %84 = vector.load %arg8[%c0_116, %c192_117] : memref<56x288xbf16, #tpu.memory_space<vmem>>, vector<56x32xbf16>
    tpu.vector_store %arg8[%c0_116, %c192_117], %83 {strides = array<i32>} : memref<56x288xbf16, #tpu.memory_space<vmem>>, vector<56x32xbf16>,
    %c15_118 = arith.constant 15 : index
    %c0_119 = arith.constant 0 : index
    %85 = vector.load %arg6[%c15_118, %c0_119] : memref<72x32xbf16, #tpu.memory_space<vmem>>, vector<56x32xbf16>
    %c0_120 = arith.constant 0 : index
    %c224_121 = arith.constant 224 : index
    %86 = vector.load %arg8[%c0_120, %c224_121] : memref<56x288xbf16, #tpu.memory_space<vmem>>, vector<56x32xbf16>
    tpu.vector_store %arg8[%c0_120, %c224_121], %85 {strides = array<i32>} : memref<56x288xbf16, #tpu.memory_space<vmem>>, vector<56x32xbf16>,
    %c16_122 = arith.constant 16 : index
    %c0_123 = arith.constant 0 : index
    %87 = vector.load %arg6[%c16_122, %c0_123] : memref<72x32xbf16, #tpu.memory_space<vmem>>, vector<56x32xbf16>
    %c0_124 = arith.constant 0 : index
    %c256_125 = arith.constant 256 : index
    %88 = vector.load %arg8[%c0_124, %c256_125] : memref<56x288xbf16, #tpu.memory_space<vmem>>, vector<56x32xbf16>
    tpu.vector_store %arg8[%c0_124, %c256_125], %87 {strides = array<i32>} : memref<56x288xbf16, #tpu.memory_space<vmem>>, vector<56x32xbf16>,
    %c0_126 = arith.constant 0 : index
    %c0_127 = arith.constant 0 : index
    %89 = vector.load %arg8[%c0_126, %c0_127] : memref<56x288xbf16, #tpu.memory_space<vmem>>, vector<56x288xbf16>
    %c2_128 = arith.constant 2 : index
    %c0_129 = arith.constant 0 : index
    %c0_130 = arith.constant 0 : index
    %90 = vector.load %arg3[%c2_128, %c0_129, %c0_130] : memref<3x288x32xbf16, #tpu.memory_space<vmem>>, vector<1x288x32xbf16>
    %91 = vector.shape_cast %90 : vector<1x288x32xbf16> to vector<288x32xbf16>
    %cst_131 = arith.constant dense<0.000000e+00> : vector<56x32xf32>
    %92 = tpu.matmul %89, %91, %cst_131 {dimension_numbers = #tpu.dot_dimension_numbers<[1], [0], [0], [1], [0, 0, 1, 1], [], []>} : vector<56x288xbf16>, vector<288x32xbf16>, vector<56x32xf32> -> vector<56x32xf32>
    %c3 = arith.constant 3 : index
    %c0_132 = arith.constant 0 : index
    %93 = vector.load %arg4[%c3, %c0_132] : memref<4x32xf32, #tpu.memory_space<vmem>>, vector<1x32xf32>
    %94 = vector.broadcast %93 : vector<1x32xf32> to vector<56x32xf32>
    %95 = arith.addf %92, %94 : vector<56x32xf32>
    %cst_133 = arith.constant 0.000000e+00 : f32
    %96 = vector.broadcast %cst_133 : f32 to vector<56x32xf32>
    %97 = arith.maximumf %95, %96 : vector<56x32xf32>
    %c0_134 = arith.constant 0 : index
    %c0_135 = arith.constant 0 : index
    %98 = vector.load %arg5[%c0_134, %c0_135] : memref<56x32xf32, #tpu.memory_space<vmem>>, vector<56x32xf32>
    tpu.vector_store %arg5[%c0_134, %c0_135], %97 {strides = array<i32>} : memref<56x32xf32, #tpu.memory_space<vmem>>, vector<56x32xf32>,
    return
  }
  func.func @transform_0(%arg0: i32) -> (i32, i32) {
    %c0_i32 = arith.constant 0 : i32
    %c0_i32_0 = arith.constant 0 : i32
    return %arg0, %c0_i32 : i32, i32
  }
  func.func @transform_1(%arg0: i32) -> (i32, i32) {
    %c0_i32 = arith.constant 0 : i32
    %c0_i32_0 = arith.constant 0 : i32
    %c0_i32_1 = arith.constant 0 : i32
    return %c0_i32, %c0_i32_0 : i32, i32
  }
  func.func @transform_2(%arg0: i32) -> (i32, i32, i32) {
    %c0_i32 = arith.constant 0 : i32
    %c0_i32_0 = arith.constant 0 : i32
    %c0_i32_1 = arith.constant 0 : i32
    %c0_i32_2 = arith.constant 0 : i32
    return %c0_i32, %c0_i32_0, %c0_i32_1 : i32, i32, i32
  }
  func.func @transform_3(%arg0: i32) -> (i32, i32) {
    %c0_i32 = arith.constant 0 : i32
    %c0_i32_0 = arith.constant 0 : i32
    %c0_i32_1 = arith.constant 0 : i32
    return %c0_i32, %c0_i32_0 : i32, i32
  }
  func.func @transform_4(%arg0: i32) -> (i32, i32) {
    %c0_i32 = arith.constant 0 : i32
    %c0_i32_0 = arith.constant 0 : i32
    return %arg0, %c0_i32 : i32, i32
  }
}

</mosaic_0001>

<llo_original>
// kernel: encoder_forward.1
$region0: #{encoder_forward.1}
  #allocation0 [shape = 'u32[]', space=smem, size = 0x4, offset = 0x4, fixed_abs, tag = 'smem constant byte address 0x4 - core index']
  #allocation1 [shape = 'u32[144,128]{1,0:T(1,128)}', space=vmem, size = 0x12000, scoped, tag = 'internal scratch']
  #allocation2 [shape = 'bf16[72,32]{1,0:T(8,128)(2,1)}', space=vmem, size = 0x4800, scoped, tag = 'scratch operand']
  #allocation3 [shape = 'bf16[72,32]{1,0:T(8,128)(2,1)}', space=vmem, size = 0x4800, scoped, tag = 'scratch operand']
  #allocation4 [shape = 'bf16[56,288]{1,0:T(8,128)(2,1)}', space=vmem, size = 0xa800, scoped, tag = 'scratch operand']
  %s0 = inlined_call_operand.vmem [shape: bf16[112,128], index: 0, kind: input, shape index: {}]
  %s1 = inlined_call_operand.vmem [shape: bf16[128,32], index: 1, kind: input, shape index: {}]
  %s2 = inlined_call_operand.vmem [shape: bf16[3,288,32], index: 2, kind: input, shape index: {}]
  %s3 = inlined_call_operand.vmem [shape: f32[4,32], index: 3, kind: input, shape index: {}]
  %s4 = inlined_call_operand.vmem [shape: f32[112,32], index: 4, kind: output, shape index: {}]
  %s5 = sld [smem:[#allocation0]]
  $region49: #{encoder_forward.1} parent=0
    _
  %s7 = ssub.s32 1, %s5
  %s8 = scalar_select 0, %s7, %s5
  loop: start=0, step=1, limit=4
  $region2: #{encoder_forward.1} parent=0 // loop_pre_header
    _
  $region3: #{encoder_forward.1} parent=0 // loop_header
    %s10 = sphi 0, %s14
    %p11 = scmp.ge.s32.totalorder %s10, 4
    %s20 = sphi 0, %s22
    %s23 = sphi 0, %s20
    %s24 = sphi 0, %s23
    %s40 = sphi 0, %s24
    %s44 = sphi 0, %s44
    %s46 = sphi 0, %s44
    %s47 = sphi 0, %s46
    %s61 = sphi 0, %s47
    %s65 = sphi 0, %s65
    %s67 = sphi 0, %s65
    %s68 = sphi 0, %s67
    %s82 = sphi 0, %s68
    %s86 = sphi 0, %s86
    %s88 = sphi 0, %s86
    %s89 = sphi 0, %s88
    %s103 = sphi 0, %s89
    %s109 = sphi 0, %s111
    %s112 = sphi 0, %s109
    %s113 = sphi 0, %s112
    %s129 = sphi 0, %s113
  $region4: #{encoder_forward.1} parent=0 // loop_header_branch
    %13 = sbr.rel (%p11) target = $region8
  $region5: #{encoder_forward.1} parent=0 // loop_body
    %s15 = ssub.s32 %s10, 1
    %s16 = ssub.s32 %s10, 2
    %s17 = sadd.s32 %s10, 1
    %s18 = ssub.s32 %s10, %s17
    %p19 = scmp.eq.s32.totalorder %s18, 0
    %s21 = sadd.s32 %s20, 1
    %s22 = scalar_select %p19, %s20, %s21
    %p25 = pneg %p19
    %p26 = scmp.eq.s32.totalorder %s10, 1
    %p27 = por %p25, %p26
    %p28 = scmp.ne.s32.totalorder %s20, %s23
    %p29 = scmp.eq.s32.totalorder %s10, 0
    %p30 = por %p28, %p29
    %p31 = scmp.ne.s32.totalorder %s20, %s23
    %p32 = scmp.eq.s32.totalorder %s15, 1
    %p33 = por %p31, %p32
    %p34 = scmp.ne.s32.totalorder %s23, %s24
    %p35 = scmp.eq.s32.totalorder %s15, 0
    %p36 = por %p34, %p35
    %p37 = scmp.ne.s32.totalorder %s23, %s24
    %p38 = scmp.eq.s32.totalorder %s16, 1
    %p39 = por %p37, %p38
    %p41 = scmp.ne.s32.totalorder %s24, %s40
    %p42 = scmp.eq.s32.totalorder %s16, 0
    %p43 = por %p41, %p42
    %s45 = sadd.s32 %s44, 1
    %p48 = scmp.eq.s32.totalorder %s10, 1
    %p49 = scmp.ne.s32.totalorder %s44, %s46
    %p50 = scmp.eq.s32.totalorder %s10, 0
    %p51 = por %p49, %p50
    %p52 = scmp.ne.s32.totalorder %s44, %s46
    %p53 = scmp.eq.s32.totalorder %s15, 1
    %p54 = por %p52, %p53
    %p55 = scmp.ne.s32.totalorder %s46, %s47
    %p56 = scmp.eq.s32.totalorder %s15, 0
    %p57 = por %p55, %p56
    %p58 = scmp.ne.s32.totalorder %s46, %s47
    %p59 = scmp.eq.s32.totalorder %s16, 1
    %p60 = por %p58, %p59
    %p62 = scmp.ne.s32.totalorder %s47, %s61
    %p63 = scmp.eq.s32.totalorder %s16, 0
    %p64 = por %p62, %p63
    %s66 = sadd.s32 %s65, 1
    %p69 = scmp.eq.s32.totalorder %s10, 1
    %p70 = scmp.ne.s32.totalorder %s65, %s67
    %p71 = scmp.eq.s32.totalorder %s10, 0
    %p72 = por %p70, %p71
    %p73 = scmp.ne.s32.totalorder %s65, %s67
    %p74 = scmp.eq.s32.totalorder %s15, 1
    %p75 = por %p73, %p74
    %p76 = scmp.ne.s32.totalorder %s67, %s68
    %p77 = scmp.eq.s32.totalorder %s15, 0
    %p78 = por %p76, %p77
    %p79 = scmp.ne.s32.totalorder %s67, %s68
    %p80 = scmp.eq.s32.totalorder %s16, 1
    %p81 = por %p79, %p80
    %p83 = scmp.ne.s32.totalorder %s68, %s82
    %p84 = scmp.eq.s32.totalorder %s16, 0
    %p85 = por %p83, %p84
    %s87 = sadd.s32 %s86, 1
    %p90 = scmp.eq.s32.totalorder %s10, 1
    %p91 = scmp.ne.s32.totalorder %s86, %s88
    %p92 = scmp.eq.s32.totalorder %s10, 0
    %p93 = por %p91, %p92
    %p94 = scmp.ne.s32.totalorder %s86, %s88
    %p95 = scmp.eq.s32.totalorder %s15, 1
    %p96 = por %p94, %p95
    %p97 = scmp.ne.s32.totalorder %s88, %s89
    %p98 = scmp.eq.s32.totalorder %s15, 0
    %p99 = por %p97, %p98
    %p100 = scmp.ne.s32.totalorder %s88, %s89
    %p101 = scmp.eq.s32.totalorder %s16, 1
    %p102 = por %p100, %p101
    %p104 = scmp.ne.s32.totalorder %s89, %s103
    %p105 = scmp.eq.s32.totalorder %s16, 0
    %p106 = por %p104, %p105
    %s107 = ssub.s32 %s10, %s17
    %p108 = scmp.eq.s32.totalorder %s107, 0
    %s110 = sadd.s32 %s109, 1
    %s111 = scalar_select %p108, %s109, %s110
    %p114 = pneg %p108
    %p115 = scmp.eq.s32.totalorder %s10, 1
    %p116 = por %p114, %p115
    %p117 = scmp.ne.s32.totalorder %s109, %s112
    %p118 = scmp.eq.s32.totalorder %s10, 0
    %p119 = por %p117, %p118
    %p120 = scmp.ne.s32.totalorder %s109, %s112
    %p121 = scmp.eq.s32.totalorder %s15, 1
    %p122 = por %p120, %p121
    %p123 = scmp.ne.s32.totalorder %s112, %s113
    %p124 = scmp.eq.s32.totalorder %s15, 0
    %p125 = por %p123, %p124
    %p126 = scmp.ne.s32.totalorder %s112, %s113
    %p127 = scmp.eq.s32.totalorder %s16, 1
    %p128 = por %p126, %p127
    %p130 = scmp.ne.s32.totalorder %s113, %s129
    %p131 = scmp.eq.s32.totalorder %s16, 0
    %p132 = por %p130, %p131
    %p133 = scmp.le.s32.totalorder 1, %s10
    %p134 = scmp.lt.s32.totalorder %s10, 3
    %p135 = pnand %p133, %p134
    %p136 = pneg %p135
    // Predicated region
    $region9: #{encoder_forward.1} parent=5 // pred_check
      _
    $region10: #{encoder_forward.1} parent=5 // pred_check_branch
      %138 = sbr.rel (%p135) target = $region12
    $region11: #{encoder_forward.1} parent=5 // pred_region
      %s139 = ssub.s32 %s10, 1
      // Predicated region
      $region13: #{encoder_forward.1} parent=11 // pred_check
        %p140 = pneg %p57
      $region14: #{encoder_forward.1} parent=11 // pred_check_branch
        %142 = sbr.rel (%p140) target = $region16
      $region15: #{encoder_forward.1} parent=11 // pred_region
        _
      $region16: #{encoder_forward.1} parent=11 // pred_fallthru
        _
      // Predicated region
      $region17: #{encoder_forward.1} parent=11 // pred_check
        %p143 = pneg %p78
      $region18: #{encoder_forward.1} parent=11 // pred_check_branch
        %145 = sbr.rel (%p143) target = $region20
      $region19: #{encoder_forward.1} parent=11 // pred_region
        _
      $region20: #{encoder_forward.1} parent=11 // pred_fallthru
        _
      // Predicated region
      $region21: #{encoder_forward.1} parent=11 // pred_check
        %p146 = pneg %p99
      $region22: #{encoder_forward.1} parent=11 // pred_check_branch
        %148 = sbr.rel (%p146) target = $region24
      $region23: #{encoder_forward.1} parent=11 // pred_region
        _
      $region24: #{encoder_forward.1} parent=11 // pred_fallthru
        _
    $region12: #{encoder_forward.1} parent=5 // pred_fallthru
      _
    %p149 = scmp.lt.s32.totalorder %s10, 2
    // Predicated region
    $region25: #{encoder_forward.1} parent=5 // pred_check
      %p150 = pneg %p149
    $region26: #{encoder_forward.1} parent=5 // pred_check_branch
      %152 = sbr.rel (%p150) target = $region28
    $region27: #{encoder_forward.1} parent=5 // pred_region
      // Predicated region
      $region29: #{encoder_forward.1} parent=27 // pred_check
        %p153 = pneg %p30
      $region30: #{encoder_forward.1} parent=27 // pred_check_branch
        %155 = sbr.rel (%p153) target = $region32
      $region31: #{encoder_forward.1} parent=27 // pred_region
        %s156 = smul.u32 7, %s10
        %p157 = scmp.lt.s32.totalorder %s156, 13
        %s158 = scalar_select %p157, %s156, 13
        %s159 = smul.addr %s158, 4
        %s160 = scalar_lea.vmem %s0, %s159
        %s161 = smul.u32 7, %s10
      $region32: #{encoder_forward.1} parent=27 // pred_fallthru
        _
    $region28: #{encoder_forward.1} parent=5 // pred_fallthru
      _
    %p162 = scmp.le.s32.totalorder 1, %s10
    %p163 = scmp.lt.s32.totalorder %s10, 3
    %p164 = pnand %p162, %p163
    %p165 = pneg %p164
    // Predicated region
    $region33: #{encoder_forward.1} parent=5 // pred_check
      _
    $region34: #{encoder_forward.1} parent=5 // pred_check_branch
      %167 = sbr.rel (%p164) target = $region36
    $region35: #{encoder_forward.1} parent=5 // pred_region
      %s168 = ssub.s32 %s10, 1
      %s169 = smul.u32 7, %s15
      %p170 = scmp.lt.s32.totalorder %s169, 13
      %s171 = scalar_select %p170, %s169, 13
      %s172 = smul.addr %s171, 4
      %s173 = scalar_lea.vmem %s0, %s172
      %p174 = pneg %p36
      %p175 = pneg %p33
      %p176 = pneg %p57
      %p177 = pneg %p54
      %p178 = pneg %p78
      %p179 = pneg %p75
      %p180 = pneg %p99
      %p181 = pneg %p96
      %p182 = pneg %p125
      %p183 = pneg %p122
      %s184 = smul.u32 7, %s15
      %p185 = scmp.lt.s32.totalorder %s184, 13
      %s186 = scalar_select %p185, %s184, 13
      %s187 = smul.addr %s186, 8
      %s188 = scalar_lea.vmem %s4, %s187
      %s189 = smul.u32 7, %s15
      %p190 = scmp.lt.s32.totalorder %s189, 13
      %s191 = scalar_select %p190, %s189, 13
      %s192 = smul.addr %s191, 4
      %s193 = scalar_lea.vmem %s0, %s192
      %s194 = smul.u32 7, %s15
      %s195 = smul.u32 7, %s15
      %p196 = scmp.lt.s32.totalorder %s195, 13
      %s197 = scalar_select %p196, %s195, 13
      %s198 = smul.addr %s197, 8
      %s199 = scalar_lea.vmem %s4, %s198
      %s200 = smul.u32 7, %s15
      %vm202 = vcmask 257024
      %203 = vst.msk [vmem:[#allocation2 + $0x1c] sm:$0xf] %vm202, 0
      %204 = vst.msk [vmem:[#allocation2 + $0x20] sm:$0xf] %vm202, 0
      %205 = vst.msk [vmem:[#allocation3 + $0x1c] sm:$0xf] %vm202, 0
      %206 = vst.msk [vmem:[#allocation3 + $0x20] sm:$0xf] %vm202, 0
      %v207 = vld [vmem:[%s193] sm:$0xf]
      %v208 = vld [vmem:[%s193 + $0x4] sm:$0xf]
      %v209 = vld [vmem:[%s193 + $0x8] sm:$0xf]
      %v210 = vld [vmem:[%s193 + $0xc] sm:$0xf]
      %v211 = vld [vmem:[%s193 + $0x10] sm:$0xf]
      %v212 = vld [vmem:[%s193 + $0x14] sm:$0xf]
      %v213 = vld [vmem:[%s193 + $0x18] sm:$0xf]
      %v214 = vld [vmem:[%s1] sm:$0xf]
      %v215 = vld [vmem:[%s1 + $0x4] sm:$0xf]
      %v216 = vld [vmem:[%s1 + $0x8] sm:$0xf]
      %v217 = vld [vmem:[%s1 + $0xc] sm:$0xf]
      %v218 = vld [vmem:[%s1 + $0x10] sm:$0xf]
      %v219 = vld [vmem:[%s1 + $0x14] sm:$0xf]
      %v220 = vld [vmem:[%s1 + $0x18] sm:$0xf]
      %v221 = vld [vmem:[%s1 + $0x1c] sm:$0xf]
      %v222 = vld [vmem:[%s1 + $0x20] sm:$0xf]
      %v223 = vld [vmem:[%s1 + $0x24] sm:$0xf]
      %v224 = vld [vmem:[%s1 + $0x28] sm:$0xf]
      %v225 = vld [vmem:[%s1 + $0x2c] sm:$0xf]
      %v226 = vld [vmem:[%s1 + $0x30] sm:$0xf]
      %v227 = vld [vmem:[%s1 + $0x34] sm:$0xf]
      %v228 = vld [vmem:[%s1 + $0x38] sm:$0xf]
      %v229 = vld [vmem:[%s1 + $0x3c] sm:$0xf]
      %v230 = vld [vmem:[%s3] sm:$0x1]
      %v231 = vlaneseq
      %v232 = vshrl.u32 %v231, 7
      %v233 = vsub.s32 0, %v232
      %v234 = vrot.slane %v230, %v233
      %v242 = vunpack.c.l.b16 %v207
      %v243 = vunpack.c.l.b16 %v208
      %v244 = vunpack.c.l.b16 %v209
      %v245 = vunpack.c.l.b16 %v210
      %v246 = vunpack.c.l.b16 %v211
      %v247 = vunpack.c.l.b16 %v212
      %v248 = vunpack.c.l.b16 %v213
      %v249 = vpack.c.b16 %v243, %v242
      %v250 = vpack.c.b16 %v245, %v244
      %v251 = vpack.c.b16 %v247, %v246
      %v252 = vpack.c.b16 %v248, %v248
      %v273 = vunpack.c.l.b16 %v214
      %v274 = vunpack.c.l.b16 %v215
      %v275 = vunpack.c.l.b16 %v216
      %v276 = vunpack.c.l.b16 %v217
      %v277 = vunpack.c.l.b16 %v218
      %v278 = vunpack.c.l.b16 %v219
      %v279 = vunpack.c.l.b16 %v220
      %v280 = vunpack.c.l.b16 %v221
      %v281 = vunpack.c.l.b16 %v222
      %v282 = vunpack.c.l.b16 %v223
      %v283 = vunpack.c.l.b16 %v224
      %v284 = vunpack.c.l.b16 %v225
      %v285 = vunpack.c.l.b16 %v226
      %v286 = vunpack.c.l.b16 %v227
      %v287 = vunpack.c.l.b16 %v228
      %v288 = vunpack.c.l.b16 %v229
      %v289 = vpack.c.b16 %v274, %v273
      %v290 = vpack.c.b16 %v276, %v275
      %v291 = vpack.c.b16 %v278, %v277
      %v292 = vpack.c.b16 %v280, %v279
      %v293 = vpack.c.b16 %v282, %v281
      %v294 = vpack.c.b16 %v284, %v283
      %v295 = vpack.c.b16 %v286, %v285
      %v296 = vpack.c.b16 %v288, %v287
      %305 = vmatprep.subr.bf16.mxu0 0
      %306 = vmatpush1.bf16.msra.mxu0 %v289
      %307 = vmatprep.subr.bf16.mxu0 0
      %308 = vmatpush1.bf16.msra.mxu0 %v290
      %309 = vmatprep.subr.bf16.mxu0 0
      %310 = vmatpush1.bf16.msra.mxu0 %v291
      %311 = vmatprep.subr.bf16.mxu0 0
      %312 = vmatpush1.bf16.msra.mxu0 %v292
      %313 = vmatprep.subr.bf16.mxu0 0
      %314 = vmatpush1.bf16.msra.mxu0 %v293
      %315 = vmatprep.subr.bf16.mxu0 0
      %316 = vmatpush1.bf16.msra.mxu0 %v294
      %317 = vmatprep.subr.bf16.mxu0 0
      %318 = vmatpush1.bf16.msra.mxu0 %v295
      %319 = vmatprep.subr.bf16.mxu0 0
      %320 = vmatpush1.bf16.msra.mxu0 %v296
      %321 = vmatprep.subr.bf16.mxu0 0
      %322 = vmatpush1.bf16.msra.mxu0 0
      %323 = vmatprep.subr.bf16.mxu0 0
      %324 = vmatpush1.bf16.msra.mxu0 0
      %325 = vmatprep.subr.bf16.mxu0 0
      %326 = vmatpush1.bf16.msra.mxu0 0
      %327 = vmatprep.subr.bf16.mxu0 0
      %328 = vmatpush1.bf16.msra.mxu0 0
      %329 = vmatprep.subr.bf16.mxu0 0
      %330 = vmatpush1.bf16.msra.mxu0 0
      %331 = vmatprep.subr.bf16.mxu0 0
      %332 = vmatpush1.bf16.msra.mxu0 0
      %333 = vmatprep.subr.bf16.mxu0 0
      %334 = vmatpush1.bf16.msra.mxu0 0
      %335 = vmatprep.subr.bf16.mxu0 0
      %336 = vmatpush1.bf16.msra.mxu0 0
      %337 = vmatprep.mubr.bf16.mxu0 0
      %338 = vmatmul.mubr.bf16.gmra.mrb[0].mxu0 %v249
      %v339 = vpop.f32.mrb[0].mxu0
      %v340 = vadd.f32 %v234, %v339
      %v341 = vpop.f32.mrb[0].mxu0
      %v342 = vpop.f32.mrb[0].mxu0
      %v343 = vadd.f32 %v234, %v342
      %v344 = vpop.f32.mrb[0].mxu0
      %345 = vmatprep.mubr.bf16.mxu0 0
      %346 = vmatmul.mubr.bf16.gmra.mrb[0].mxu0 %v250
      %v347 = vpop.f32.mrb[0].mxu0
      %v348 = vadd.f32 %v234, %v347
      %v349 = vpop.f32.mrb[0].mxu0
      %v350 = vpop.f32.mrb[0].mxu0
      %v351 = vadd.f32 %v234, %v350
      %v352 = vpop.f32.mrb[0].mxu0
      %353 = vmatprep.mubr.bf16.mxu0 0
      %354 = vmatmul.mubr.bf16.gmra.mrb[0].mxu0 %v251
      %v355 = vpop.f32.mrb[0].mxu0
      %v356 = vadd.f32 %v234, %v355
      %v357 = vpop.f32.mrb[0].mxu0
      %v358 = vpop.f32.mrb[0].mxu0
      %v359 = vadd.f32 %v234, %v358
      %v360 = vpop.f32.mrb[0].mxu0
      %361 = vmatprep.mubr.bf16.mxu0 0
      %362 = vmatmul.mubr.bf16.gmra.mrb[0].mxu0 %v252
      %v363 = vpop.f32.mrb[0].mxu0
      %v364 = vadd.f32 %v234, %v363
      %v365 = vpop.f32.mrb[0].mxu0
      %v366 = vpop.f32.mrb[0].mxu0
      %v367 = vpop.f32.mrb[0].mxu0
      %368 = vdwg.mxu0
      %v369 = vmax.f32 %v340, 0.0
      %v370 = vmax.f32 %v343, 0.0
      %v371 = vmax.f32 %v348, 0.0
      %v372 = vmax.f32 %v351, 0.0
      %v373 = vmax.f32 %v356, 0.0
      %v374 = vmax.f32 %v359, 0.0
      %v375 = vmax.f32 %v364, 0.0
      %v376 = vpack.c.bf16 %v370, %v369
      %v377 = vpack.c.bf16 %v372, %v371
      %v378 = vpack.c.bf16 %v374, %v373
      %v379 = vpack.c.bf16 %v375, %v375
      %v384 = vunpack.c.l.b16 %v376
      %v385 = vunpack.c.h.b16 %v376
      %v386 = vunpack.c.l.b16 %v377
      %v387 = vunpack.c.h.b16 %v377
      %v388 = vunpack.c.l.b16 %v378
      %v389 = vunpack.c.h.b16 %v378
      %v390 = vunpack.c.l.b16 %v379
      %v391 = vpack.c.b16 %v384, %v384
      %v392 = vpack.c.b16 %v385, %v385
      %v393 = vpack.c.b16 %v386, %v386
      %v394 = vpack.c.b16 %v387, %v387
      %v395 = vpack.c.b16 %v388, %v388
      %v396 = vpack.c.b16 %v389, %v389
      %v397 = vpack.c.b16 %v390, %v390
      %405 = vst.msk [vmem:[#allocation2] sm:$0xf] %vm202, %v391
      %406 = vst.msk [vmem:[#allocation2 + $0x4] sm:$0xf] %vm202, %v392
      %407 = vst.msk [vmem:[#allocation2 + $0x8] sm:$0xf] %vm202, %v393
      %408 = vst.msk [vmem:[#allocation2 + $0xc] sm:$0xf] %vm202, %v394
      %409 = vst.msk [vmem:[#allocation2 + $0x10] sm:$0xf] %vm202, %v395
      %410 = vst.msk [vmem:[#allocation2 + $0x14] sm:$0xf] %vm202, %v396
      %411 = vst.msk [vmem:[#allocation2 + $0x18] sm:$0xf] %vm202, %v397
      %v412 = vld [vmem:[#allocation2] sm:$0xf]
      %v413 = vld [vmem:[#allocation2 + $0x4] sm:$0xf]
      %v414 = vld [vmem:[#allocation2 + $0x8] sm:$0xf]
      %v415 = vld [vmem:[#allocation2 + $0xc] sm:$0xf]
      %v416 = vld [vmem:[#allocation2 + $0x10] sm:$0xf]
      %v417 = vld [vmem:[#allocation2 + $0x14] sm:$0xf]
      %v418 = vld [vmem:[#allocation2 + $0x18] sm:$0xf]
      %419 = vst.msk [vmem:[#allocation4] sm:$0xf] %vm202, %v412
      %420 = vst.msk [vmem:[#allocation4 + $0xc] sm:$0xf] %vm202, %v413
      %421 = vst.msk [vmem:[#allocation4 + $0x18] sm:$0xf] %vm202, %v414
      %422 = vst.msk [vmem:[#allocation4 + $0x24] sm:$0xf] %vm202, %v415
      %423 = vst.msk [vmem:[#allocation4 + $0x30] sm:$0xf] %vm202, %v416
      %424 = vst.msk [vmem:[#allocation4 + $0x3c] sm:$0xf] %vm202, %v417
      %425 = vst.msk [vmem:[#allocation4 + $0x48] sm:$0xf] %vm202, %v418
      %v426 = vld [vmem:[#allocation2] sm:$0xf]
      %v427 = vld [vmem:[#allocation2 + $0x4] sm:$0xf]
      %v428 = vld [vmem:[#allocation2 + $0x8] sm:$0xf]
      %v429 = vld [vmem:[#allocation2 + $0xc] sm:$0xf]
      %v430 = vld [vmem:[#allocation2 + $0x10] sm:$0xf]
      %v431 = vld [vmem:[#allocation2 + $0x14] sm:$0xf]
      %v432 = vld [vmem:[#allocation2 + $0x18] sm:$0xf]
      %v433 = vld [vmem:[#allocation2 + $0x1c] sm:$0x1]
      %vm434 = vsmask.f32 3328
      %vm435 = vsmask.f32 7440
      %vm436 = vmor %vm434, %vm435
      %v438 = vshrl.u32 %v426, 16
      %v440 = vrot.slane %v438, 4
      %v441 = vshll.u32 %v426, 16
      %v443 = vrot.slane %v441, 5
      %v444 = vor.u32 %v440, %v443
      %v445 = vrot.slane %v444, 4
      %v447 = vshll.u32 %v427, 16
      %v449 = vrot.slane %v447, 5
      %v450 = vsel %vm436, %v445, %v449
      %v451 = vshrl.u32 %v427, 16
      %v453 = vrot.slane %v451, 4
      %v454 = vor.u32 %v453, %v449
      %v455 = vrot.slane %v454, 4
      %v457 = vshll.u32 %v428, 16
      %v459 = vrot.slane %v457, 5
      %v460 = vsel %vm436, %v455, %v459
      %v461 = vshrl.u32 %v428, 16
      %v463 = vrot.slane %v461, 4
      %v464 = vor.u32 %v463, %v459
      %v465 = vrot.slane %v464, 4
      %v467 = vshll.u32 %v429, 16
      %v469 = vrot.slane %v467, 5
      %v470 = vsel %vm436, %v465, %v469
      %v471 = vshrl.u32 %v429, 16
      %v473 = vrot.slane %v471, 4
      %v474 = vor.u32 %v473, %v469
      %v475 = vrot.slane %v474, 4
      %v477 = vshll.u32 %v430, 16
      %v479 = vrot.slane %v477, 5
      %v480 = vsel %vm436, %v475, %v479
      %v481 = vshrl.u32 %v430, 16
      %v483 = vrot.slane %v481, 4
      %v484 = vor.u32 %v483, %v479
      %v485 = vrot.slane %v484, 4
      %v487 = vshll.u32 %v431, 16
      %v489 = vrot.slane %v487, 5
      %v490 = vsel %vm436, %v485, %v489
      %v491 = vshrl.u32 %v431, 16
      %v493 = vrot.slane %v491, 4
      %v494 = vor.u32 %v493, %v489
      %v495 = vrot.slane %v494, 4
      %v497 = vshll.u32 %v432, 16
      %v499 = vrot.slane %v497, 5
      %v500 = vsel %vm436, %v495, %v499
      %v501 = vshrl.u32 %v432, 16
      %v503 = vrot.slane %v501, 4
      %v504 = vor.u32 %v503, %v499
      %v505 = vrot.slane %v504, 4
      %v507 = vshll.u32 %v433, 16
      %v509 = vrot.slane %v507, 5
      %v510 = vsel %vm436, %v505, %v509
      %511 = vrot.lane.b32.xlu0 %v450, 32
      %v512 = vpop.permute.xlu0 %511
      %513 = vrot.lane.b32.xlu0 %v460, 32
      %v514 = vpop.permute.xlu0 %513
      %515 = vrot.lane.b32.xlu0 %v470, 32
      %v516 = vpop.permute.xlu0 %515
      %517 = vrot.lane.b32.xlu0 %v480, 32
      %v518 = vpop.permute.xlu0 %517
      %519 = vrot.lane.b32.xlu0 %v490, 32
      %v520 = vpop.permute.xlu0 %519
      %521 = vrot.lane.b32.xlu0 %v500, 32
      %v522 = vpop.permute.xlu0 %521
      %523 = vrot.lane.b32.xlu0 %v510, 32
      %v524 = vpop.permute.xlu0 %523
      %vm532 = vcmask 519424
      %533 = vst.msk [vmem:[#allocation4] sm:$0xf] %vm532, %v512
      %534 = vst.msk [vmem:[#allocation4 + $0xc] sm:$0xf] %vm532, %v514
      %535 = vst.msk [vmem:[#allocation4 + $0x18] sm:$0xf] %vm532, %v516
      %536 = vst.msk [vmem:[#allocation4 + $0x24] sm:$0xf] %vm532, %v518
      %537 = vst.msk [vmem:[#allocation4 + $0x30] sm:$0xf] %vm532, %v520
      %538 = vst.msk [vmem:[#allocation4 + $0x3c] sm:$0xf] %vm532, %v522
      %539 = vst.msk [vmem:[#allocation4 + $0x48] sm:$0xf] %vm532, %v524
      %v540 = vld [vmem:[#allocation2] sm:$0xe]
      %v541 = vld [vmem:[#allocation2 + $0x4] sm:$0xf]
      %v542 = vld [vmem:[#allocation2 + $0x8] sm:$0xf]
      %v543 = vld [vmem:[#allocation2 + $0xc] sm:$0xf]
      %v544 = vld [vmem:[#allocation2 + $0x10] sm:$0xf]
      %v545 = vld [vmem:[#allocation2 + $0x14] sm:$0xf]
      %v546 = vld [vmem:[#allocation2 + $0x18] sm:$0xf]
      %v547 = vld [vmem:[#allocation2 + $0x1c] sm:$0x1]
      %vm556 = vcmask 1042432
      %vm557 = vcmask 1046532
      %vm558 = vmor %vm556, %vm557
      %v559 = vrot.slane %v540, 5
      %v560 = vrot.slane %v559, 4
      %v561 = vrot.slane %v541, 5
      %v562 = vsel %vm558, %v560, %v561
      %v563 = vrot.slane %v561, 4
      %v564 = vrot.slane %v542, 5
      %v565 = vsel %vm558, %v563, %v564
      %v566 = vrot.slane %v564, 4
      %v567 = vrot.slane %v543, 5
      %v568 = vsel %vm558, %v566, %v567
      %v569 = vrot.slane %v567, 4
      %v570 = vrot.slane %v544, 5
      %v571 = vsel %vm558, %v569, %v570
      %v572 = vrot.slane %v570, 4
      %v573 = vrot.slane %v545, 5
      %v574 = vsel %vm558, %v572, %v573
      %v575 = vrot.slane %v573, 4
      %v576 = vrot.slane %v546, 5
      %v577 = vsel %vm558, %v575, %v576
      %v578 = vrot.slane %v576, 4
      %v579 = vrot.slane %v547, 5
      %v580 = vsel %vm558, %v578, %v579
      %581 = vrot.lane.b32.xlu0 %v562, 64
      %v582 = vpop.permute.xlu0 %581
      %583 = vrot.lane.b32.xlu0 %v565, 64
      %v584 = vpop.permute.xlu0 %583
      %585 = vrot.lane.b32.xlu0 %v568, 64
      %v586 = vpop.permute.xlu0 %585
      %587 = vrot.lane.b32.xlu0 %v571, 64
      %v588 = vpop.permute.xlu0 %587
      %589 = vrot.lane.b32.xlu0 %v574, 64
      %v590 = vpop.permute.xlu0 %589
      %591 = vrot.lane.b32.xlu0 %v577, 64
      %v592 = vpop.permute.xlu0 %591
      %593 = vrot.lane.b32.xlu0 %v580, 64
      %v594 = vpop.permute.xlu0 %593
      %vm602 = vcmask 781824
      %603 = vst.msk [vmem:[#allocation4] sm:$0xf] %vm602, %v582
      %604 = vst.msk [vmem:[#allocation4 + $0xc] sm:$0xf] %vm602, %v584
      %605 = vst.msk [vmem:[#allocation4 + $0x18] sm:$0xf] %vm602, %v586
      %606 = vst.msk [vmem:[#allocation4 + $0x24] sm:$0xf] %vm602, %v588
      %607 = vst.msk [vmem:[#allocation4 + $0x30] sm:$0xf] %vm602, %v590
      %608 = vst.msk [vmem:[#allocation4 + $0x3c] sm:$0xf] %vm602, %v592
      %609 = vst.msk [vmem:[#allocation4 + $0x48] sm:$0xf] %vm602, %v594
      %v610 = vld [vmem:[#allocation2] sm:$0x8]
      %v611 = vld [vmem:[#allocation2 + $0x4] sm:$0xf]
      %v612 = vld [vmem:[#allocation2 + $0x8] sm:$0xf]
      %v613 = vld [vmem:[#allocation2 + $0xc] sm:$0xf]
      %v614 = vld [vmem:[#allocation2 + $0x10] sm:$0xf]
      %v615 = vld [vmem:[#allocation2 + $0x14] sm:$0xf]
      %v616 = vld [vmem:[#allocation2 + $0x18] sm:$0xf]
      %v617 = vld [vmem:[#allocation2 + $0x1c] sm:$0xf]
      %vm618 = vsmask.f32 256
      %vm619 = vsmask.f32 4368
      %vm620 = vmor %vm618, %vm619
      %v622 = vshrl.u32 %v610, 16
      %v624 = vrot.slane %v622, 7
      %v625 = vrot.slane %v624, 4
      %v627 = vshrl.u32 %v611, 16
      %v629 = vrot.slane %v627, 7
      %v630 = vshll.u32 %v611, 16
      %v632 = vor.u32 %v629, %v630
      %v633 = vsel %vm620, %v625, %v632
      %v634 = vrot.slane %v629, 4
      %v636 = vshrl.u32 %v612, 16
      %v638 = vrot.slane %v636, 7
      %v639 = vshll.u32 %v612, 16
      %v641 = vor.u32 %v638, %v639
      %v642 = vsel %vm620, %v634, %v641
      %v643 = vrot.slane %v638, 4
      %v645 = vshrl.u32 %v613, 16
      %v647 = vrot.slane %v645, 7
      %v648 = vshll.u32 %v613, 16
      %v650 = vor.u32 %v647, %v648
      %v651 = vsel %vm620, %v643, %v650
      %v652 = vrot.slane %v647, 4
      %v654 = vshrl.u32 %v614, 16
      %v656 = vrot.slane %v654, 7
      %v657 = vshll.u32 %v614, 16
      %v659 = vor.u32 %v656, %v657
      %v660 = vsel %vm620, %v652, %v659
      %v661 = vrot.slane %v656, 4
      %v663 = vshrl.u32 %v615, 16
      %v665 = vrot.slane %v663, 7
      %v666 = vshll.u32 %v615, 16
      %v668 = vor.u32 %v665, %v666
      %v669 = vsel %vm620, %v661, %v668
      %v670 = vrot.slane %v665, 4
      %v672 = vshrl.u32 %v616, 16
      %v674 = vrot.slane %v672, 7
      %v675 = vshll.u32 %v616, 16
      %v677 = vor.u32 %v674, %v675
      %v678 = vsel %vm620, %v670, %v677
      %v679 = vrot.slane %v674, 4
      %v681 = vshrl.u32 %v617, 16
      %v683 = vrot.slane %v681, 7
      %v684 = vshll.u32 %v617, 16
      %v686 = vor.u32 %v683, %v684
      %v687 = vsel %vm620, %v679, %v686
      %688 = vrot.lane.b32.xlu0 %v633, 96
      %v689 = vpop.permute.xlu0 %688
      %690 = vrot.lane.b32.xlu0 %v642, 96
      %v691 = vpop.permute.xlu0 %690
      %692 = vrot.lane.b32.xlu0 %v651, 96
      %v693 = vpop.permute.xlu0 %692
      %694 = vrot.lane.b32.xlu0 %v660, 96
      %v695 = vpop.permute.xlu0 %694
      %696 = vrot.lane.b32.xlu0 %v669, 96
      %v697 = vpop.permute.xlu0 %696
      %698 = vrot.lane.b32.xlu0 %v678, 96
      %v699 = vpop.permute.xlu0 %698
      %700 = vrot.lane.b32.xlu0 %v687, 96
      %v701 = vpop.permute.xlu0 %700
      %vm709 = vcmask 1044224
      %710 = vst.msk [vmem:[#allocation4] sm:$0xf] %vm709, %v689
      %711 = vst.msk [vmem:[#allocation4 + $0xc] sm:$0xf] %vm709, %v691
      %712 = vst.msk [vmem:[#allocation4 + $0x18] sm:$0xf] %vm709, %v693
      %713 = vst.msk [vmem:[#allocation4 + $0x24] sm:$0xf] %vm709, %v695
      %714 = vst.msk [vmem:[#allocation4 + $0x30] sm:$0xf] %vm709, %v697
      %715 = vst.msk [vmem:[#allocation4 + $0x3c] sm:$0xf] %vm709, %v699
      %716 = vst.msk [vmem:[#allocation4 + $0x48] sm:$0xf] %vm709, %v701
      %v717 = vld [vmem:[#allocation2 + $0x4] sm:$0xf]
      %v718 = vld [vmem:[#allocation2 + $0x8] sm:$0xf]
      %v719 = vld [vmem:[#allocation2 + $0xc] sm:$0xf]
      %v720 = vld [vmem:[#allocation2 + $0x10] sm:$0xf]
      %v721 = vld [vmem:[#allocation2 + $0x14] sm:$0xf]
      %v722 = vld [vmem:[#allocation2 + $0x18] sm:$0xf]
      %v723 = vld [vmem:[#allocation2 + $0x1c] sm:$0xf]
      %724 = vst.msk [vmem:[#allocation4 + $0x4] sm:$0xf] %vm202, %v717
      %725 = vst.msk [vmem:[#allocation4 + $0x10] sm:$0xf] %vm202, %v718
      %726 = vst.msk [vmem:[#allocation4 + $0x1c] sm:$0xf] %vm202, %v719
      %727 = vst.msk [vmem:[#allocation4 + $0x28] sm:$0xf] %vm202, %v720
      %728 = vst.msk [vmem:[#allocation4 + $0x34] sm:$0xf] %vm202, %v721
      %729 = vst.msk [vmem:[#allocation4 + $0x40] sm:$0xf] %vm202, %v722
      %730 = vst.msk [vmem:[#allocation4 + $0x4c] sm:$0xf] %vm202, %v723
      %v731 = vld [vmem:[#allocation2 + $0x4] sm:$0xf]
      %v732 = vld [vmem:[#allocation2 + $0x8] sm:$0xf]
      %v733 = vld [vmem:[#allocation2 + $0xc] sm:$0xf]
      %v734 = vld [vmem:[#allocation2 + $0x10] sm:$0xf]
      %v735 = vld [vmem:[#allocation2 + $0x14] sm:$0xf]
      %v736 = vld [vmem:[#allocation2 + $0x18] sm:$0xf]
      %v737 = vld [vmem:[#allocation2 + $0x1c] sm:$0xf]
      %v738 = vld [vmem:[#allocation2 + $0x20] sm:$0x1]
      %v740 = vshrl.u32 %v731, 16
      %v742 = vrot.slane %v740, 4
      %v743 = vshll.u32 %v731, 16
      %v745 = vrot.slane %v743, 5
      %v746 = vor.u32 %v742, %v745
      %v747 = vrot.slane %v746, 4
      %v749 = vshll.u32 %v732, 16
      %v751 = vrot.slane %v749, 5
      %v752 = vsel %vm436, %v747, %v751
      %v753 = vshrl.u32 %v732, 16
      %v755 = vrot.slane %v753, 4
      %v756 = vor.u32 %v755, %v751
      %v757 = vrot.slane %v756, 4
      %v759 = vshll.u32 %v733, 16
      %v761 = vrot.slane %v759, 5
      %v762 = vsel %vm436, %v757, %v761
      %v763 = vshrl.u32 %v733, 16
      %v765 = vrot.slane %v763, 4
      %v766 = vor.u32 %v765, %v761
      %v767 = vrot.slane %v766, 4
      %v769 = vshll.u32 %v734, 16
      %v771 = vrot.slane %v769, 5
      %v772 = vsel %vm436, %v767, %v771
      %v773 = vshrl.u32 %v734, 16
      %v775 = vrot.slane %v773, 4
      %v776 = vor.u32 %v775, %v771
      %v777 = vrot.slane %v776, 4
      %v779 = vshll.u32 %v735, 16
      %v781 = vrot.slane %v779, 5
      %v782 = vsel %vm436, %v777, %v781
      %v783 = vshrl.u32 %v735, 16
      %v785 = vrot.slane %v783, 4
      %v786 = vor.u32 %v785, %v781
      %v787 = vrot.slane %v786, 4
      %v789 = vshll.u32 %v736, 16
      %v791 = vrot.slane %v789, 5
      %v792 = vsel %vm436, %v787, %v791
      %v793 = vshrl.u32 %v736, 16
      %v795 = vrot.slane %v793, 4
      %v796 = vor.u32 %v795, %v791
      %v797 = vrot.slane %v796, 4
      %v799 = vshll.u32 %v737, 16
      %v801 = vrot.slane %v799, 5
      %v802 = vsel %vm436, %v797, %v801
      %v803 = vshrl.u32 %v737, 16
      %v805 = vrot.slane %v803, 4
      %v806 = vor.u32 %v805, %v801
      %v807 = vrot.slane %v806, 4
      %v809 = vshll.u32 %v738, 16
      %v811 = vrot.slane %v809, 5
      %v812 = vsel %vm436, %v807, %v811
      %813 = vrot.lane.b32.xlu0 %v752, 32
      %v814 = vpop.permute.xlu0 %813
      %815 = vrot.lane.b32.xlu0 %v762, 32
      %v816 = vpop.permute.xlu0 %815
      %817 = vrot.lane.b32.xlu0 %v772, 32
      %v818 = vpop.permute.xlu0 %817
      %819 = vrot.lane.b32.xlu0 %v782, 32
      %v820 = vpop.permute.xlu0 %819
      %821 = vrot.lane.b32.xlu0 %v792, 32
      %v822 = vpop.permute.xlu0 %821
      %823 = vrot.lane.b32.xlu0 %v802, 32
      %v824 = vpop.permute.xlu0 %823
      %825 = vrot.lane.b32.xlu0 %v812, 32
      %v826 = vpop.permute.xlu0 %825
      %834 = vst.msk [vmem:[#allocation4 + $0x4] sm:$0xf] %vm532, %v814
      %835 = vst.msk [vmem:[#allocation4 + $0x10] sm:$0xf] %vm532, %v816
      %836 = vst.msk [vmem:[#allocation4 + $0x1c] sm:$0xf] %vm532, %v818
      %837 = vst.msk [vmem:[#allocation4 + $0x28] sm:$0xf] %vm532, %v820
      %838 = vst.msk [vmem:[#allocation4 + $0x34] sm:$0xf] %vm532, %v822
      %839 = vst.msk [vmem:[#allocation4 + $0x40] sm:$0xf] %vm532, %v824
      %840 = vst.msk [vmem:[#allocation4 + $0x4c] sm:$0xf] %vm532, %v826
      %v841 = vld [vmem:[#allocation2 + $0x4] sm:$0x8]
      %v842 = vld [vmem:[#allocation2 + $0x8] sm:$0xf]
      %v843 = vld [vmem:[#allocation2 + $0xc] sm:$0xf]
      %v844 = vld [vmem:[#allocation2 + $0x10] sm:$0xf]
      %v845 = vld [vmem:[#allocation2 + $0x14] sm:$0xf]
      %v846 = vld [vmem:[#allocation2 + $0x18] sm:$0xf]
      %v847 = vld [vmem:[#allocation2 + $0x1c] sm:$0xf]
      %v848 = vld [vmem:[#allocation2 + $0x20] sm:$0x7]
      %vm857 = vcmask 1040384
      %vm858 = vcmask 1044484
      %vm859 = vmor %vm857, %vm858
      %v860 = vrot.slane %v841, 7
      %v861 = vrot.slane %v860, 4
      %v862 = vrot.slane %v842, 7
      %v863 = vsel %vm859, %v861, %v862
      %v864 = vrot.slane %v862, 4
      %v865 = vrot.slane %v843, 7
      %v866 = vsel %vm859, %v864, %v865
      %v867 = vrot.slane %v865, 4
      %v868 = vrot.slane %v844, 7
      %v869 = vsel %vm859, %v867, %v868
      %v870 = vrot.slane %v868, 4
      %v871 = vrot.slane %v845, 7
      %v872 = vsel %vm859, %v870, %v871
      %v873 = vrot.slane %v871, 4
      %v874 = vrot.slane %v846, 7
      %v875 = vsel %vm859, %v873, %v874
      %v876 = vrot.slane %v874, 4
      %v877 = vrot.slane %v847, 7
      %v878 = vsel %vm859, %v876, %v877
      %v879 = vrot.slane %v877, 4
      %v880 = vrot.slane %v848, 7
      %v881 = vsel %vm859, %v879, %v880
      %882 = vrot.lane.b32.xlu0 %v863, 64
      %v883 = vpop.permute.xlu0 %882
      %884 = vrot.lane.b32.xlu0 %v866, 64
      %v885 = vpop.permute.xlu0 %884
      %886 = vrot.lane.b32.xlu0 %v869, 64
      %v887 = vpop.permute.xlu0 %886
      %888 = vrot.lane.b32.xlu0 %v872, 64
      %v889 = vpop.permute.xlu0 %888
      %890 = vrot.lane.b32.xlu0 %v875, 64
      %v891 = vpop.permute.xlu0 %890
      %892 = vrot.lane.b32.xlu0 %v878, 64
      %v893 = vpop.permute.xlu0 %892
      %894 = vrot.lane.b32.xlu0 %v881, 64
      %v895 = vpop.permute.xlu0 %894
      %903 = vst.msk [vmem:[#allocation4 + $0x4] sm:$0xf] %vm602, %v883
      %904 = vst.msk [vmem:[#allocation4 + $0x10] sm:$0xf] %vm602, %v885
      %905 = vst.msk [vmem:[#allocation4 + $0x1c] sm:$0xf] %vm602, %v887
      %906 = vst.msk [vmem:[#allocation4 + $0x28] sm:$0xf] %vm602, %v889
      %907 = vst.msk [vmem:[#allocation4 + $0x34] sm:$0xf] %vm602, %v891
      %908 = vst.msk [vmem:[#allocation4 + $0x40] sm:$0xf] %vm602, %v893
      %909 = vst.msk [vmem:[#allocation4 + $0x4c] sm:$0xf] %vm602, %v895
      %v910 = vld [vmem:[#allocation2 + $0x4] sm:$0x8]
      %v911 = vld [vmem:[#allocation2 + $0x8] sm:$0xf]
      %v912 = vld [vmem:[#allocation2 + $0xc] sm:$0xf]
      %v913 = vld [vmem:[#allocation2 + $0x10] sm:$0xf]
      %v914 = vld [vmem:[#allocation2 + $0x14] sm:$0xf]
      %v915 = vld [vmem:[#allocation2 + $0x18] sm:$0xf]
      %v916 = vld [vmem:[#allocation2 + $0x1c] sm:$0xf]
      %v917 = vld [vmem:[#allocation2 + $0x20] sm:$0xf]
      %v919 = vshrl.u32 %v910, 16
      %v921 = vrot.slane %v919, 7
      %v922 = vrot.slane %v921, 4
      %v924 = vshrl.u32 %v911, 16
      %v926 = vrot.slane %v924, 7
      %v927 = vshll.u32 %v911, 16
      %v929 = vor.u32 %v926, %v927
      %v930 = vsel %vm620, %v922, %v929
      %v931 = vrot.slane %v926, 4
      %v933 = vshrl.u32 %v912, 16
      %v935 = vrot.slane %v933, 7
      %v936 = vshll.u32 %v912, 16
      %v938 = vor.u32 %v935, %v936
      %v939 = vsel %vm620, %v931, %v938
      %v940 = vrot.slane %v935, 4
      %v942 = vshrl.u32 %v913, 16
      %v944 = vrot.slane %v942, 7
      %v945 = vshll.u32 %v913, 16
      %v947 = vor.u32 %v944, %v945
      %v948 = vsel %vm620, %v940, %v947
      %v949 = vrot.slane %v944, 4
      %v951 = vshrl.u32 %v914, 16
      %v953 = vrot.slane %v951, 7
      %v954 = vshll.u32 %v914, 16
      %v956 = vor.u32 %v953, %v954
      %v957 = vsel %vm620, %v949, %v956
      %v958 = vrot.slane %v953, 4
      %v960 = vshrl.u32 %v915, 16
      %v962 = vrot.slane %v960, 7
      %v963 = vshll.u32 %v915, 16
      %v965 = vor.u32 %v962, %v963
      %v966 = vsel %vm620, %v958, %v965
      %v967 = vrot.slane %v962, 4
      %v969 = vshrl.u32 %v916, 16
      %v971 = vrot.slane %v969, 7
      %v972 = vshll.u32 %v916, 16
      %v974 = vor.u32 %v971, %v972
      %v975 = vsel %vm620, %v967, %v974
      %v976 = vrot.slane %v971, 4
      %v978 = vshrl.u32 %v917, 16
      %v980 = vrot.slane %v978, 7
      %v981 = vshll.u32 %v917, 16
      %v983 = vor.u32 %v980, %v981
      %v984 = vsel %vm620, %v976, %v983
      %985 = vrot.lane.b32.xlu0 %v930, 96
      %v986 = vpop.permute.xlu0 %985
      %987 = vrot.lane.b32.xlu0 %v939, 96
      %v988 = vpop.permute.xlu0 %987
      %989 = vrot.lane.b32.xlu0 %v948, 96
      %v990 = vpop.permute.xlu0 %989
      %991 = vrot.lane.b32.xlu0 %v957, 96
      %v992 = vpop.permute.xlu0 %991
      %993 = vrot.lane.b32.xlu0 %v966, 96
      %v994 = vpop.permute.xlu0 %993
      %995 = vrot.lane.b32.xlu0 %v975, 96
      %v996 = vpop.permute.xlu0 %995
      %997 = vrot.lane.b32.xlu0 %v984, 96
      %v998 = vpop.permute.xlu0 %997
      %1006 = vst.msk [vmem:[#allocation4 + $0x4] sm:$0xf] %vm709, %v986
      %1007 = vst.msk [vmem:[#allocation4 + $0x10] sm:$0xf] %vm709, %v988
      %1008 = vst.msk [vmem:[#allocation4 + $0x1c] sm:$0xf] %vm709, %v990
      %1009 = vst.msk [vmem:[#allocation4 + $0x28] sm:$0xf] %vm709, %v992
      %1010 = vst.msk [vmem:[#allocation4 + $0x34] sm:$0xf] %vm709, %v994
      %1011 = vst.msk [vmem:[#allocation4 + $0x40] sm:$0xf] %vm709, %v996
      %1012 = vst.msk [vmem:[#allocation4 + $0x4c] sm:$0xf] %vm709, %v998
      %v1013 = vld [vmem:[#allocation2 + $0x8] sm:$0xf]
      %v1014 = vld [vmem:[#allocation2 + $0xc] sm:$0xf]
      %v1015 = vld [vmem:[#allocation2 + $0x10] sm:$0xf]
      %v1016 = vld [vmem:[#allocation2 + $0x14] sm:$0xf]
      %v1017 = vld [vmem:[#allocation2 + $0x18] sm:$0xf]
      %v1018 = vld [vmem:[#allocation2 + $0x1c] sm:$0xf]
      %v1019 = vld [vmem:[#allocation2 + $0x20] sm:$0xf]
      %1020 = vst.msk [vmem:[#allocation4 + $0x8] sm:$0xf] %vm202, %v1013
      %1021 = vst.msk [vmem:[#allocation4 + $0x14] sm:$0xf] %vm202, %v1014
      %1022 = vst.msk [vmem:[#allocation4 + $0x20] sm:$0xf] %vm202, %v1015
      %1023 = vst.msk [vmem:[#allocation4 + $0x2c] sm:$0xf] %vm202, %v1016
      %1024 = vst.msk [vmem:[#allocation4 + $0x38] sm:$0xf] %vm202, %v1017
      %1025 = vst.msk [vmem:[#allocation4 + $0x44] sm:$0xf] %vm202, %v1018
      %1026 = vst.msk [vmem:[#allocation4 + $0x50] sm:$0xf] %vm202, %v1019
      %v1027 = vld [vmem:[#allocation4] sm:$0xff]
      %v1028 = vld [vmem:[#allocation4 + $0x8] sm:$0xf]
      %v1029 = vld [vmem:[#allocation4 + $0xc] sm:$0xff]
      %v1030 = vld [vmem:[#allocation4 + $0x14] sm:$0xf]
      %v1031 = vld [vmem:[#allocation4 + $0x18] sm:$0xff]
      %v1032 = vld [vmem:[#allocation4 + $0x20] sm:$0xf]
      %v1033 = vld [vmem:[#allocation4 + $0x24] sm:$0xff]
      %v1034 = vld [vmem:[#allocation4 + $0x2c] sm:$0xf]
      %v1035 = vld [vmem:[#allocation4 + $0x30] sm:$0xff]
      %v1036 = vld [vmem:[#allocation4 + $0x38] sm:$0xf]
      %v1037 = vld [vmem:[#allocation4 + $0x3c] sm:$0xff]
      %v1038 = vld [vmem:[#allocation4 + $0x44] sm:$0xf]
      %v1039 = vld [vmem:[#allocation4 + $0x48] sm:$0xff]
      %v1040 = vld [vmem:[#allocation4 + $0x50] sm:$0xf]
      %v1041 = vld [vmem:[%s2] sm:$0xf]
      %v1042 = vld [vmem:[%s2 + $0x4] sm:$0xf]
      %v1043 = vld [vmem:[%s2 + $0x8] sm:$0xf]
      %v1044 = vld [vmem:[%s2 + $0xc] sm:$0xf]
      %v1045 = vld [vmem:[%s2 + $0x10] sm:$0xf]
      %v1046 = vld [vmem:[%s2 + $0x14] sm:$0xf]
      %v1047 = vld [vmem:[%s2 + $0x18] sm:$0xf]
      %v1048 = vld [vmem:[%s2 + $0x1c] sm:$0xf]
      %v1049 = vld [vmem:[%s2 + $0x20] sm:$0xf]
      %v1050 = vld [vmem:[%s2 + $0x24] sm:$0xf]
      %v1051 = vld [vmem:[%s2 + $0x28] sm:$0xf]
      %v1052 = vld [vmem:[%s2 + $0x2c] sm:$0xf]
      %v1053 = vld [vmem:[%s2 + $0x30] sm:$0xf]
      %v1054 = vld [vmem:[%s2 + $0x34] sm:$0xf]
      %v1055 = vld [vmem:[%s2 + $0x38] sm:$0xf]
      %v1056 = vld [vmem:[%s2 + $0x3c] sm:$0xf]
      %v1057 = vld [vmem:[%s2 + $0x40] sm:$0xf]
      %v1058 = vld [vmem:[%s2 + $0x44] sm:$0xf]
      %v1059 = vld [vmem:[%s2 + $0x48] sm:$0xf]
      %v1060 = vld [vmem:[%s2 + $0x4c] sm:$0xf]
      %v1061 = vld [vmem:[%s2 + $0x50] sm:$0xf]
      %v1062 = vld [vmem:[%s2 + $0x54] sm:$0xf]
      %v1063 = vld [vmem:[%s2 + $0x58] sm:$0xf]
      %v1064 = vld [vmem:[%s2 + $0x5c] sm:$0xf]
      %v1065 = vld [vmem:[%s2 + $0x60] sm:$0xf]
      %v1066 = vld [vmem:[%s2 + $0x64] sm:$0xf]
      %v1067 = vld [vmem:[%s2 + $0x68] sm:$0xf]
      %v1068 = vld [vmem:[%s2 + $0x6c] sm:$0xf]
      %v1069 = vld [vmem:[%s2 + $0x70] sm:$0xf]
      %v1070 = vld [vmem:[%s2 + $0x74] sm:$0xf]
      %v1071 = vld [vmem:[%s2 + $0x78] sm:$0xf]
      %v1072 = vld [vmem:[%s2 + $0x7c] sm:$0xf]
      %v1073 = vld [vmem:[%s2 + $0x80] sm:$0xf]
      %v1074 = vld [vmem:[%s2 + $0x84] sm:$0xf]
      %v1075 = vld [vmem:[%s2 + $0x88] sm:$0xf]
      %v1076 = vld [vmem:[%s2 + $0x8c] sm:$0xf]
      %v1077 = vld [vmem:[%s3 + $0x1] sm:$0x1]
      %v1078 = vlaneseq
      %v1079 = vshrl.u32 %v1078, 7
      %v1080 = vsub.s32 0, %v1079
      %v1081 = vrot.slane %v1077, %v1080
      %v1096 = vunpack.c.l.b16 %v1027
      %v1097 = vunpack.c.h.b16 %v1027
      %v1098 = vunpack.c.l.b16 %v1028
      %v1099 = vunpack.c.l.b16 %v1029
      %v1100 = vunpack.c.h.b16 %v1029
      %v1101 = vunpack.c.l.b16 %v1030
      %v1102 = vunpack.c.l.b16 %v1031
      %v1103 = vunpack.c.h.b16 %v1031
      %v1104 = vunpack.c.l.b16 %v1032
      %v1105 = vunpack.c.l.b16 %v1033
      %v1106 = vunpack.c.h.b16 %v1033
      %v1107 = vunpack.c.l.b16 %v1034
      %v1108 = vunpack.c.l.b16 %v1035
      %v1109 = vunpack.c.h.b16 %v1035
      %v1110 = vunpack.c.l.b16 %v1036
      %v1111 = vunpack.c.l.b16 %v1037
      %v1112 = vunpack.c.h.b16 %v1037
      %v1113 = vunpack.c.l.b16 %v1038
      %v1114 = vunpack.c.l.b16 %v1039
      %v1115 = vunpack.c.h.b16 %v1039
      %v1116 = vunpack.c.l.b16 %v1040
      %v1117 = vpack.c.b16 %v1099, %v1096
      %v1118 = vpack.c.b16 %v1100, %v1097
      %v1119 = vpack.c.b16 %v1101, %v1098
      %v1120 = vpack.c.b16 %v1105, %v1102
      %v1121 = vpack.c.b16 %v1106, %v1103
      %v1122 = vpack.c.b16 %v1107, %v1104
      %v1123 = vpack.c.b16 %v1111, %v1108
      %v1124 = vpack.c.b16 %v1112, %v1109
      %v1125 = vpack.c.b16 %v1113, %v1110
      %v1126 = vpack.c.b16 %v1114, %v1114
      %v1127 = vpack.c.b16 %v1115, %v1115
      %v1128 = vpack.c.b16 %v1116, %v1116
      %v1173 = vunpack.c.l.b16 %v1041
      %v1174 = vunpack.c.l.b16 %v1042
      %v1175 = vunpack.c.l.b16 %v1043
      %v1176 = vunpack.c.l.b16 %v1044
      %v1177 = vunpack.c.l.b16 %v1045
      %v1178 = vunpack.c.l.b16 %v1046
      %v1179 = vunpack.c.l.b16 %v1047
      %v1180 = vunpack.c.l.b16 %v1048
      %v1181 = vunpack.c.l.b16 %v1049
      %v1182 = vunpack.c.l.b16 %v1050
      %v1183 = vunpack.c.l.b16 %v1051
      %v1184 = vunpack.c.l.b16 %v1052
      %v1185 = vunpack.c.l.b16 %v1053
      %v1186 = vunpack.c.l.b16 %v1054
      %v1187 = vunpack.c.l.b16 %v1055
      %v1188 = vunpack.c.l.b16 %v1056
      %v1189 = vunpack.c.l.b16 %v1057
      %v1190 = vunpack.c.l.b16 %v1058
      %v1191 = vunpack.c.l.b16 %v1059
      %v1192 = vunpack.c.l.b16 %v1060
      %v1193 = vunpack.c.l.b16 %v1061
      %v1194 = vunpack.c.l.b16 %v1062
      %v1195 = vunpack.c.l.b16 %v1063
      %v1196 = vunpack.c.l.b16 %v1064
      %v1197 = vunpack.c.l.b16 %v1065
      %v1198 = vunpack.c.l.b16 %v1066
      %v1199 = vunpack.c.l.b16 %v1067
      %v1200 = vunpack.c.l.b16 %v1068
      %v1201 = vunpack.c.l.b16 %v1069
      %v1202 = vunpack.c.l.b16 %v1070
      %v1203 = vunpack.c.l.b16 %v1071
      %v1204 = vunpack.c.l.b16 %v1072
      %v1205 = vunpack.c.l.b16 %v1073
      %v1206 = vunpack.c.l.b16 %v1074
      %v1207 = vunpack.c.l.b16 %v1075
      %v1208 = vunpack.c.l.b16 %v1076
      %v1209 = vpack.c.b16 %v1174, %v1173
      %v1210 = vpack.c.b16 %v1176, %v1175
      %v1211 = vpack.c.b16 %v1178, %v1177
      %v1212 = vpack.c.b16 %v1180, %v1179
      %v1213 = vpack.c.b16 %v1182, %v1181
      %v1214 = vpack.c.b16 %v1184, %v1183
      %v1215 = vpack.c.b16 %v1186, %v1185
      %v1216 = vpack.c.b16 %v1188, %v1187
      %v1217 = vpack.c.b16 %v1190, %v1189
      %v1218 = vpack.c.b16 %v1192, %v1191
      %v1219 = vpack.c.b16 %v1194, %v1193
      %v1220 = vpack.c.b16 %v1196, %v1195
      %v1221 = vpack.c.b16 %v1198, %v1197
      %v1222 = vpack.c.b16 %v1200, %v1199
      %v1223 = vpack.c.b16 %v1202, %v1201
      %v1224 = vpack.c.b16 %v1204, %v1203
      %v1225 = vpack.c.b16 %v1206, %v1205
      %v1226 = vpack.c.b16 %v1208, %v1207
      %vm1245 = vcmask 261120
      %v1247 = vsel %vm1245, %v1119, 0
      %v1250 = vsel %vm1245, %v1122, 0
      %v1253 = vsel %vm1245, %v1125, 0
      %v1256 = vsel %vm1245, %v1128, 0
      %1258 = vmatprep.subr.bf16.mxu0 0
      %1259 = vmatpush1.bf16.msra.mxu0 %v1209
      %1260 = vmatprep.subr.bf16.mxu0 0
      %1261 = vmatpush1.bf16.msra.mxu0 %v1210
      %1262 = vmatprep.subr.bf16.mxu0 0
      %1263 = vmatpush1.bf16.msra.mxu0 %v1211
      %1264 = vmatprep.subr.bf16.mxu0 0
      %1265 = vmatpush1.bf16.msra.mxu0 %v1212
      %1266 = vmatprep.subr.bf16.mxu0 0
      %1267 = vmatpush1.bf16.msra.mxu0 %v1213
      %1268 = vmatprep.subr.bf16.mxu0 0
      %1269 = vmatpush1.bf16.msra.mxu0 %v1214
      %1270 = vmatprep.subr.bf16.mxu0 0
      %1271 = vmatpush1.bf16.msra.mxu0 %v1215
      %1272 = vmatprep.subr.bf16.mxu0 0
      %1273 = vmatpush1.bf16.msra.mxu0 %v1216
      %1274 = vmatprep.subr.bf16.mxu0 0
      %1275 = vmatpush1.bf16.msra.mxu0 %v1217
      %1276 = vmatprep.subr.bf16.mxu0 0
      %1277 = vmatpush1.bf16.msra.mxu0 %v1218
      %1278 = vmatprep.subr.bf16.mxu0 0
      %1279 = vmatpush1.bf16.msra.mxu0 %v1219
      %1280 = vmatprep.subr.bf16.mxu0 0
      %1281 = vmatpush1.bf16.msra.mxu0 %v1220
      %1282 = vmatprep.subr.bf16.mxu0 0
      %1283 = vmatpush1.bf16.msra.mxu0 %v1221
      %1284 = vmatprep.subr.bf16.mxu0 0
      %1285 = vmatpush1.bf16.msra.mxu0 %v1222
      %1286 = vmatprep.subr.bf16.mxu0 0
      %1287 = vmatpush1.bf16.msra.mxu0 %v1223
      %1288 = vmatprep.subr.bf16.mxu0 0
      %1289 = vmatpush1.bf16.msra.mxu0 %v1224
      %1290 = vmatprep.mubr.bf16.mxu0 %v1118
      %1291 = vmatmul.mubr.bf16.gmra.mrb[0].mxu0 %v1117
      %v1292 = vpop.f32.mrb[0].mxu0
      %v1293 = vadd.f32 %v1081, %v1292
      %v1294 = vpop.f32.mrb[0].mxu0
      %v1295 = vpop.f32.mrb[0].mxu0
      %v1296 = vadd.f32 %v1081, %v1295
      %v1297 = vpop.f32.mrb[0].mxu0
      %1298 = vmatprep.mubr.bf16.mxu0 %v1121
      %1299 = vmatmul.mubr.bf16.gmra.mrb[0].mxu0 %v1120
      %v1300 = vpop.f32.mrb[0].mxu0
      %v1301 = vadd.f32 %v1081, %v1300
      %v1302 = vpop.f32.mrb[0].mxu0
      %v1303 = vpop.f32.mrb[0].mxu0
      %v1304 = vadd.f32 %v1081, %v1303
      %v1305 = vpop.f32.mrb[0].mxu0
      %1306 = vmatprep.mubr.bf16.mxu0 %v1124
      %1307 = vmatmul.mubr.bf16.gmra.mrb[0].mxu0 %v1123
      %v1308 = vpop.f32.mrb[0].mxu0
      %v1309 = vadd.f32 %v1081, %v1308
      %v1310 = vpop.f32.mrb[0].mxu0
      %v1311 = vpop.f32.mrb[0].mxu0
      %v1312 = vadd.f32 %v1081, %v1311
      %v1313 = vpop.f32.mrb[0].mxu0
      %1314 = vmatprep.mubr.bf16.mxu0 %v1127
      %1315 = vmatmul.mubr.bf16.gmra.mrb[0].mxu0 %v1126
      %v1316 = vpop.f32.mrb[0].mxu0
      %v1317 = vadd.f32 %v1081, %v1316
      %v1318 = vpop.f32.mrb[0].mxu0
      %v1319 = vpop.f32.mrb[0].mxu0
      %v1320 = vpop.f32.mrb[0].mxu0
      %1321 = vdwg.mxu0
      %1322 = vmatprep.subr.bf16.mxu0 0
      %1323 = vmatpush1.bf16.msra.mxu0 %v1225
      %1324 = vmatprep.subr.bf16.mxu0 0
      %1325 = vmatpush1.bf16.msra.mxu0 %v1226
      %1326 = vmatprep.subr.bf16.mxu0 0
      %1327 = vmatpush1.bf16.msra.mxu0 0
      %1328 = vmatprep.subr.bf16.mxu0 0
      %1329 = vmatpush1.bf16.msra.mxu0 0
      %1330 = vmatprep.subr.bf16.mxu0 0
      %1331 = vmatpush1.bf16.msra.mxu0 0
      %1332 = vmatprep.subr.bf16.mxu0 0
      %1333 = vmatpush1.bf16.msra.mxu0 0
      %1334 = vmatprep.subr.bf16.mxu0 0
      %1335 = vmatpush1.bf16.msra.mxu0 0
      %1336 = vmatprep.subr.bf16.mxu0 0
      %1337 = vmatpush1.bf16.msra.mxu0 0
      %1338 = vmatprep.subr.bf16.mxu0 0
      %1339 = vmatpush1.bf16.msra.mxu0 0
      %1340 = vmatprep.subr.bf16.mxu0 0
      %1341 = vmatpush1.bf16.msra.mxu0 0
      %1342 = vmatprep.subr.bf16.mxu0 0
      %1343 = vmatpush1.bf16.msra.mxu0 0
      %1344 = vmatprep.subr.bf16.mxu0 0
      %1345 = vmatpush1.bf16.msra.mxu0 0
      %1346 = vmatprep.subr.bf16.mxu0 0
      %1347 = vmatpush1.bf16.msra.mxu0 0
      %1348 = vmatprep.subr.bf16.mxu0 0
      %1349 = vmatpush1.bf16.msra.mxu0 0
      %1350 = vmatprep.subr.bf16.mxu0 0
      %1351 = vmatpush1.bf16.msra.mxu0 0
      %1352 = vmatprep.subr.bf16.mxu0 0
      %1353 = vmatpush1.bf16.msra.mxu0 0
      %1354 = vmatprep.mubr.bf16.mxu0 0
      %1355 = vmatmul.mubr.bf16.gmra.mrb[0].mxu0 %v1247
      %v1356 = vpop.f32.mrb[0].mxu0
      %v1357 = vadd.f32 %v1293, %v1356
      %v1358 = vpop.f32.mrb[0].mxu0
      %v1359 = vpop.f32.mrb[0].mxu0
      %v1360 = vadd.f32 %v1296, %v1359
      %v1361 = vpop.f32.mrb[0].mxu0
      %1362 = vmatprep.mubr.bf16.mxu0 0
      %1363 = vmatmul.mubr.bf16.gmra.mrb[0].mxu0 %v1250
      %v1364 = vpop.f32.mrb[0].mxu0
      %v1365 = vadd.f32 %v1301, %v1364
      %v1366 = vpop.f32.mrb[0].mxu0
      %v1367 = vpop.f32.mrb[0].mxu0
      %v1368 = vadd.f32 %v1304, %v1367
      %v1369 = vpop.f32.mrb[0].mxu0
      %1370 = vmatprep.mubr.bf16.mxu0 0
      %1371 = vmatmul.mubr.bf16.gmra.mrb[0].mxu0 %v1253
      %v1372 = vpop.f32.mrb[0].mxu0
      %v1373 = vadd.f32 %v1309, %v1372
      %v1374 = vpop.f32.mrb[0].mxu0
      %v1375 = vpop.f32.mrb[0].mxu0
      %v1376 = vadd.f32 %v1312, %v1375
      %v1377 = vpop.f32.mrb[0].mxu0
      %1378 = vmatprep.mubr.bf16.mxu0 0
      %1379 = vmatmul.mubr.bf16.gmra.mrb[0].mxu0 %v1256
      %v1380 = vpop.f32.mrb[0].mxu0
      %v1381 = vadd.f32 %v1317, %v1380
      %v1382 = vpop.f32.mrb[0].mxu0
      %v1383 = vpop.f32.mrb[0].mxu0
      %v1384 = vpop.f32.mrb[0].mxu0
      %1385 = vdwg.mxu0
      %v1386 = vmax.f32 %v1357, 0.0
      %v1387 = vmax.f32 %v1360, 0.0
      %v1388 = vmax.f32 %v1365, 0.0
      %v1389 = vmax.f32 %v1368, 0.0
      %v1390 = vmax.f32 %v1373, 0.0
      %v1391 = vmax.f32 %v1376, 0.0
      %v1392 = vmax.f32 %v1381, 0.0
      %v1393 = vpack.c.bf16 %v1387, %v1386
      %v1394 = vpack.c.bf16 %v1389, %v1388
      %v1395 = vpack.c.bf16 %v1391, %v1390
      %v1396 = vpack.c.bf16 %v1392, %v1392
      %v1401 = vunpack.c.l.b16 %v1393
      %v1402 = vunpack.c.h.b16 %v1393
      %v1403 = vunpack.c.l.b16 %v1394
      %v1404 = vunpack.c.h.b16 %v1394
      %v1405 = vunpack.c.l.b16 %v1395
      %v1406 = vunpack.c.h.b16 %v1395
      %v1407 = vunpack.c.l.b16 %v1396
      %v1408 = vpack.c.b16 %v1401, %v1401
      %v1409 = vpack.c.b16 %v1402, %v1402
      %v1410 = vpack.c.b16 %v1403, %v1403
      %v1411 = vpack.c.b16 %v1404, %v1404
      %v1412 = vpack.c.b16 %v1405, %v1405
      %v1413 = vpack.c.b16 %v1406, %v1406
      %v1414 = vpack.c.b16 %v1407, %v1407
      %1422 = vst.msk [vmem:[#allocation3] sm:$0xf] %vm202, %v1408
      %1423 = vst.msk [vmem:[#allocation3 + $0x4] sm:$0xf] %vm202, %v1409
      %1424 = vst.msk [vmem:[#allocation3 + $0x8] sm:$0xf] %vm202, %v1410
      %1425 = vst.msk [vmem:[#allocation3 + $0xc] sm:$0xf] %vm202, %v1411
      %1426 = vst.msk [vmem:[#allocation3 + $0x10] sm:$0xf] %vm202, %v1412
      %1427 = vst.msk [vmem:[#allocation3 + $0x14] sm:$0xf] %vm202, %v1413
      %1428 = vst.msk [vmem:[#allocation3 + $0x18] sm:$0xf] %vm202, %v1414
      %v1429 = vld [vmem:[#allocation3] sm:$0xf]
      %v1430 = vld [vmem:[#allocation3 + $0x4] sm:$0xf]
      %v1431 = vld [vmem:[#allocation3 + $0x8] sm:$0xf]
      %v1432 = vld [vmem:[#allocation3 + $0xc] sm:$0xf]
      %v1433 = vld [vmem:[#allocation3 + $0x10] sm:$0xf]
      %v1434 = vld [vmem:[#allocation3 + $0x14] sm:$0xf]
      %v1435 = vld [vmem:[#allocation3 + $0x18] sm:$0xf]
      %1436 = vst.msk [vmem:[#allocation4] sm:$0xf] %vm202, %v1429
      %1437 = vst.msk [vmem:[#allocation4 + $0xc] sm:$0xf] %vm202, %v1430
      %1438 = vst.msk [vmem:[#allocation4 + $0x18] sm:$0xf] %vm202, %v1431
      %1439 = vst.msk [vmem:[#allocation4 + $0x24] sm:$0xf] %vm202, %v1432
      %1440 = vst.msk [vmem:[#allocation4 + $0x30] sm:$0xf] %vm202, %v1433
      %1441 = vst.msk [vmem:[#allocation4 + $0x3c] sm:$0xf] %vm202, %v1434
      %1442 = vst.msk [vmem:[#allocation4 + $0x48] sm:$0xf] %vm202, %v1435
      %v1443 = vld [vmem:[#allocation3] sm:$0xf]
      %v1444 = vld [vmem:[#allocation3 + $0x4] sm:$0xf]
      %v1445 = vld [vmem:[#allocation3 + $0x8] sm:$0xf]
      %v1446 = vld [vmem:[#allocation3 + $0xc] sm:$0xf]
      %v1447 = vld [vmem:[#allocation3 + $0x10] sm:$0xf]
      %v1448 = vld [vmem:[#allocation3 + $0x14] sm:$0xf]
      %v1449 = vld [vmem:[#allocation3 + $0x18] sm:$0xf]
      %v1450 = vld [vmem:[#allocation3 + $0x1c] sm:$0x1]
      %v1452 = vshrl.u32 %v1443, 16
      %v1454 = vrot.slane %v1452, 4
      %v1455 = vshll.u32 %v1443, 16
      %v1457 = vrot.slane %v1455, 5
      %v1458 = vor.u32 %v1454, %v1457
      %v1459 = vrot.slane %v1458, 4
      %v1461 = vshll.u32 %v1444, 16
      %v1463 = vrot.slane %v1461, 5
      %v1464 = vsel %vm436, %v1459, %v1463
      %v1465 = vshrl.u32 %v1444, 16
      %v1467 = vrot.slane %v1465, 4
      %v1468 = vor.u32 %v1467, %v1463
      %v1469 = vrot.slane %v1468, 4
      %v1471 = vshll.u32 %v1445, 16
      %v1473 = vrot.slane %v1471, 5
      %v1474 = vsel %vm436, %v1469, %v1473
      %v1475 = vshrl.u32 %v1445, 16
      %v1477 = vrot.slane %v1475, 4
      %v1478 = vor.u32 %v1477, %v1473
      %v1479 = vrot.slane %v1478, 4
      %v1481 = vshll.u32 %v1446, 16
      %v1483 = vrot.slane %v1481, 5
      %v1484 = vsel %vm436, %v1479, %v1483
      %v1485 = vshrl.u32 %v1446, 16
      %v1487 = vrot.slane %v1485, 4
      %v1488 = vor.u32 %v1487, %v1483
      %v1489 = vrot.slane %v1488, 4
      %v1491 = vshll.u32 %v1447, 16
      %v1493 = vrot.slane %v1491, 5
      %v1494 = vsel %vm436, %v1489, %v1493
      %v1495 = vshrl.u32 %v1447, 16
      %v1497 = vrot.slane %v1495, 4
      %v1498 = vor.u32 %v1497, %v1493
      %v1499 = vrot.slane %v1498, 4
      %v1501 = vshll.u32 %v1448, 16
      %v1503 = vrot.slane %v1501, 5
      %v1504 = vsel %vm436, %v1499, %v1503
      %v1505 = vshrl.u32 %v1448, 16
      %v1507 = vrot.slane %v1505, 4
      %v1508 = vor.u32 %v1507, %v1503
      %v1509 = vrot.slane %v1508, 4
      %v1511 = vshll.u32 %v1449, 16
      %v1513 = vrot.slane %v1511, 5
      %v1514 = vsel %vm436, %v1509, %v1513
      %v1515 = vshrl.u32 %v1449, 16
      %v1517 = vrot.slane %v1515, 4
      %v1518 = vor.u32 %v1517, %v1513
      %v1519 = vrot.slane %v1518, 4
      %v1521 = vshll.u32 %v1450, 16
      %v1523 = vrot.slane %v1521, 5
      %v1524 = vsel %vm436, %v1519, %v1523
      %1525 = vrot.lane.b32.xlu0 %v1464, 32
      %v1526 = vpop.permute.xlu0 %1525
      %1527 = vrot.lane.b32.xlu0 %v1474, 32
      %v1528 = vpop.permute.xlu0 %1527
      %1529 = vrot.lane.b32.xlu0 %v1484, 32
      %v1530 = vpop.permute.xlu0 %1529
      %1531 = vrot.lane.b32.xlu0 %v1494, 32
      %v1532 = vpop.permute.xlu0 %1531
      %1533 = vrot.lane.b32.xlu0 %v1504, 32
      %v1534 = vpop.permute.xlu0 %1533
      %1535 = vrot.lane.b32.xlu0 %v1514, 32
      %v1536 = vpop.permute.xlu0 %1535
      %1537 = vrot.lane.b32.xlu0 %v1524, 32
      %v1538 = vpop.permute.xlu0 %1537
      %1546 = vst.msk [vmem:[#allocation4] sm:$0xf] %vm532, %v1526
      %1547 = vst.msk [vmem:[#allocation4 + $0xc] sm:$0xf] %vm532, %v1528
      %1548 = vst.msk [vmem:[#allocation4 + $0x18] sm:$0xf] %vm532, %v1530
      %1549 = vst.msk [vmem:[#allocation4 + $0x24] sm:$0xf] %vm532, %v1532
      %1550 = vst.msk [vmem:[#allocation4 + $0x30] sm:$0xf] %vm532, %v1534
      %1551 = vst.msk [vmem:[#allocation4 + $0x3c] sm:$0xf] %vm532, %v1536
      %1552 = vst.msk [vmem:[#allocation4 + $0x48] sm:$0xf] %vm532, %v1538
      %v1553 = vld [vmem:[#allocation3] sm:$0xe]
      %v1554 = vld [vmem:[#allocation3 + $0x4] sm:$0xf]
      %v1555 = vld [vmem:[#allocation3 + $0x8] sm:$0xf]
      %v1556 = vld [vmem:[#allocation3 + $0xc] sm:$0xf]
      %v1557 = vld [vmem:[#allocation3 + $0x10] sm:$0xf]
      %v1558 = vld [vmem:[#allocation3 + $0x14] sm:$0xf]
      %v1559 = vld [vmem:[#allocation3 + $0x18] sm:$0xf]
      %v1560 = vld [vmem:[#allocation3 + $0x1c] sm:$0x1]
      %v1569 = vrot.slane %v1553, 5
      %v1570 = vrot.slane %v1569, 4
      %v1571 = vrot.slane %v1554, 5
      %v1572 = vsel %vm558, %v1570, %v1571
      %v1573 = vrot.slane %v1571, 4
      %v1574 = vrot.slane %v1555, 5
      %v1575 = vsel %vm558, %v1573, %v1574
      %v1576 = vrot.slane %v1574, 4
      %v1577 = vrot.slane %v1556, 5
      %v1578 = vsel %vm558, %v1576, %v1577
      %v1579 = vrot.slane %v1577, 4
      %v1580 = vrot.slane %v1557, 5
      %v1581 = vsel %vm558, %v1579, %v1580
      %v1582 = vrot.slane %v1580, 4
      %v1583 = vrot.slane %v1558, 5
      %v1584 = vsel %vm558, %v1582, %v1583
      %v1585 = vrot.slane %v1583, 4
      %v1586 = vrot.slane %v1559, 5
      %v1587 = vsel %vm558, %v1585, %v1586
      %v1588 = vrot.slane %v1586, 4
      %v1589 = vrot.slane %v1560, 5
      %v1590 = vsel %vm558, %v1588, %v1589
      %1591 = vrot.lane.b32.xlu0 %v1572, 64
      %v1592 = vpop.permute.xlu0 %1591
      %1593 = vrot.lane.b32.xlu0 %v1575, 64
      %v1594 = vpop.permute.xlu0 %1593
      %1595 = vrot.lane.b32.xlu0 %v1578, 64
      %v1596 = vpop.permute.xlu0 %1595
      %1597 = vrot.lane.b32.xlu0 %v1581, 64
      %v1598 = vpop.permute.xlu0 %1597
      %1599 = vrot.lane.b32.xlu0 %v1584, 64
      %v1600 = vpop.permute.xlu0 %1599
      %1601 = vrot.lane.b32.xlu0 %v1587, 64
      %v1602 = vpop.permute.xlu0 %1601
      %1603 = vrot.lane.b32.xlu0 %v1590, 64
      %v1604 = vpop.permute.xlu0 %1603
      %1612 = vst.msk [vmem:[#allocation4] sm:$0xf] %vm602, %v1592
      %1613 = vst.msk [vmem:[#allocation4 + $0xc] sm:$0xf] %vm602, %v1594
      %1614 = vst.msk [vmem:[#allocation4 + $0x18] sm:$0xf] %vm602, %v1596
      %1615 = vst.msk [vmem:[#allocation4 + $0x24] sm:$0xf] %vm602, %v1598
      %1616 = vst.msk [vmem:[#allocation4 + $0x30] sm:$0xf] %vm602, %v1600
      %1617 = vst.msk [vmem:[#allocation4 + $0x3c] sm:$0xf] %vm602, %v1602
      %1618 = vst.msk [vmem:[#allocation4 + $0x48] sm:$0xf] %vm602, %v1604
      %v1619 = vld [vmem:[#allocation3] sm:$0x8]
      %v1620 = vld [vmem:[#allocation3 + $0x4] sm:$0xf]
      %v1621 = vld [vmem:[#allocation3 + $0x8] sm:$0xf]
      %v1622 = vld [vmem:[#allocation3 + $0xc] sm:$0xf]
      %v1623 = vld [vmem:[#allocation3 + $0x10] sm:$0xf]
      %v1624 = vld [vmem:[#allocation3 + $0x14] sm:$0xf]
      %v1625 = vld [vmem:[#allocation3 + $0x18] sm:$0xf]
      %v1626 = vld [vmem:[#allocation3 + $0x1c] sm:$0xf]
      %v1628 = vshrl.u32 %v1619, 16
      %v1630 = vrot.slane %v1628, 7
      %v1631 = vrot.slane %v1630, 4
      %v1633 = vshrl.u32 %v1620, 16
      %v1635 = vrot.slane %v1633, 7
      %v1636 = vshll.u32 %v1620, 16
      %v1638 = vor.u32 %v1635, %v1636
      %v1639 = vsel %vm620, %v1631, %v1638
      %v1640 = vrot.slane %v1635, 4
      %v1642 = vshrl.u32 %v1621, 16
      %v1644 = vrot.slane %v1642, 7
      %v1645 = vshll.u32 %v1621, 16
      %v1647 = vor.u32 %v1644, %v1645
      %v1648 = vsel %vm620, %v1640, %v1647
      %v1649 = vrot.slane %v1644, 4
      %v1651 = vshrl.u32 %v1622, 16
      %v1653 = vrot.slane %v1651, 7
      %v1654 = vshll.u32 %v1622, 16
      %v1656 = vor.u32 %v1653, %v1654
      %v1657 = vsel %vm620, %v1649, %v1656
      %v1658 = vrot.slane %v1653, 4
      %v1660 = vshrl.u32 %v1623, 16
      %v1662 = vrot.slane %v1660, 7
      %v1663 = vshll.u32 %v1623, 16
      %v1665 = vor.u32 %v1662, %v1663
      %v1666 = vsel %vm620, %v1658, %v1665
      %v1667 = vrot.slane %v1662, 4
      %v1669 = vshrl.u32 %v1624, 16
      %v1671 = vrot.slane %v1669, 7
      %v1672 = vshll.u32 %v1624, 16
      %v1674 = vor.u32 %v1671, %v1672
      %v1675 = vsel %vm620, %v1667, %v1674
      %v1676 = vrot.slane %v1671, 4
      %v1678 = vshrl.u32 %v1625, 16
      %v1680 = vrot.slane %v1678, 7
      %v1681 = vshll.u32 %v1625, 16
      %v1683 = vor.u32 %v1680, %v1681
      %v1684 = vsel %vm620, %v1676, %v1683
      %v1685 = vrot.slane %v1680, 4
      %v1687 = vshrl.u32 %v1626, 16
      %v1689 = vrot.slane %v1687, 7
      %v1690 = vshll.u32 %v1626, 16
      %v1692 = vor.u32 %v1689, %v1690
      %v1693 = vsel %vm620, %v1685, %v1692
      %1694 = vrot.lane.b32.xlu0 %v1639, 96
      %v1695 = vpop.permute.xlu0 %1694
      %1696 = vrot.lane.b32.xlu0 %v1648, 96
      %v1697 = vpop.permute.xlu0 %1696
      %1698 = vrot.lane.b32.xlu0 %v1657, 96
      %v1699 = vpop.permute.xlu0 %1698
      %1700 = vrot.lane.b32.xlu0 %v1666, 96
      %v1701 = vpop.permute.xlu0 %1700
      %1702 = vrot.lane.b32.xlu0 %v1675, 96
      %v1703 = vpop.permute.xlu0 %1702
      %1704 = vrot.lane.b32.xlu0 %v1684, 96
      %v1705 = vpop.permute.xlu0 %1704
      %1706 = vrot.lane.b32.xlu0 %v1693, 96
      %v1707 = vpop.permute.xlu0 %1706
      %1715 = vst.msk [vmem:[#allocation4] sm:$0xf] %vm709, %v1695
      %1716 = vst.msk [vmem:[#allocation4 + $0xc] sm:$0xf] %vm709, %v1697
      %1717 = vst.msk [vmem:[#allocation4 + $0x18] sm:$0xf] %vm709, %v1699
      %1718 = vst.msk [vmem:[#allocation4 + $0x24] sm:$0xf] %vm709, %v1701
      %1719 = vst.msk [vmem:[#allocation4 + $0x30] sm:$0xf] %vm709, %v1703
      %1720 = vst.msk [vmem:[#allocation4 + $0x3c] sm:$0xf] %vm709, %v1705
      %1721 = vst.msk [vmem:[#allocation4 + $0x48] sm:$0xf] %vm709, %v1707
      %v1722 = vld [vmem:[#allocation3 + $0x4] sm:$0xf]
      %v1723 = vld [vmem:[#allocation3 + $0x8] sm:$0xf]
      %v1724 = vld [vmem:[#allocation3 + $0xc] sm:$0xf]
      %v1725 = vld [vmem:[#allocation3 + $0x10] sm:$0xf]
      %v1726 = vld [vmem:[#allocation3 + $0x14] sm:$0xf]
      %v1727 = vld [vmem:[#allocation3 + $0x18] sm:$0xf]
      %v1728 = vld [vmem:[#allocation3 + $0x1c] sm:$0xf]
      %1729 = vst.msk [vmem:[#allocation4 + $0x4] sm:$0xf] %vm202, %v1722
      %1730 = vst.msk [vmem:[#allocation4 + $0x10] sm:$0xf] %vm202, %v1723
      %1731 = vst.msk [vmem:[#allocation4 + $0x1c] sm:$0xf] %vm202, %v1724
      %1732 = vst.msk [vmem:[#allocation4 + $0x28] sm:$0xf] %vm202, %v1725
      %1733 = vst.msk [vmem:[#allocation4 + $0x34] sm:$0xf] %vm202, %v1726
      %1734 = vst.msk [vmem:[#allocation4 + $0x40] sm:$0xf] %vm202, %v1727
      %1735 = vst.msk [vmem:[#allocation4 + $0x4c] sm:$0xf] %vm202, %v1728
      %v1736 = vld [vmem:[#allocation3 + $0x4] sm:$0xf]
      %v1737 = vld [vmem:[#allocation3 + $0x8] sm:$0xf]
      %v1738 = vld [vmem:[#allocation3 + $0xc] sm:$0xf]
      %v1739 = vld [vmem:[#allocation3 + $0x10] sm:$0xf]
      %v1740 = vld [vmem:[#allocation3 + $0x14] sm:$0xf]
      %v1741 = vld [vmem:[#allocation3 + $0x18] sm:$0xf]
      %v1742 = vld [vmem:[#allocation3 + $0x1c] sm:$0xf]
      %v1743 = vld [vmem:[#allocation3 + $0x20] sm:$0x1]
      %v1745 = vshrl.u32 %v1736, 16
      %v1747 = vrot.slane %v1745, 4
      %v1748 = vshll.u32 %v1736, 16
      %v1750 = vrot.slane %v1748, 5
      %v1751 = vor.u32 %v1747, %v1750
      %v1752 = vrot.slane %v1751, 4
      %v1754 = vshll.u32 %v1737, 16
      %v1756 = vrot.slane %v1754, 5
      %v1757 = vsel %vm436, %v1752, %v1756
      %v1758 = vshrl.u32 %v1737, 16
      %v1760 = vrot.slane %v1758, 4
      %v1761 = vor.u32 %v1760, %v1756
      %v1762 = vrot.slane %v1761, 4
      %v1764 = vshll.u32 %v1738, 16
      %v1766 = vrot.slane %v1764, 5
      %v1767 = vsel %vm436, %v1762, %v1766
      %v1768 = vshrl.u32 %v1738, 16
      %v1770 = vrot.slane %v1768, 4
      %v1771 = vor.u32 %v1770, %v1766
      %v1772 = vrot.slane %v1771, 4
      %v1774 = vshll.u32 %v1739, 16
      %v1776 = vrot.slane %v1774, 5
      %v1777 = vsel %vm436, %v1772, %v1776
      %v1778 = vshrl.u32 %v1739, 16
      %v1780 = vrot.slane %v1778, 4
      %v1781 = vor.u32 %v1780, %v1776
      %v1782 = vrot.slane %v1781, 4
      %v1784 = vshll.u32 %v1740, 16
      %v1786 = vrot.slane %v1784, 5
      %v1787 = vsel %vm436, %v1782, %v1786
      %v1788 = vshrl.u32 %v1740, 16
      %v1790 = vrot.slane %v1788, 4
      %v1791 = vor.u32 %v1790, %v1786
      %v1792 = vrot.slane %v1791, 4
      %v1794 = vshll.u32 %v1741, 16
      %v1796 = vrot.slane %v1794, 5
      %v1797 = vsel %vm436, %v1792, %v1796
      %v1798 = vshrl.u32 %v1741, 16
      %v1800 = vrot.slane %v1798, 4
      %v1801 = vor.u32 %v1800, %v1796
      %v1802 = vrot.slane %v1801, 4
      %v1804 = vshll.u32 %v1742, 16
      %v1806 = vrot.slane %v1804, 5
      %v1807 = vsel %vm436, %v1802, %v1806
      %v1808 = vshrl.u32 %v1742, 16
      %v1810 = vrot.slane %v1808, 4
      %v1811 = vor.u32 %v1810, %v1806
      %v1812 = vrot.slane %v1811, 4
      %v1814 = vshll.u32 %v1743, 16
      %v1816 = vrot.slane %v1814, 5
      %v1817 = vsel %vm436, %v1812, %v1816
      %1818 = vrot.lane.b32.xlu0 %v1757, 32
      %v1819 = vpop.permute.xlu0 %1818
      %1820 = vrot.lane.b32.xlu0 %v1767, 32
      %v1821 = vpop.permute.xlu0 %1820
      %1822 = vrot.lane.b32.xlu0 %v1777, 32
      %v1823 = vpop.permute.xlu0 %1822
      %1824 = vrot.lane.b32.xlu0 %v1787, 32
      %v1825 = vpop.permute.xlu0 %1824
      %1826 = vrot.lane.b32.xlu0 %v1797, 32
      %v1827 = vpop.permute.xlu0 %1826
      %1828 = vrot.lane.b32.xlu0 %v1807, 32
      %v1829 = vpop.permute.xlu0 %1828
      %1830 = vrot.lane.b32.xlu0 %v1817, 32
      %v1831 = vpop.permute.xlu0 %1830
      %1839 = vst.msk [vmem:[#allocation4 + $0x4] sm:$0xf] %vm532, %v1819
      %1840 = vst.msk [vmem:[#allocation4 + $0x10] sm:$0xf] %vm532, %v1821
      %1841 = vst.msk [vmem:[#allocation4 + $0x1c] sm:$0xf] %vm532, %v1823
      %1842 = vst.msk [vmem:[#allocation4 + $0x28] sm:$0xf] %vm532, %v1825
      %1843 = vst.msk [vmem:[#allocation4 + $0x34] sm:$0xf] %vm532, %v1827
      %1844 = vst.msk [vmem:[#allocation4 + $0x40] sm:$0xf] %vm532, %v1829
      %1845 = vst.msk [vmem:[#allocation4 + $0x4c] sm:$0xf] %vm532, %v1831
      %v1846 = vld [vmem:[#allocation3 + $0x4] sm:$0x8]
      %v1847 = vld [vmem:[#allocation3 + $0x8] sm:$0xf]
      %v1848 = vld [vmem:[#allocation3 + $0xc] sm:$0xf]
      %v1849 = vld [vmem:[#allocation3 + $0x10] sm:$0xf]
      %v1850 = vld [vmem:[#allocation3 + $0x14] sm:$0xf]
      %v1851 = vld [vmem:[#allocation3 + $0x18] sm:$0xf]
      %v1852 = vld [vmem:[#allocation3 + $0x1c] sm:$0xf]
      %v1853 = vld [vmem:[#allocation3 + $0x20] sm:$0x7]
      %v1862 = vrot.slane %v1846, 7
      %v1863 = vrot.slane %v1862, 4
      %v1864 = vrot.slane %v1847, 7
      %v1865 = vsel %vm859, %v1863, %v1864
      %v1866 = vrot.slane %v1864, 4
      %v1867 = vrot.slane %v1848, 7
      %v1868 = vsel %vm859, %v1866, %v1867
      %v1869 = vrot.slane %v1867, 4
      %v1870 = vrot.slane %v1849, 7
      %v1871 = vsel %vm859, %v1869, %v1870
      %v1872 = vrot.slane %v1870, 4
      %v1873 = vrot.slane %v1850, 7
      %v1874 = vsel %vm859, %v1872, %v1873
      %v1875 = vrot.slane %v1873, 4
      %v1876 = vrot.slane %v1851, 7
      %v1877 = vsel %vm859, %v1875, %v1876
      %v1878 = vrot.slane %v1876, 4
      %v1879 = vrot.slane %v1852, 7
      %v1880 = vsel %vm859, %v1878, %v1879
      %v1881 = vrot.slane %v1879, 4
      %v1882 = vrot.slane %v1853, 7
      %v1883 = vsel %vm859, %v1881, %v1882
      %1884 = vrot.lane.b32.xlu0 %v1865, 64
      %v1885 = vpop.permute.xlu0 %1884
      %1886 = vrot.lane.b32.xlu0 %v1868, 64
      %v1887 = vpop.permute.xlu0 %1886
      %1888 = vrot.lane.b32.xlu0 %v1871, 64
      %v1889 = vpop.permute.xlu0 %1888
      %1890 = vrot.lane.b32.xlu0 %v1874, 64
      %v1891 = vpop.permute.xlu0 %1890
      %1892 = vrot.lane.b32.xlu0 %v1877, 64
      %v1893 = vpop.permute.xlu0 %1892
      %1894 = vrot.lane.b32.xlu0 %v1880, 64
      %v1895 = vpop.permute.xlu0 %1894
      %1896 = vrot.lane.b32.xlu0 %v1883, 64
      %v1897 = vpop.permute.xlu0 %1896
      %1905 = vst.msk [vmem:[#allocation4 + $0x4] sm:$0xf] %vm602, %v1885
      %1906 = vst.msk [vmem:[#allocation4 + $0x10] sm:$0xf] %vm602, %v1887
      %1907 = vst.msk [vmem:[#allocation4 + $0x1c] sm:$0xf] %vm602, %v1889
      %1908 = vst.msk [vmem:[#allocation4 + $0x28] sm:$0xf] %vm602, %v1891
      %1909 = vst.msk [vmem:[#allocation4 + $0x34] sm:$0xf] %vm602, %v1893
      %1910 = vst.msk [vmem:[#allocation4 + $0x40] sm:$0xf] %vm602, %v1895
      %1911 = vst.msk [vmem:[#allocation4 + $0x4c] sm:$0xf] %vm602, %v1897
      %v1912 = vld [vmem:[#allocation3 + $0x4] sm:$0x8]
      %v1913 = vld [vmem:[#allocation3 + $0x8] sm:$0xf]
      %v1914 = vld [vmem:[#allocation3 + $0xc] sm:$0xf]
      %v1915 = vld [vmem:[#allocation3 + $0x10] sm:$0xf]
      %v1916 = vld [vmem:[#allocation3 + $0x14] sm:$0xf]
      %v1917 = vld [vmem:[#allocation3 + $0x18] sm:$0xf]
      %v1918 = vld [vmem:[#allocation3 + $0x1c] sm:$0xf]
      %v1919 = vld [vmem:[#allocation3 + $0x20] sm:$0xf]
      %v1921 = vshrl.u32 %v1912, 16
      %v1923 = vrot.slane %v1921, 7
      %v1924 = vrot.slane %v1923, 4
      %v1926 = vshrl.u32 %v1913, 16
      %v1928 = vrot.slane %v1926, 7
      %v1929 = vshll.u32 %v1913, 16
      %v1931 = vor.u32 %v1928, %v1929
      %v1932 = vsel %vm620, %v1924, %v1931
      %v1933 = vrot.slane %v1928, 4
      %v1935 = vshrl.u32 %v1914, 16
      %v1937 = vrot.slane %v1935, 7
      %v1938 = vshll.u32 %v1914, 16
      %v1940 = vor.u32 %v1937, %v1938
      %v1941 = vsel %vm620, %v1933, %v1940
      %v1942 = vrot.slane %v1937, 4
      %v1944 = vshrl.u32 %v1915, 16
      %v1946 = vrot.slane %v1944, 7
      %v1947 = vshll.u32 %v1915, 16
      %v1949 = vor.u32 %v1946, %v1947
      %v1950 = vsel %vm620, %v1942, %v1949
      %v1951 = vrot.slane %v1946, 4
      %v1953 = vshrl.u32 %v1916, 16
      %v1955 = vrot.slane %v1953, 7
      %v1956 = vshll.u32 %v1916, 16
      %v1958 = vor.u32 %v1955, %v1956
      %v1959 = vsel %vm620, %v1951, %v1958
      %v1960 = vrot.slane %v1955, 4
      %v1962 = vshrl.u32 %v1917, 16
      %v1964 = vrot.slane %v1962, 7
      %v1965 = vshll.u32 %v1917, 16
      %v1967 = vor.u32 %v1964, %v1965
      %v1968 = vsel %vm620, %v1960, %v1967
      %v1969 = vrot.slane %v1964, 4
      %v1971 = vshrl.u32 %v1918, 16
      %v1973 = vrot.slane %v1971, 7
      %v1974 = vshll.u32 %v1918, 16
      %v1976 = vor.u32 %v1973, %v1974
      %v1977 = vsel %vm620, %v1969, %v1976
      %v1978 = vrot.slane %v1973, 4
      %v1980 = vshrl.u32 %v1919, 16
      %v1982 = vrot.slane %v1980, 7
      %v1983 = vshll.u32 %v1919, 16
      %v1985 = vor.u32 %v1982, %v1983
      %v1986 = vsel %vm620, %v1978, %v1985
      %1987 = vrot.lane.b32.xlu0 %v1932, 96
      %v1988 = vpop.permute.xlu0 %1987
      %1989 = vrot.lane.b32.xlu0 %v1941, 96
      %v1990 = vpop.permute.xlu0 %1989
      %1991 = vrot.lane.b32.xlu0 %v1950, 96
      %v1992 = vpop.permute.xlu0 %1991
      %1993 = vrot.lane.b32.xlu0 %v1959, 96
      %v1994 = vpop.permute.xlu0 %1993
      %1995 = vrot.lane.b32.xlu0 %v1968, 96
      %v1996 = vpop.permute.xlu0 %1995
      %1997 = vrot.lane.b32.xlu0 %v1977, 96
      %v1998 = vpop.permute.xlu0 %1997
      %1999 = vrot.lane.b32.xlu0 %v1986, 96
      %v2000 = vpop.permute.xlu0 %1999
      %2008 = vst.msk [vmem:[#allocation4 + $0x4] sm:$0xf] %vm709, %v1988
      %2009 = vst.msk [vmem:[#allocation4 + $0x10] sm:$0xf] %vm709, %v1990
      %2010 = vst.msk [vmem:[#allocation4 + $0x1c] sm:$0xf] %vm709, %v1992
      %2011 = vst.msk [vmem:[#allocation4 + $0x28] sm:$0xf] %vm709, %v1994
      %2012 = vst.msk [vmem:[#allocation4 + $0x34] sm:$0xf] %vm709, %v1996
      %2013 = vst.msk [vmem:[#allocation4 + $0x40] sm:$0xf] %vm709, %v1998
      %2014 = vst.msk [vmem:[#allocation4 + $0x4c] sm:$0xf] %vm709, %v2000
      %v2015 = vld [vmem:[#allocation3 + $0x8] sm:$0xf]
      %v2016 = vld [vmem:[#allocation3 + $0xc] sm:$0xf]
      %v2017 = vld [vmem:[#allocation3 + $0x10] sm:$0xf]
      %v2018 = vld [vmem:[#allocation3 + $0x14] sm:$0xf]
      %v2019 = vld [vmem:[#allocation3 + $0x18] sm:$0xf]
      %v2020 = vld [vmem:[#allocation3 + $0x1c] sm:$0xf]
      %v2021 = vld [vmem:[#allocation3 + $0x20] sm:$0xf]
      %2022 = vst.msk [vmem:[#allocation4 + $0x8] sm:$0xf] %vm202, %v2015
      %2023 = vst.msk [vmem:[#allocation4 + $0x14] sm:$0xf] %vm202, %v2016
      %2024 = vst.msk [vmem:[#allocation4 + $0x20] sm:$0xf] %vm202, %v2017
      %2025 = vst.msk [vmem:[#allocation4 + $0x2c] sm:$0xf] %vm202, %v2018
      %2026 = vst.msk [vmem:[#allocation4 + $0x38] sm:$0xf] %vm202, %v2019
      %2027 = vst.msk [vmem:[#allocation4 + $0x44] sm:$0xf] %vm202, %v2020
      %2028 = vst.msk [vmem:[#allocation4 + $0x50] sm:$0xf] %vm202, %v2021
      %v2029 = vld [vmem:[#allocation4] sm:$0xff]
      %v2030 = vld [vmem:[#allocation4 + $0x8] sm:$0xf]
      %v2031 = vld [vmem:[#allocation4 + $0xc] sm:$0xff]
      %v2032 = vld [vmem:[#allocation4 + $0x14] sm:$0xf]
      %v2033 = vld [vmem:[#allocation4 + $0x18] sm:$0xff]
      %v2034 = vld [vmem:[#allocation4 + $0x20] sm:$0xf]
      %v2035 = vld [vmem:[#allocation4 + $0x24] sm:$0xff]
      %v2036 = vld [vmem:[#allocation4 + $0x2c] sm:$0xf]
      %v2037 = vld [vmem:[#allocation4 + $0x30] sm:$0xff]
      %v2038 = vld [vmem:[#allocation4 + $0x38] sm:$0xf]
      %v2039 = vld [vmem:[#allocation4 + $0x3c] sm:$0xff]
      %v2040 = vld [vmem:[#allocation4 + $0x44] sm:$0xf]
      %v2041 = vld [vmem:[#allocation4 + $0x48] sm:$0xff]
      %v2042 = vld [vmem:[#allocation4 + $0x50] sm:$0xf]
      %s2043 = scalar_lea.vmem %s2, 144
      %v2044 = vld [vmem:[%s2043] sm:$0xf]
      %v2045 = vld [vmem:[%s2043 + $0x4] sm:$0xf]
      %v2046 = vld [vmem:[%s2043 + $0x8] sm:$0xf]
      %v2047 = vld [vmem:[%s2043 + $0xc] sm:$0xf]
      %v2048 = vld [vmem:[%s2043 + $0x10] sm:$0xf]
      %v2049 = vld [vmem:[%s2043 + $0x14] sm:$0xf]
      %v2050 = vld [vmem:[%s2043 + $0x18] sm:$0xf]
      %v2051 = vld [vmem:[%s2043 + $0x1c] sm:$0xf]
      %v2052 = vld [vmem:[%s2043 + $0x20] sm:$0xf]
      %v2053 = vld [vmem:[%s2043 + $0x24] sm:$0xf]
      %v2054 = vld [vmem:[%s2043 + $0x28] sm:$0xf]
      %v2055 = vld [vmem:[%s2043 + $0x2c] sm:$0xf]
      %v2056 = vld [vmem:[%s2043 + $0x30] sm:$0xf]
      %v2057 = vld [vmem:[%s2043 + $0x34] sm:$0xf]
      %v2058 = vld [vmem:[%s2043 + $0x38] sm:$0xf]
      %v2059 = vld [vmem:[%s2043 + $0x3c] sm:$0xf]
      %v2060 = vld [vmem:[%s2043 + $0x40] sm:$0xf]
      %v2061 = vld [vmem:[%s2043 + $0x44] sm:$0xf]
      %v2062 = vld [vmem:[%s2043 + $0x48] sm:$0xf]
      %v2063 = vld [vmem:[%s2043 + $0x4c] sm:$0xf]
      %v2064 = vld [vmem:[%s2043 + $0x50] sm:$0xf]
      %v2065 = vld [vmem:[%s2043 + $0x54] sm:$0xf]
      %v2066 = vld [vmem:[%s2043 + $0x58] sm:$0xf]
      %v2067 = vld [vmem:[%s2043 + $0x5c] sm:$0xf]
      %v2068 = vld [vmem:[%s2043 + $0x60] sm:$0xf]
      %v2069 = vld [vmem:[%s2043 + $0x64] sm:$0xf]
      %v2070 = vld [vmem:[%s2043 + $0x68] sm:$0xf]
      %v2071 = vld [vmem:[%s2043 + $0x6c] sm:$0xf]
      %v2072 = vld [vmem:[%s2043 + $0x70] sm:$0xf]
      %v2073 = vld [vmem:[%s2043 + $0x74] sm:$0xf]
      %v2074 = vld [vmem:[%s2043 + $0x78] sm:$0xf]
      %v2075 = vld [vmem:[%s2043 + $0x7c] sm:$0xf]
      %v2076 = vld [vmem:[%s2043 + $0x80] sm:$0xf]
      %v2077 = vld [vmem:[%s2043 + $0x84] sm:$0xf]
      %v2078 = vld [vmem:[%s2043 + $0x88] sm:$0xf]
      %v2079 = vld [vmem:[%s2043 + $0x8c] sm:$0xf]
      %v2080 = vld [vmem:[%s3 + $0x2] sm:$0x1]
      %v2081 = vlaneseq
      %v2082 = vshrl.u32 %v2081, 7
      %v2083 = vsub.s32 0, %v2082
      %v2084 = vrot.slane %v2080, %v2083
      %v2099 = vunpack.c.l.b16 %v2029
      %v2100 = vunpack.c.h.b16 %v2029
      %v2101 = vunpack.c.l.b16 %v2030
      %v2102 = vunpack.c.l.b16 %v2031
      %v2103 = vunpack.c.h.b16 %v2031
      %v2104 = vunpack.c.l.b16 %v2032
      %v2105 = vunpack.c.l.b16 %v2033
      %v2106 = vunpack.c.h.b16 %v2033
      %v2107 = vunpack.c.l.b16 %v2034
      %v2108 = vunpack.c.l.b16 %v2035
      %v2109 = vunpack.c.h.b16 %v2035
      %v2110 = vunpack.c.l.b16 %v2036
      %v2111 = vunpack.c.l.b16 %v2037
      %v2112 = vunpack.c.h.b16 %v2037
      %v2113 = vunpack.c.l.b16 %v2038
      %v2114 = vunpack.c.l.b16 %v2039
      %v2115 = vunpack.c.h.b16 %v2039
      %v2116 = vunpack.c.l.b16 %v2040
      %v2117 = vunpack.c.l.b16 %v2041
      %v2118 = vunpack.c.h.b16 %v2041
      %v2119 = vunpack.c.l.b16 %v2042
      %v2120 = vpack.c.b16 %v2102, %v2099
      %v2121 = vpack.c.b16 %v2103, %v2100
      %v2122 = vpack.c.b16 %v2104, %v2101
      %v2123 = vpack.c.b16 %v2108, %v2105
      %v2124 = vpack.c.b16 %v2109, %v2106
      %v2125 = vpack.c.b16 %v2110, %v2107
      %v2126 = vpack.c.b16 %v2114, %v2111
      %v2127 = vpack.c.b16 %v2115, %v2112
      %v2128 = vpack.c.b16 %v2116, %v2113
      %v2129 = vpack.c.b16 %v2117, %v2117
      %v2130 = vpack.c.b16 %v2118, %v2118
      %v2131 = vpack.c.b16 %v2119, %v2119
      %v2176 = vunpack.c.l.b16 %v2044
      %v2177 = vunpack.c.l.b16 %v2045
      %v2178 = vunpack.c.l.b16 %v2046
      %v2179 = vunpack.c.l.b16 %v2047
      %v2180 = vunpack.c.l.b16 %v2048
      %v2181 = vunpack.c.l.b16 %v2049
      %v2182 = vunpack.c.l.b16 %v2050
      %v2183 = vunpack.c.l.b16 %v2051
      %v2184 = vunpack.c.l.b16 %v2052
      %v2185 = vunpack.c.l.b16 %v2053
      %v2186 = vunpack.c.l.b16 %v2054
      %v2187 = vunpack.c.l.b16 %v2055
      %v2188 = vunpack.c.l.b16 %v2056
      %v2189 = vunpack.c.l.b16 %v2057
      %v2190 = vunpack.c.l.b16 %v2058
      %v2191 = vunpack.c.l.b16 %v2059
      %v2192 = vunpack.c.l.b16 %v2060
      %v2193 = vunpack.c.l.b16 %v2061
      %v2194 = vunpack.c.l.b16 %v2062
      %v2195 = vunpack.c.l.b16 %v2063
      %v2196 = vunpack.c.l.b16 %v2064
      %v2197 = vunpack.c.l.b16 %v2065
      %v2198 = vunpack.c.l.b16 %v2066
      %v2199 = vunpack.c.l.b16 %v2067
      %v2200 = vunpack.c.l.b16 %v2068
      %v2201 = vunpack.c.l.b16 %v2069
      %v2202 = vunpack.c.l.b16 %v2070
      %v2203 = vunpack.c.l.b16 %v2071
      %v2204 = vunpack.c.l.b16 %v2072
      %v2205 = vunpack.c.l.b16 %v2073
      %v2206 = vunpack.c.l.b16 %v2074
      %v2207 = vunpack.c.l.b16 %v2075
      %v2208 = vunpack.c.l.b16 %v2076
      %v2209 = vunpack.c.l.b16 %v2077
      %v2210 = vunpack.c.l.b16 %v2078
      %v2211 = vunpack.c.l.b16 %v2079
      %v2212 = vpack.c.b16 %v2177, %v2176
      %v2213 = vpack.c.b16 %v2179, %v2178
      %v2214 = vpack.c.b16 %v2181, %v2180
      %v2215 = vpack.c.b16 %v2183, %v2182
      %v2216 = vpack.c.b16 %v2185, %v2184
      %v2217 = vpack.c.b16 %v2187, %v2186
      %v2218 = vpack.c.b16 %v2189, %v2188
      %v2219 = vpack.c.b16 %v2191, %v2190
      %v2220 = vpack.c.b16 %v2193, %v2192
      %v2221 = vpack.c.b16 %v2195, %v2194
      %v2222 = vpack.c.b16 %v2197, %v2196
      %v2223 = vpack.c.b16 %v2199, %v2198
      %v2224 = vpack.c.b16 %v2201, %v2200
      %v2225 = vpack.c.b16 %v2203, %v2202
      %v2226 = vpack.c.b16 %v2205, %v2204
      %v2227 = vpack.c.b16 %v2207, %v2206
      %v2228 = vpack.c.b16 %v2209, %v2208
      %v2229 = vpack.c.b16 %v2211, %v2210
      %v2249 = vsel %vm1245, %v2122, 0
      %v2252 = vsel %vm1245, %v2125, 0
      %v2255 = vsel %vm1245, %v2128, 0
      %v2258 = vsel %vm1245, %v2131, 0
      %2260 = vmatprep.subr.bf16.mxu0 0
      %2261 = vmatpush1.bf16.msra.mxu0 %v2212
      %2262 = vmatprep.subr.bf16.mxu0 0
      %2263 = vmatpush1.bf16.msra.mxu0 %v2213
      %2264 = vmatprep.subr.bf16.mxu0 0
      %2265 = vmatpush1.bf16.msra.mxu0 %v2214
      %2266 = vmatprep.subr.bf16.mxu0 0
      %2267 = vmatpush1.bf16.msra.mxu0 %v2215
      %2268 = vmatprep.subr.bf16.mxu0 0
      %2269 = vmatpush1.bf16.msra.mxu0 %v2216
      %2270 = vmatprep.subr.bf16.mxu0 0
      %2271 = vmatpush1.bf16.msra.mxu0 %v2217
      %2272 = vmatprep.subr.bf16.mxu0 0
      %2273 = vmatpush1.bf16.msra.mxu0 %v2218
      %2274 = vmatprep.subr.bf16.mxu0 0
      %2275 = vmatpush1.bf16.msra.mxu0 %v2219
      %2276 = vmatprep.subr.bf16.mxu0 0
      %2277 = vmatpush1.bf16.msra.mxu0 %v2220
      %2278 = vmatprep.subr.bf16.mxu0 0
      %2279 = vmatpush1.bf16.msra.mxu0 %v2221
      %2280 = vmatprep.subr.bf16.mxu0 0
      %2281 = vmatpush1.bf16.msra.mxu0 %v2222
      %2282 = vmatprep.subr.bf16.mxu0 0
      %2283 = vmatpush1.bf16.msra.mxu0 %v2223
      %2284 = vmatprep.subr.bf16.mxu0 0
      %2285 = vmatpush1.bf16.msra.mxu0 %v2224
      %2286 = vmatprep.subr.bf16.mxu0 0
      %2287 = vmatpush1.bf16.msra.mxu0 %v2225
      %2288 = vmatprep.subr.bf16.mxu0 0
      %2289 = vmatpush1.bf16.msra.mxu0 %v2226
      %2290 = vmatprep.subr.bf16.mxu0 0
      %2291 = vmatpush1.bf16.msra.mxu0 %v2227
      %2292 = vmatprep.mubr.bf16.mxu0 %v2121
      %2293 = vmatmul.mubr.bf16.gmra.mrb[0].mxu0 %v2120
      %v2294 = vpop.f32.mrb[0].mxu0
      %v2295 = vadd.f32 %v2084, %v2294
      %v2296 = vpop.f32.mrb[0].mxu0
      %v2297 = vpop.f32.mrb[0].mxu0
      %v2298 = vadd.f32 %v2084, %v2297
      %v2299 = vpop.f32.mrb[0].mxu0
      %2300 = vmatprep.mubr.bf16.mxu0 %v2124
      %2301 = vmatmul.mubr.bf16.gmra.mrb[0].mxu0 %v2123
      %v2302 = vpop.f32.mrb[0].mxu0
      %v2303 = vadd.f32 %v2084, %v2302
      %v2304 = vpop.f32.mrb[0].mxu0
      %v2305 = vpop.f32.mrb[0].mxu0
      %v2306 = vadd.f32 %v2084, %v2305
      %v2307 = vpop.f32.mrb[0].mxu0
      %2308 = vmatprep.mubr.bf16.mxu0 %v2127
      %2309 = vmatmul.mubr.bf16.gmra.mrb[0].mxu0 %v2126
      %v2310 = vpop.f32.mrb[0].mxu0
      %v2311 = vadd.f32 %v2084, %v2310
      %v2312 = vpop.f32.mrb[0].mxu0
      %v2313 = vpop.f32.mrb[0].mxu0
      %v2314 = vadd.f32 %v2084, %v2313
      %v2315 = vpop.f32.mrb[0].mxu0
      %2316 = vmatprep.mubr.bf16.mxu0 %v2130
      %2317 = vmatmul.mubr.bf16.gmra.mrb[0].mxu0 %v2129
      %v2318 = vpop.f32.mrb[0].mxu0
      %v2319 = vadd.f32 %v2084, %v2318
      %v2320 = vpop.f32.mrb[0].mxu0
      %v2321 = vpop.f32.mrb[0].mxu0
      %v2322 = vpop.f32.mrb[0].mxu0
      %2323 = vdwg.mxu0
      %2324 = vmatprep.subr.bf16.mxu0 0
      %2325 = vmatpush1.bf16.msra.mxu0 %v2228
      %2326 = vmatprep.subr.bf16.mxu0 0
      %2327 = vmatpush1.bf16.msra.mxu0 %v2229
      %2328 = vmatprep.subr.bf16.mxu0 0
      %2329 = vmatpush1.bf16.msra.mxu0 0
      %2330 = vmatprep.subr.bf16.mxu0 0
      %2331 = vmatpush1.bf16.msra.mxu0 0
      %2332 = vmatprep.subr.bf16.mxu0 0
      %2333 = vmatpush1.bf16.msra.mxu0 0
      %2334 = vmatprep.subr.bf16.mxu0 0
      %2335 = vmatpush1.bf16.msra.mxu0 0
      %2336 = vmatprep.subr.bf16.mxu0 0
      %2337 = vmatpush1.bf16.msra.mxu0 0
      %2338 = vmatprep.subr.bf16.mxu0 0
      %2339 = vmatpush1.bf16.msra.mxu0 0
      %2340 = vmatprep.subr.bf16.mxu0 0
      %2341 = vmatpush1.bf16.msra.mxu0 0
      %2342 = vmatprep.subr.bf16.mxu0 0
      %2343 = vmatpush1.bf16.msra.mxu0 0
      %2344 = vmatprep.subr.bf16.mxu0 0
      %2345 = vmatpush1.bf16.msra.mxu0 0
      %2346 = vmatprep.subr.bf16.mxu0 0
      %2347 = vmatpush1.bf16.msra.mxu0 0
      %2348 = vmatprep.subr.bf16.mxu0 0
      %2349 = vmatpush1.bf16.msra.mxu0 0
      %2350 = vmatprep.subr.bf16.mxu0 0
      %2351 = vmatpush1.bf16.msra.mxu0 0
      %2352 = vmatprep.subr.bf16.mxu0 0
      %2353 = vmatpush1.bf16.msra.mxu0 0
      %2354 = vmatprep.subr.bf16.mxu0 0
      %2355 = vmatpush1.bf16.msra.mxu0 0
      %2356 = vmatprep.mubr.bf16.mxu0 0
      %2357 = vmatmul.mubr.bf16.gmra.mrb[0].mxu0 %v2249
      %v2358 = vpop.f32.mrb[0].mxu0
      %v2359 = vadd.f32 %v2295, %v2358
      %v2360 = vpop.f32.mrb[0].mxu0
      %v2361 = vpop.f32.mrb[0].mxu0
      %v2362 = vadd.f32 %v2298, %v2361
      %v2363 = vpop.f32.mrb[0].mxu0
      %2364 = vmatprep.mubr.bf16.mxu0 0
      %2365 = vmatmul.mubr.bf16.gmra.mrb[0].mxu0 %v2252
      %v2366 = vpop.f32.mrb[0].mxu0
      %v2367 = vadd.f32 %v2303, %v2366
      %v2368 = vpop.f32.mrb[0].mxu0
      %v2369 = vpop.f32.mrb[0].mxu0
      %v2370 = vadd.f32 %v2306, %v2369
      %v2371 = vpop.f32.mrb[0].mxu0
      %2372 = vmatprep.mubr.bf16.mxu0 0
      %2373 = vmatmul.mubr.bf16.gmra.mrb[0].mxu0 %v2255
      %v2374 = vpop.f32.mrb[0].mxu0
      %v2375 = vadd.f32 %v2311, %v2374
      %v2376 = vpop.f32.mrb[0].mxu0
      %v2377 = vpop.f32.mrb[0].mxu0
      %v2378 = vadd.f32 %v2314, %v2377
      %v2379 = vpop.f32.mrb[0].mxu0
      %2380 = vmatprep.mubr.bf16.mxu0 0
      %2381 = vmatmul.mubr.bf16.gmra.mrb[0].mxu0 %v2258
      %v2382 = vpop.f32.mrb[0].mxu0
      %v2383 = vadd.f32 %v2319, %v2382
      %v2384 = vpop.f32.mrb[0].mxu0
      %v2385 = vpop.f32.mrb[0].mxu0
      %v2386 = vpop.f32.mrb[0].mxu0
      %2387 = vdwg.mxu0
      %v2388 = vmax.f32 %v2359, 0.0
      %v2389 = vmax.f32 %v2362, 0.0
      %v2390 = vmax.f32 %v2367, 0.0
      %v2391 = vmax.f32 %v2370, 0.0
      %v2392 = vmax.f32 %v2375, 0.0
      %v2393 = vmax.f32 %v2378, 0.0
      %v2394 = vmax.f32 %v2383, 0.0
      %v2395 = vpack.c.bf16 %v2389, %v2388
      %v2396 = vpack.c.bf16 %v2391, %v2390
      %v2397 = vpack.c.bf16 %v2393, %v2392
      %v2398 = vpack.c.bf16 %v2394, %v2394
      %v2403 = vunpack.c.l.b16 %v2395
      %v2404 = vunpack.c.h.b16 %v2395
      %v2405 = vunpack.c.l.b16 %v2396
      %v2406 = vunpack.c.h.b16 %v2396
      %v2407 = vunpack.c.l.b16 %v2397
      %v2408 = vunpack.c.h.b16 %v2397
      %v2409 = vunpack.c.l.b16 %v2398
      %v2410 = vpack.c.b16 %v2403, %v2403
      %v2411 = vpack.c.b16 %v2404, %v2404
      %v2412 = vpack.c.b16 %v2405, %v2405
      %v2413 = vpack.c.b16 %v2406, %v2406
      %v2414 = vpack.c.b16 %v2407, %v2407
      %v2415 = vpack.c.b16 %v2408, %v2408
      %v2416 = vpack.c.b16 %v2409, %v2409
      %2424 = vst.msk [vmem:[#allocation2] sm:$0xf] %vm202, %v2410
      %2425 = vst.msk [vmem:[#allocation2 + $0x4] sm:$0xf] %vm202, %v2411
      %2426 = vst.msk [vmem:[#allocation2 + $0x8] sm:$0xf] %vm202, %v2412
      %2427 = vst.msk [vmem:[#allocation2 + $0xc] sm:$0xf] %vm202, %v2413
      %2428 = vst.msk [vmem:[#allocation2 + $0x10] sm:$0xf] %vm202, %v2414
      %2429 = vst.msk [vmem:[#allocation2 + $0x14] sm:$0xf] %vm202, %v2415
      %2430 = vst.msk [vmem:[#allocation2 + $0x18] sm:$0xf] %vm202, %v2416
      %v2431 = vld [vmem:[#allocation2] sm:$0xf]
      %v2432 = vld [vmem:[#allocation2 + $0x4] sm:$0xf]
      %v2433 = vld [vmem:[#allocation2 + $0x8] sm:$0xf]
      %v2434 = vld [vmem:[#allocation2 + $0xc] sm:$0xf]
      %v2435 = vld [vmem:[#allocation2 + $0x10] sm:$0xf]
      %v2436 = vld [vmem:[#allocation2 + $0x14] sm:$0xf]
      %v2437 = vld [vmem:[#allocation2 + $0x18] sm:$0xf]
      %2438 = vst.msk [vmem:[#allocation4] sm:$0xf] %vm202, %v2431
      %2439 = vst.msk [vmem:[#allocation4 + $0xc] sm:$0xf] %vm202, %v2432
      %2440 = vst.msk [vmem:[#allocation4 + $0x18] sm:$0xf] %vm202, %v2433
      %2441 = vst.msk [vmem:[#allocation4 + $0x24] sm:$0xf] %vm202, %v2434
      %2442 = vst.msk [vmem:[#allocation4 + $0x30] sm:$0xf] %vm202, %v2435
      %2443 = vst.msk [vmem:[#allocation4 + $0x3c] sm:$0xf] %vm202, %v2436
      %2444 = vst.msk [vmem:[#allocation4 + $0x48] sm:$0xf] %vm202, %v2437
      %v2445 = vld [vmem:[#allocation2] sm:$0xf]
      %v2446 = vld [vmem:[#allocation2 + $0x4] sm:$0xf]
      %v2447 = vld [vmem:[#allocation2 + $0x8] sm:$0xf]
      %v2448 = vld [vmem:[#allocation2 + $0xc] sm:$0xf]
      %v2449 = vld [vmem:[#allocation2 + $0x10] sm:$0xf]
      %v2450 = vld [vmem:[#allocation2 + $0x14] sm:$0xf]
      %v2451 = vld [vmem:[#allocation2 + $0x18] sm:$0xf]
      %v2452 = vld [vmem:[#allocation2 + $0x1c] sm:$0x1]
      %v2454 = vshrl.u32 %v2445, 16
      %v2456 = vrot.slane %v2454, 4
      %v2457 = vshll.u32 %v2445, 16
      %v2459 = vrot.slane %v2457, 5
      %v2460 = vor.u32 %v2456, %v2459
      %v2461 = vrot.slane %v2460, 4
      %v2463 = vshll.u32 %v2446, 16
      %v2465 = vrot.slane %v2463, 5
      %v2466 = vsel %vm436, %v2461, %v2465
      %v2467 = vshrl.u32 %v2446, 16
      %v2469 = vrot.slane %v2467, 4
      %v2470 = vor.u32 %v2469, %v2465
      %v2471 = vrot.slane %v2470, 4
      %v2473 = vshll.u32 %v2447, 16
      %v2475 = vrot.slane %v2473, 5
      %v2476 = vsel %vm436, %v2471, %v2475
      %v2477 = vshrl.u32 %v2447, 16
      %v2479 = vrot.slane %v2477, 4
      %v2480 = vor.u32 %v2479, %v2475
      %v2481 = vrot.slane %v2480, 4
      %v2483 = vshll.u32 %v2448, 16
      %v2485 = vrot.slane %v2483, 5
      %v2486 = vsel %vm436, %v2481, %v2485
      %v2487 = vshrl.u32 %v2448, 16
      %v2489 = vrot.slane %v2487, 4
      %v2490 = vor.u32 %v2489, %v2485
      %v2491 = vrot.slane %v2490, 4
      %v2493 = vshll.u32 %v2449, 16
      %v2495 = vrot.slane %v2493, 5
      %v2496 = vsel %vm436, %v2491, %v2495
      %v2497 = vshrl.u32 %v2449, 16
      %v2499 = vrot.slane %v2497, 4
      %v2500 = vor.u32 %v2499, %v2495
      %v2501 = vrot.slane %v2500, 4
      %v2503 = vshll.u32 %v2450, 16
      %v2505 = vrot.slane %v2503, 5
      %v2506 = vsel %vm436, %v2501, %v2505
      %v2507 = vshrl.u32 %v2450, 16
      %v2509 = vrot.slane %v2507, 4
      %v2510 = vor.u32 %v2509, %v2505
      %v2511 = vrot.slane %v2510, 4
      %v2513 = vshll.u32 %v2451, 16
      %v2515 = vrot.slane %v2513, 5
      %v2516 = vsel %vm436, %v2511, %v2515
      %v2517 = vshrl.u32 %v2451, 16
      %v2519 = vrot.slane %v2517, 4
      %v2520 = vor.u32 %v2519, %v2515
      %v2521 = vrot.slane %v2520, 4
      %v2523 = vshll.u32 %v2452, 16
      %v2525 = vrot.slane %v2523, 5
      %v2526 = vsel %vm436, %v2521, %v2525
      %2527 = vrot.lane.b32.xlu0 %v2466, 32
      %v2528 = vpop.permute.xlu0 %2527
      %2529 = vrot.lane.b32.xlu0 %v2476, 32
      %v2530 = vpop.permute.xlu0 %2529
      %2531 = vrot.lane.b32.xlu0 %v2486, 32
      %v2532 = vpop.permute.xlu0 %2531
      %2533 = vrot.lane.b32.xlu0 %v2496, 32
      %v2534 = vpop.permute.xlu0 %2533
      %2535 = vrot.lane.b32.xlu0 %v2506, 32
      %v2536 = vpop.permute.xlu0 %2535
      %2537 = vrot.lane.b32.xlu0 %v2516, 32
      %v2538 = vpop.permute.xlu0 %2537
      %2539 = vrot.lane.b32.xlu0 %v2526, 32
      %v2540 = vpop.permute.xlu0 %2539
      %2548 = vst.msk [vmem:[#allocation4] sm:$0xf] %vm532, %v2528
      %2549 = vst.msk [vmem:[#allocation4 + $0xc] sm:$0xf] %vm532, %v2530
      %2550 = vst.msk [vmem:[#allocation4 + $0x18] sm:$0xf] %vm532, %v2532
      %2551 = vst.msk [vmem:[#allocation4 + $0x24] sm:$0xf] %vm532, %v2534
      %2552 = vst.msk [vmem:[#allocation4 + $0x30] sm:$0xf] %vm532, %v2536
      %2553 = vst.msk [vmem:[#allocation4 + $0x3c] sm:$0xf] %vm532, %v2538
      %2554 = vst.msk [vmem:[#allocation4 + $0x48] sm:$0xf] %vm532, %v2540
      %v2555 = vld [vmem:[#allocation2] sm:$0xe]
      %v2556 = vld [vmem:[#allocation2 + $0x4] sm:$0xf]
      %v2557 = vld [vmem:[#allocation2 + $0x8] sm:$0xf]
      %v2558 = vld [vmem:[#allocation2 + $0xc] sm:$0xf]
      %v2559 = vld [vmem:[#allocation2 + $0x10] sm:$0xf]
      %v2560 = vld [vmem:[#allocation2 + $0x14] sm:$0xf]
      %v2561 = vld [vmem:[#allocation2 + $0x18] sm:$0xf]
      %v2562 = vld [vmem:[#allocation2 + $0x1c] sm:$0x1]
      %v2571 = vrot.slane %v2555, 5
      %v2572 = vrot.slane %v2571, 4
      %v2573 = vrot.slane %v2556, 5
      %v2574 = vsel %vm558, %v2572, %v2573
      %v2575 = vrot.slane %v2573, 4
      %v2576 = vrot.slane %v2557, 5
      %v2577 = vsel %vm558, %v2575, %v2576
      %v2578 = vrot.slane %v2576, 4
      %v2579 = vrot.slane %v2558, 5
      %v2580 = vsel %vm558, %v2578, %v2579
      %v2581 = vrot.slane %v2579, 4
      %v2582 = vrot.slane %v2559, 5
      %v2583 = vsel %vm558, %v2581, %v2582
      %v2584 = vrot.slane %v2582, 4
      %v2585 = vrot.slane %v2560, 5
      %v2586 = vsel %vm558, %v2584, %v2585
      %v2587 = vrot.slane %v2585, 4
      %v2588 = vrot.slane %v2561, 5
      %v2589 = vsel %vm558, %v2587, %v2588
      %v2590 = vrot.slane %v2588, 4
      %v2591 = vrot.slane %v2562, 5
      %v2592 = vsel %vm558, %v2590, %v2591
      %2593 = vrot.lane.b32.xlu0 %v2574, 64
      %v2594 = vpop.permute.xlu0 %2593
      %2595 = vrot.lane.b32.xlu0 %v2577, 64
      %v2596 = vpop.permute.xlu0 %2595
      %2597 = vrot.lane.b32.xlu0 %v2580, 64
      %v2598 = vpop.permute.xlu0 %2597
      %2599 = vrot.lane.b32.xlu0 %v2583, 64
      %v2600 = vpop.permute.xlu0 %2599
      %2601 = vrot.lane.b32.xlu0 %v2586, 64
      %v2602 = vpop.permute.xlu0 %2601
      %2603 = vrot.lane.b32.xlu0 %v2589, 64
      %v2604 = vpop.permute.xlu0 %2603
      %2605 = vrot.lane.b32.xlu0 %v2592, 64
      %v2606 = vpop.permute.xlu0 %2605
      %2614 = vst.msk [vmem:[#allocation4] sm:$0xf] %vm602, %v2594
      %2615 = vst.msk [vmem:[#allocation4 + $0xc] sm:$0xf] %vm602, %v2596
      %2616 = vst.msk [vmem:[#allocation4 + $0x18] sm:$0xf] %vm602, %v2598
      %2617 = vst.msk [vmem:[#allocation4 + $0x24] sm:$0xf] %vm602, %v2600
      %2618 = vst.msk [vmem:[#allocation4 + $0x30] sm:$0xf] %vm602, %v2602
      %2619 = vst.msk [vmem:[#allocation4 + $0x3c] sm:$0xf] %vm602, %v2604
      %2620 = vst.msk [vmem:[#allocation4 + $0x48] sm:$0xf] %vm602, %v2606
      %v2621 = vld [vmem:[#allocation2] sm:$0x8]
      %v2622 = vld [vmem:[#allocation2 + $0x4] sm:$0xf]
      %v2623 = vld [vmem:[#allocation2 + $0x8] sm:$0xf]
      %v2624 = vld [vmem:[#allocation2 + $0xc] sm:$0xf]
      %v2625 = vld [vmem:[#allocation2 + $0x10] sm:$0xf]
      %v2626 = vld [vmem:[#allocation2 + $0x14] sm:$0xf]
      %v2627 = vld [vmem:[#allocation2 + $0x18] sm:$0xf]
      %v2628 = vld [vmem:[#allocation2 + $0x1c] sm:$0xf]
      %v2630 = vshrl.u32 %v2621, 16
      %v2632 = vrot.slane %v2630, 7
      %v2633 = vrot.slane %v2632, 4
      %v2635 = vshrl.u32 %v2622, 16
      %v2637 = vrot.slane %v2635, 7
      %v2638 = vshll.u32 %v2622, 16
      %v2640 = vor.u32 %v2637, %v2638
      %v2641 = vsel %vm620, %v2633, %v2640
      %v2642 = vrot.slane %v2637, 4
      %v2644 = vshrl.u32 %v2623, 16
      %v2646 = vrot.slane %v2644, 7
      %v2647 = vshll.u32 %v2623, 16
      %v2649 = vor.u32 %v2646, %v2647
      %v2650 = vsel %vm620, %v2642, %v2649
      %v2651 = vrot.slane %v2646, 4
      %v2653 = vshrl.u32 %v2624, 16
      %v2655 = vrot.slane %v2653, 7
      %v2656 = vshll.u32 %v2624, 16
      %v2658 = vor.u32 %v2655, %v2656
      %v2659 = vsel %vm620, %v2651, %v2658
      %v2660 = vrot.slane %v2655, 4
      %v2662 = vshrl.u32 %v2625, 16
      %v2664 = vrot.slane %v2662, 7
      %v2665 = vshll.u32 %v2625, 16
      %v2667 = vor.u32 %v2664, %v2665
      %v2668 = vsel %vm620, %v2660, %v2667
      %v2669 = vrot.slane %v2664, 4
      %v2671 = vshrl.u32 %v2626, 16
      %v2673 = vrot.slane %v2671, 7
      %v2674 = vshll.u32 %v2626, 16
      %v2676 = vor.u32 %v2673, %v2674
      %v2677 = vsel %vm620, %v2669, %v2676
      %v2678 = vrot.slane %v2673, 4
      %v2680 = vshrl.u32 %v2627, 16
      %v2682 = vrot.slane %v2680, 7
      %v2683 = vshll.u32 %v2627, 16
      %v2685 = vor.u32 %v2682, %v2683
      %v2686 = vsel %vm620, %v2678, %v2685
      %v2687 = vrot.slane %v2682, 4
      %v2689 = vshrl.u32 %v2628, 16
      %v2691 = vrot.slane %v2689, 7
      %v2692 = vshll.u32 %v2628, 16
      %v2694 = vor.u32 %v2691, %v2692
      %v2695 = vsel %vm620, %v2687, %v2694
      %2696 = vrot.lane.b32.xlu0 %v2641, 96
      %v2697 = vpop.permute.xlu0 %2696
      %2698 = vrot.lane.b32.xlu0 %v2650, 96
      %v2699 = vpop.permute.xlu0 %2698
      %2700 = vrot.lane.b32.xlu0 %v2659, 96
      %v2701 = vpop.permute.xlu0 %2700
      %2702 = vrot.lane.b32.xlu0 %v2668, 96
      %v2703 = vpop.permute.xlu0 %2702
      %2704 = vrot.lane.b32.xlu0 %v2677, 96
      %v2705 = vpop.permute.xlu0 %2704
      %2706 = vrot.lane.b32.xlu0 %v2686, 96
      %v2707 = vpop.permute.xlu0 %2706
      %2708 = vrot.lane.b32.xlu0 %v2695, 96
      %v2709 = vpop.permute.xlu0 %2708
      %2717 = vst.msk [vmem:[#allocation4] sm:$0xf] %vm709, %v2697
      %2718 = vst.msk [vmem:[#allocation4 + $0xc] sm:$0xf] %vm709, %v2699
      %2719 = vst.msk [vmem:[#allocation4 + $0x18] sm:$0xf] %vm709, %v2701
      %2720 = vst.msk [vmem:[#allocation4 + $0x24] sm:$0xf] %vm709, %v2703
      %2721 = vst.msk [vmem:[#allocation4 + $0x30] sm:$0xf] %vm709, %v2705
      %2722 = vst.msk [vmem:[#allocation4 + $0x3c] sm:$0xf] %vm709, %v2707
      %2723 = vst.msk [vmem:[#allocation4 + $0x48] sm:$0xf] %vm709, %v2709
      %v2724 = vld [vmem:[#allocation2 + $0x4] sm:$0xf]
      %v2725 = vld [vmem:[#allocation2 + $0x8] sm:$0xf]
      %v2726 = vld [vmem:[#allocation2 + $0xc] sm:$0xf]
      %v2727 = vld [vmem:[#allocation2 + $0x10] sm:$0xf]
      %v2728 = vld [vmem:[#allocation2 + $0x14] sm:$0xf]
      %v2729 = vld [vmem:[#allocation2 + $0x18] sm:$0xf]
      %v2730 = vld [vmem:[#allocation2 + $0x1c] sm:$0xf]
      %2731 = vst.msk [vmem:[#allocation4 + $0x4] sm:$0xf] %vm202, %v2724
      %2732 = vst.msk [vmem:[#allocation4 + $0x10] sm:$0xf] %vm202, %v2725
      %2733 = vst.msk [vmem:[#allocation4 + $0x1c] sm:$0xf] %vm202, %v2726
      %2734 = vst.msk [vmem:[#allocation4 + $0x28] sm:$0xf] %vm202, %v2727
      %2735 = vst.msk [vmem:[#allocation4 + $0x34] sm:$0xf] %vm202, %v2728
      %2736 = vst.msk [vmem:[#allocation4 + $0x40] sm:$0xf] %vm202, %v2729
      %2737 = vst.msk [vmem:[#allocation4 + $0x4c] sm:$0xf] %vm202, %v2730
      %v2738 = vld [vmem:[#allocation2 + $0x4] sm:$0xf]
      %v2739 = vld [vmem:[#allocation2 + $0x8] sm:$0xf]
      %v2740 = vld [vmem:[#allocation2 + $0xc] sm:$0xf]
      %v2741 = vld [vmem:[#allocation2 + $0x10] sm:$0xf]
      %v2742 = vld [vmem:[#allocation2 + $0x14] sm:$0xf]
      %v2743 = vld [vmem:[#allocation2 + $0x18] sm:$0xf]
      %v2744 = vld [vmem:[#allocation2 + $0x1c] sm:$0xf]
      %v2745 = vld [vmem:[#allocation2 + $0x20] sm:$0x1]
      %v2747 = vshrl.u32 %v2738, 16
      %v2749 = vrot.slane %v2747, 4
      %v2750 = vshll.u32 %v2738, 16
      %v2752 = vrot.slane %v2750, 5
      %v2753 = vor.u32 %v2749, %v2752
      %v2754 = vrot.slane %v2753, 4
      %v2756 = vshll.u32 %v2739, 16
      %v2758 = vrot.slane %v2756, 5
      %v2759 = vsel %vm436, %v2754, %v2758
      %v2760 = vshrl.u32 %v2739, 16
      %v2762 = vrot.slane %v2760, 4
      %v2763 = vor.u32 %v2762, %v2758
      %v2764 = vrot.slane %v2763, 4
      %v2766 = vshll.u32 %v2740, 16
      %v2768 = vrot.slane %v2766, 5
      %v2769 = vsel %vm436, %v2764, %v2768
      %v2770 = vshrl.u32 %v2740, 16
      %v2772 = vrot.slane %v2770, 4
      %v2773 = vor.u32 %v2772, %v2768
      %v2774 = vrot.slane %v2773, 4
      %v2776 = vshll.u32 %v2741, 16
      %v2778 = vrot.slane %v2776, 5
      %v2779 = vsel %vm436, %v2774, %v2778
      %v2780 = vshrl.u32 %v2741, 16
      %v2782 = vrot.slane %v2780, 4
      %v2783 = vor.u32 %v2782, %v2778
      %v2784 = vrot.slane %v2783, 4
      %v2786 = vshll.u32 %v2742, 16
      %v2788 = vrot.slane %v2786, 5
      %v2789 = vsel %vm436, %v2784, %v2788
      %v2790 = vshrl.u32 %v2742, 16
      %v2792 = vrot.slane %v2790, 4
      %v2793 = vor.u32 %v2792, %v2788
      %v2794 = vrot.slane %v2793, 4
      %v2796 = vshll.u32 %v2743, 16
      %v2798 = vrot.slane %v2796, 5
      %v2799 = vsel %vm436, %v2794, %v2798
      %v2800 = vshrl.u32 %v2743, 16
      %v2802 = vrot.slane %v2800, 4
      %v2803 = vor.u32 %v2802, %v2798
      %v2804 = vrot.slane %v2803, 4
      %v2806 = vshll.u32 %v2744, 16
      %v2808 = vrot.slane %v2806, 5
      %v2809 = vsel %vm436, %v2804, %v2808
      %v2810 = vshrl.u32 %v2744, 16
      %v2812 = vrot.slane %v2810, 4
      %v2813 = vor.u32 %v2812, %v2808
      %v2814 = vrot.slane %v2813, 4
      %v2816 = vshll.u32 %v2745, 16
      %v2818 = vrot.slane %v2816, 5
      %v2819 = vsel %vm436, %v2814, %v2818
      %2820 = vrot.lane.b32.xlu0 %v2759, 32
      %v2821 = vpop.permute.xlu0 %2820
      %2822 = vrot.lane.b32.xlu0 %v2769, 32
      %v2823 = vpop.permute.xlu0 %2822
      %2824 = vrot.lane.b32.xlu0 %v2779, 32
      %v2825 = vpop.permute.xlu0 %2824
      %2826 = vrot.lane.b32.xlu0 %v2789, 32
      %v2827 = vpop.permute.xlu0 %2826
      %2828 = vrot.lane.b32.xlu0 %v2799, 32
      %v2829 = vpop.permute.xlu0 %2828
      %2830 = vrot.lane.b32.xlu0 %v2809, 32
      %v2831 = vpop.permute.xlu0 %2830
      %2832 = vrot.lane.b32.xlu0 %v2819, 32
      %v2833 = vpop.permute.xlu0 %2832
      %2841 = vst.msk [vmem:[#allocation4 + $0x4] sm:$0xf] %vm532, %v2821
      %2842 = vst.msk [vmem:[#allocation4 + $0x10] sm:$0xf] %vm532, %v2823
      %2843 = vst.msk [vmem:[#allocation4 + $0x1c] sm:$0xf] %vm532, %v2825
      %2844 = vst.msk [vmem:[#allocation4 + $0x28] sm:$0xf] %vm532, %v2827
      %2845 = vst.msk [vmem:[#allocation4 + $0x34] sm:$0xf] %vm532, %v2829
      %2846 = vst.msk [vmem:[#allocation4 + $0x40] sm:$0xf] %vm532, %v2831
      %2847 = vst.msk [vmem:[#allocation4 + $0x4c] sm:$0xf] %vm532, %v2833
      %v2848 = vld [vmem:[#allocation2 + $0x4] sm:$0x8]
      %v2849 = vld [vmem:[#allocation2 + $0x8] sm:$0xf]
      %v2850 = vld [vmem:[#allocation2 + $0xc] sm:$0xf]
      %v2851 = vld [vmem:[#allocation2 + $0x10] sm:$0xf]
      %v2852 = vld [vmem:[#allocation2 + $0x14] sm:$0xf]
      %v2853 = vld [vmem:[#allocation2 + $0x18] sm:$0xf]
      %v2854 = vld [vmem:[#allocation2 + $0x1c] sm:$0xf]
      %v2855 = vld [vmem:[#allocation2 + $0x20] sm:$0x7]
      %v2864 = vrot.slane %v2848, 7
      %v2865 = vrot.slane %v2864, 4
      %v2866 = vrot.slane %v2849, 7
      %v2867 = vsel %vm859, %v2865, %v2866
      %v2868 = vrot.slane %v2866, 4
      %v2869 = vrot.slane %v2850, 7
      %v2870 = vsel %vm859, %v2868, %v2869
      %v2871 = vrot.slane %v2869, 4
      %v2872 = vrot.slane %v2851, 7
      %v2873 = vsel %vm859, %v2871, %v2872
      %v2874 = vrot.slane %v2872, 4
      %v2875 = vrot.slane %v2852, 7
      %v2876 = vsel %vm859, %v2874, %v2875
      %v2877 = vrot.slane %v2875, 4
      %v2878 = vrot.slane %v2853, 7
      %v2879 = vsel %vm859, %v2877, %v2878
      %v2880 = vrot.slane %v2878, 4
      %v2881 = vrot.slane %v2854, 7
      %v2882 = vsel %vm859, %v2880, %v2881
      %v2883 = vrot.slane %v2881, 4
      %v2884 = vrot.slane %v2855, 7
      %v2885 = vsel %vm859, %v2883, %v2884
      %2886 = vrot.lane.b32.xlu0 %v2867, 64
      %v2887 = vpop.permute.xlu0 %2886
      %2888 = vrot.lane.b32.xlu0 %v2870, 64
      %v2889 = vpop.permute.xlu0 %2888
      %2890 = vrot.lane.b32.xlu0 %v2873, 64
      %v2891 = vpop.permute.xlu0 %2890
      %2892 = vrot.lane.b32.xlu0 %v2876, 64
      %v2893 = vpop.permute.xlu0 %2892
      %2894 = vrot.lane.b32.xlu0 %v2879, 64
      %v2895 = vpop.permute.xlu0 %2894
      %2896 = vrot.lane.b32.xlu0 %v2882, 64
      %v2897 = vpop.permute.xlu0 %2896
      %2898 = vrot.lane.b32.xlu0 %v2885, 64
      %v2899 = vpop.permute.xlu0 %2898
      %2907 = vst.msk [vmem:[#allocation4 + $0x4] sm:$0xf] %vm602, %v2887
      %2908 = vst.msk [vmem:[#allocation4 + $0x10] sm:$0xf] %vm602, %v2889
      %2909 = vst.msk [vmem:[#allocation4 + $0x1c] sm:$0xf] %vm602, %v2891
      %2910 = vst.msk [vmem:[#allocation4 + $0x28] sm:$0xf] %vm602, %v2893
      %2911 = vst.msk [vmem:[#allocation4 + $0x34] sm:$0xf] %vm602, %v2895
      %2912 = vst.msk [vmem:[#allocation4 + $0x40] sm:$0xf] %vm602, %v2897
      %2913 = vst.msk [vmem:[#allocation4 + $0x4c] sm:$0xf] %vm602, %v2899
      %v2914 = vld [vmem:[#allocation2 + $0x4] sm:$0x8]
      %v2915 = vld [vmem:[#allocation2 + $0x8] sm:$0xf]
      %v2916 = vld [vmem:[#allocation2 + $0xc] sm:$0xf]
      %v2917 = vld [vmem:[#allocation2 + $0x10] sm:$0xf]
      %v2918 = vld [vmem:[#allocation2 + $0x14] sm:$0xf]
      %v2919 = vld [vmem:[#allocation2 + $0x18] sm:$0xf]
      %v2920 = vld [vmem:[#allocation2 + $0x1c] sm:$0xf]
      %v2921 = vld [vmem:[#allocation2 + $0x20] sm:$0xf]
      %v2923 = vshrl.u32 %v2914, 16
      %v2925 = vrot.slane %v2923, 7
      %v2926 = vrot.slane %v2925, 4
      %v2928 = vshrl.u32 %v2915, 16
      %v2930 = vrot.slane %v2928, 7
      %v2931 = vshll.u32 %v2915, 16
      %v2933 = vor.u32 %v2930, %v2931
      %v2934 = vsel %vm620, %v2926, %v2933
      %v2935 = vrot.slane %v2930, 4
      %v2937 = vshrl.u32 %v2916, 16
      %v2939 = vrot.slane %v2937, 7
      %v2940 = vshll.u32 %v2916, 16
      %v2942 = vor.u32 %v2939, %v2940
      %v2943 = vsel %vm620, %v2935, %v2942
      %v2944 = vrot.slane %v2939, 4
      %v2946 = vshrl.u32 %v2917, 16
      %v2948 = vrot.slane %v2946, 7
      %v2949 = vshll.u32 %v2917, 16
      %v2951 = vor.u32 %v2948, %v2949
      %v2952 = vsel %vm620, %v2944, %v2951
      %v2953 = vrot.slane %v2948, 4
      %v2955 = vshrl.u32 %v2918, 16
      %v2957 = vrot.slane %v2955, 7
      %v2958 = vshll.u32 %v2918, 16
      %v2960 = vor.u32 %v2957, %v2958
      %v2961 = vsel %vm620, %v2953, %v2960
      %v2962 = vrot.slane %v2957, 4
      %v2964 = vshrl.u32 %v2919, 16
      %v2966 = vrot.slane %v2964, 7
      %v2967 = vshll.u32 %v2919, 16
      %v2969 = vor.u32 %v2966, %v2967
      %v2970 = vsel %vm620, %v2962, %v2969
      %v2971 = vrot.slane %v2966, 4
      %v2973 = vshrl.u32 %v2920, 16
      %v2975 = vrot.slane %v2973, 7
      %v2976 = vshll.u32 %v2920, 16
      %v2978 = vor.u32 %v2975, %v2976
      %v2979 = vsel %vm620, %v2971, %v2978
      %v2980 = vrot.slane %v2975, 4
      %v2982 = vshrl.u32 %v2921, 16
      %v2984 = vrot.slane %v2982, 7
      %v2985 = vshll.u32 %v2921, 16
      %v2987 = vor.u32 %v2984, %v2985
      %v2988 = vsel %vm620, %v2980, %v2987
      %2989 = vrot.lane.b32.xlu0 %v2934, 96
      %v2990 = vpop.permute.xlu0 %2989
      %2991 = vrot.lane.b32.xlu0 %v2943, 96
      %v2992 = vpop.permute.xlu0 %2991
      %2993 = vrot.lane.b32.xlu0 %v2952, 96
      %v2994 = vpop.permute.xlu0 %2993
      %2995 = vrot.lane.b32.xlu0 %v2961, 96
      %v2996 = vpop.permute.xlu0 %2995
      %2997 = vrot.lane.b32.xlu0 %v2970, 96
      %v2998 = vpop.permute.xlu0 %2997
      %2999 = vrot.lane.b32.xlu0 %v2979, 96
      %v3000 = vpop.permute.xlu0 %2999
      %3001 = vrot.lane.b32.xlu0 %v2988, 96
      %v3002 = vpop.permute.xlu0 %3001
      %3010 = vst.msk [vmem:[#allocation4 + $0x4] sm:$0xf] %vm709, %v2990
      %3011 = vst.msk [vmem:[#allocation4 + $0x10] sm:$0xf] %vm709, %v2992
      %3012 = vst.msk [vmem:[#allocation4 + $0x1c] sm:$0xf] %vm709, %v2994
      %3013 = vst.msk [vmem:[#allocation4 + $0x28] sm:$0xf] %vm709, %v2996
      %3014 = vst.msk [vmem:[#allocation4 + $0x34] sm:$0xf] %vm709, %v2998
      %3015 = vst.msk [vmem:[#allocation4 + $0x40] sm:$0xf] %vm709, %v3000
      %3016 = vst.msk [vmem:[#allocation4 + $0x4c] sm:$0xf] %vm709, %v3002
      %v3017 = vld [vmem:[#allocation2 + $0x8] sm:$0xf]
      %v3018 = vld [vmem:[#allocation2 + $0xc] sm:$0xf]
      %v3019 = vld [vmem:[#allocation2 + $0x10] sm:$0xf]
      %v3020 = vld [vmem:[#allocation2 + $0x14] sm:$0xf]
      %v3021 = vld [vmem:[#allocation2 + $0x18] sm:$0xf]
      %v3022 = vld [vmem:[#allocation2 + $0x1c] sm:$0xf]
      %v3023 = vld [vmem:[#allocation2 + $0x20] sm:$0xf]
      %3024 = vst.msk [vmem:[#allocation4 + $0x8] sm:$0xf] %vm202, %v3017
      %3025 = vst.msk [vmem:[#allocation4 + $0x14] sm:$0xf] %vm202, %v3018
      %3026 = vst.msk [vmem:[#allocation4 + $0x20] sm:$0xf] %vm202, %v3019
      %3027 = vst.msk [vmem:[#allocation4 + $0x2c] sm:$0xf] %vm202, %v3020
      %3028 = vst.msk [vmem:[#allocation4 + $0x38] sm:$0xf] %vm202, %v3021
      %3029 = vst.msk [vmem:[#allocation4 + $0x44] sm:$0xf] %vm202, %v3022
      %3030 = vst.msk [vmem:[#allocation4 + $0x50] sm:$0xf] %vm202, %v3023
      %v3031 = vld [vmem:[#allocation4] sm:$0xff]
      %v3032 = vld [vmem:[#allocation4 + $0x8] sm:$0xf]
      %v3033 = vld [vmem:[#allocation4 + $0xc] sm:$0xff]
      %v3034 = vld [vmem:[#allocation4 + $0x14] sm:$0xf]
      %v3035 = vld [vmem:[#allocation4 + $0x18] sm:$0xff]
      %v3036 = vld [vmem:[#allocation4 + $0x20] sm:$0xf]
      %v3037 = vld [vmem:[#allocation4 + $0x24] sm:$0xff]
      %v3038 = vld [vmem:[#allocation4 + $0x2c] sm:$0xf]
      %v3039 = vld [vmem:[#allocation4 + $0x30] sm:$0xff]
      %v3040 = vld [vmem:[#allocation4 + $0x38] sm:$0xf]
      %v3041 = vld [vmem:[#allocation4 + $0x3c] sm:$0xff]
      %v3042 = vld [vmem:[#allocation4 + $0x44] sm:$0xf]
      %v3043 = vld [vmem:[#allocation4 + $0x48] sm:$0xff]
      %v3044 = vld [vmem:[#allocation4 + $0x50] sm:$0xf]
      %s3045 = scalar_lea.vmem %s2, 288
      %v3046 = vld [vmem:[%s3045] sm:$0xf]
      %v3047 = vld [vmem:[%s3045 + $0x4] sm:$0xf]
      %v3048 = vld [vmem:[%s3045 + $0x8] sm:$0xf]
      %v3049 = vld [vmem:[%s3045 + $0xc] sm:$0xf]
      %v3050 = vld [vmem:[%s3045 + $0x10] sm:$0xf]
      %v3051 = vld [vmem:[%s3045 + $0x14] sm:$0xf]
      %v3052 = vld [vmem:[%s3045 + $0x18] sm:$0xf]
      %v3053 = vld [vmem:[%s3045 + $0x1c] sm:$0xf]
      %v3054 = vld [vmem:[%s3045 + $0x20] sm:$0xf]
      %v3055 = vld [vmem:[%s3045 + $0x24] sm:$0xf]
      %v3056 = vld [vmem:[%s3045 + $0x28] sm:$0xf]
      %v3057 = vld [vmem:[%s3045 + $0x2c] sm:$0xf]
      %v3058 = vld [vmem:[%s3045 + $0x30] sm:$0xf]
      %v3059 = vld [vmem:[%s3045 + $0x34] sm:$0xf]
      %v3060 = vld [vmem:[%s3045 + $0x38] sm:$0xf]
      %v3061 = vld [vmem:[%s3045 + $0x3c] sm:$0xf]
      %v3062 = vld [vmem:[%s3045 + $0x40] sm:$0xf]
      %v3063 = vld [vmem:[%s3045 + $0x44] sm:$0xf]
      %v3064 = vld [vmem:[%s3045 + $0x48] sm:$0xf]
      %v3065 = vld [vmem:[%s3045 + $0x4c] sm:$0xf]
      %v3066 = vld [vmem:[%s3045 + $0x50] sm:$0xf]
      %v3067 = vld [vmem:[%s3045 + $0x54] sm:$0xf]
      %v3068 = vld [vmem:[%s3045 + $0x58] sm:$0xf]
      %v3069 = vld [vmem:[%s3045 + $0x5c] sm:$0xf]
      %v3070 = vld [vmem:[%s3045 + $0x60] sm:$0xf]
      %v3071 = vld [vmem:[%s3045 + $0x64] sm:$0xf]
      %v3072 = vld [vmem:[%s3045 + $0x68] sm:$0xf]
      %v3073 = vld [vmem:[%s3045 + $0x6c] sm:$0xf]
      %v3074 = vld [vmem:[%s3045 + $0x70] sm:$0xf]
      %v3075 = vld [vmem:[%s3045 + $0x74] sm:$0xf]
      %v3076 = vld [vmem:[%s3045 + $0x78] sm:$0xf]
      %v3077 = vld [vmem:[%s3045 + $0x7c] sm:$0xf]
      %v3078 = vld [vmem:[%s3045 + $0x80] sm:$0xf]
      %v3079 = vld [vmem:[%s3045 + $0x84] sm:$0xf]
      %v3080 = vld [vmem:[%s3045 + $0x88] sm:$0xf]
      %v3081 = vld [vmem:[%s3045 + $0x8c] sm:$0xf]
      %v3082 = vld [vmem:[%s3 + $0x3] sm:$0x1]
      %v3083 = vlaneseq
      %v3084 = vshrl.u32 %v3083, 7
      %v3085 = vsub.s32 0, %v3084
      %v3086 = vrot.slane %v3082, %v3085
      %v3101 = vunpack.c.l.b16 %v3031
      %v3102 = vunpack.c.h.b16 %v3031
      %v3103 = vunpack.c.l.b16 %v3032
      %v3104 = vunpack.c.l.b16 %v3033
      %v3105 = vunpack.c.h.b16 %v3033
      %v3106 = vunpack.c.l.b16 %v3034
      %v3107 = vunpack.c.l.b16 %v3035
      %v3108 = vunpack.c.h.b16 %v3035
      %v3109 = vunpack.c.l.b16 %v3036
      %v3110 = vunpack.c.l.b16 %v3037
      %v3111 = vunpack.c.h.b16 %v3037
      %v3112 = vunpack.c.l.b16 %v3038
      %v3113 = vunpack.c.l.b16 %v3039
      %v3114 = vunpack.c.h.b16 %v3039
      %v3115 = vunpack.c.l.b16 %v3040
      %v3116 = vunpack.c.l.b16 %v3041
      %v3117 = vunpack.c.h.b16 %v3041
      %v3118 = vunpack.c.l.b16 %v3042
      %v3119 = vunpack.c.l.b16 %v3043
      %v3120 = vunpack.c.h.b16 %v3043
      %v3121 = vunpack.c.l.b16 %v3044
      %v3122 = vpack.c.b16 %v3104, %v3101
      %v3123 = vpack.c.b16 %v3105, %v3102
      %v3124 = vpack.c.b16 %v3106, %v3103
      %v3125 = vpack.c.b16 %v3110, %v3107
      %v3126 = vpack.c.b16 %v3111, %v3108
      %v3127 = vpack.c.b16 %v3112, %v3109
      %v3128 = vpack.c.b16 %v3116, %v3113
      %v3129 = vpack.c.b16 %v3117, %v3114
      %v3130 = vpack.c.b16 %v3118, %v3115
      %v3131 = vpack.c.b16 %v3119, %v3119
      %v3132 = vpack.c.b16 %v3120, %v3120
      %v3133 = vpack.c.b16 %v3121, %v3121
      %v3178 = vunpack.c.l.b16 %v3046
      %v3179 = vunpack.c.l.b16 %v3047
      %v3180 = vunpack.c.l.b16 %v3048
      %v3181 = vunpack.c.l.b16 %v3049
      %v3182 = vunpack.c.l.b16 %v3050
      %v3183 = vunpack.c.l.b16 %v3051
      %v3184 = vunpack.c.l.b16 %v3052
      %v3185 = vunpack.c.l.b16 %v3053
      %v3186 = vunpack.c.l.b16 %v3054
      %v3187 = vunpack.c.l.b16 %v3055
      %v3188 = vunpack.c.l.b16 %v3056
      %v3189 = vunpack.c.l.b16 %v3057
      %v3190 = vunpack.c.l.b16 %v3058
      %v3191 = vunpack.c.l.b16 %v3059
      %v3192 = vunpack.c.l.b16 %v3060
      %v3193 = vunpack.c.l.b16 %v3061
      %v3194 = vunpack.c.l.b16 %v3062
      %v3195 = vunpack.c.l.b16 %v3063
      %v3196 = vunpack.c.l.b16 %v3064
      %v3197 = vunpack.c.l.b16 %v3065
      %v3198 = vunpack.c.l.b16 %v3066
      %v3199 = vunpack.c.l.b16 %v3067
      %v3200 = vunpack.c.l.b16 %v3068
      %v3201 = vunpack.c.l.b16 %v3069
      %v3202 = vunpack.c.l.b16 %v3070
      %v3203 = vunpack.c.l.b16 %v3071
      %v3204 = vunpack.c.l.b16 %v3072
      %v3205 = vunpack.c.l.b16 %v3073
      %v3206 = vunpack.c.l.b16 %v3074
      %v3207 = vunpack.c.l.b16 %v3075
      %v3208 = vunpack.c.l.b16 %v3076
      %v3209 = vunpack.c.l.b16 %v3077
      %v3210 = vunpack.c.l.b16 %v3078
      %v3211 = vunpack.c.l.b16 %v3079
      %v3212 = vunpack.c.l.b16 %v3080
      %v3213 = vunpack.c.l.b16 %v3081
      %v3214 = vpack.c.b16 %v3179, %v3178
      %v3215 = vpack.c.b16 %v3181, %v3180
      %v3216 = vpack.c.b16 %v3183, %v3182
      %v3217 = vpack.c.b16 %v3185, %v3184
      %v3218 = vpack.c.b16 %v3187, %v3186
      %v3219 = vpack.c.b16 %v3189, %v3188
      %v3220 = vpack.c.b16 %v3191, %v3190
      %v3221 = vpack.c.b16 %v3193, %v3192
      %v3222 = vpack.c.b16 %v3195, %v3194
      %v3223 = vpack.c.b16 %v3197, %v3196
      %v3224 = vpack.c.b16 %v3199, %v3198
      %v3225 = vpack.c.b16 %v3201, %v3200
      %v3226 = vpack.c.b16 %v3203, %v3202
      %v3227 = vpack.c.b16 %v3205, %v3204
      %v3228 = vpack.c.b16 %v3207, %v3206
      %v3229 = vpack.c.b16 %v3209, %v3208
      %v3230 = vpack.c.b16 %v3211, %v3210
      %v3231 = vpack.c.b16 %v3213, %v3212
      %v3251 = vsel %vm1245, %v3124, 0
      %v3254 = vsel %vm1245, %v3127, 0
      %v3257 = vsel %vm1245, %v3130, 0
      %v3260 = vsel %vm1245, %v3133, 0
      %3262 = vmatprep.subr.bf16.mxu0 0
      %3263 = vmatpush1.bf16.msra.mxu0 %v3214
      %3264 = vmatprep.subr.bf16.mxu0 0
      %3265 = vmatpush1.bf16.msra.mxu0 %v3215
      %3266 = vmatprep.subr.bf16.mxu0 0
      %3267 = vmatpush1.bf16.msra.mxu0 %v3216
      %3268 = vmatprep.subr.bf16.mxu0 0
      %3269 = vmatpush1.bf16.msra.mxu0 %v3217
      %3270 = vmatprep.subr.bf16.mxu0 0
      %3271 = vmatpush1.bf16.msra.mxu0 %v3218
      %3272 = vmatprep.subr.bf16.mxu0 0
      %3273 = vmatpush1.bf16.msra.mxu0 %v3219
      %3274 = vmatprep.subr.bf16.mxu0 0
      %3275 = vmatpush1.bf16.msra.mxu0 %v3220
      %3276 = vmatprep.subr.bf16.mxu0 0
      %3277 = vmatpush1.bf16.msra.mxu0 %v3221
      %3278 = vmatprep.subr.bf16.mxu0 0
      %3279 = vmatpush1.bf16.msra.mxu0 %v3222
      %3280 = vmatprep.subr.bf16.mxu0 0
      %3281 = vmatpush1.bf16.msra.mxu0 %v3223
      %3282 = vmatprep.subr.bf16.mxu0 0
      %3283 = vmatpush1.bf16.msra.mxu0 %v3224
      %3284 = vmatprep.subr.bf16.mxu0 0
      %3285 = vmatpush1.bf16.msra.mxu0 %v3225
      %3286 = vmatprep.subr.bf16.mxu0 0
      %3287 = vmatpush1.bf16.msra.mxu0 %v3226
      %3288 = vmatprep.subr.bf16.mxu0 0
      %3289 = vmatpush1.bf16.msra.mxu0 %v3227
      %3290 = vmatprep.subr.bf16.mxu0 0
      %3291 = vmatpush1.bf16.msra.mxu0 %v3228
      %3292 = vmatprep.subr.bf16.mxu0 0
      %3293 = vmatpush1.bf16.msra.mxu0 %v3229
      %3294 = vmatprep.mubr.bf16.mxu0 %v3123
      %3295 = vmatmul.mubr.bf16.gmra.mrb[0].mxu0 %v3122
      %v3296 = vpop.f32.mrb[0].mxu0
      %v3297 = vadd.f32 %v3086, %v3296
      %v3298 = vpop.f32.mrb[0].mxu0
      %v3299 = vpop.f32.mrb[0].mxu0
      %v3300 = vadd.f32 %v3086, %v3299
      %v3301 = vpop.f32.mrb[0].mxu0
      %3302 = vmatprep.mubr.bf16.mxu0 %v3126
      %3303 = vmatmul.mubr.bf16.gmra.mrb[0].mxu0 %v3125
      %v3304 = vpop.f32.mrb[0].mxu0
      %v3305 = vadd.f32 %v3086, %v3304
      %v3306 = vpop.f32.mrb[0].mxu0
      %v3307 = vpop.f32.mrb[0].mxu0
      %v3308 = vadd.f32 %v3086, %v3307
      %v3309 = vpop.f32.mrb[0].mxu0
      %3310 = vmatprep.mubr.bf16.mxu0 %v3129
      %3311 = vmatmul.mubr.bf16.gmra.mrb[0].mxu0 %v3128
      %v3312 = vpop.f32.mrb[0].mxu0
      %v3313 = vadd.f32 %v3086, %v3312
      %v3314 = vpop.f32.mrb[0].mxu0
      %v3315 = vpop.f32.mrb[0].mxu0
      %v3316 = vadd.f32 %v3086, %v3315
      %v3317 = vpop.f32.mrb[0].mxu0
      %3318 = vmatprep.mubr.bf16.mxu0 %v3132
      %3319 = vmatmul.mubr.bf16.gmra.mrb[0].mxu0 %v3131
      %v3320 = vpop.f32.mrb[0].mxu0
      %v3321 = vadd.f32 %v3086, %v3320
      %v3322 = vpop.f32.mrb[0].mxu0
      %v3323 = vpop.f32.mrb[0].mxu0
      %v3324 = vpop.f32.mrb[0].mxu0
      %3325 = vdwg.mxu0
      %3326 = vmatprep.subr.bf16.mxu0 0
      %3327 = vmatpush1.bf16.msra.mxu0 %v3230
      %3328 = vmatprep.subr.bf16.mxu0 0
      %3329 = vmatpush1.bf16.msra.mxu0 %v3231
      %3330 = vmatprep.subr.bf16.mxu0 0
      %3331 = vmatpush1.bf16.msra.mxu0 0
      %3332 = vmatprep.subr.bf16.mxu0 0
      %3333 = vmatpush1.bf16.msra.mxu0 0
      %3334 = vmatprep.subr.bf16.mxu0 0
      %3335 = vmatpush1.bf16.msra.mxu0 0
      %3336 = vmatprep.subr.bf16.mxu0 0
      %3337 = vmatpush1.bf16.msra.mxu0 0
      %3338 = vmatprep.subr.bf16.mxu0 0
      %3339 = vmatpush1.bf16.msra.mxu0 0
      %3340 = vmatprep.subr.bf16.mxu0 0
      %3341 = vmatpush1.bf16.msra.mxu0 0
      %3342 = vmatprep.subr.bf16.mxu0 0
      %3343 = vmatpush1.bf16.msra.mxu0 0
      %3344 = vmatprep.subr.bf16.mxu0 0
      %3345 = vmatpush1.bf16.msra.mxu0 0
      %3346 = vmatprep.subr.bf16.mxu0 0
      %3347 = vmatpush1.bf16.msra.mxu0 0
      %3348 = vmatprep.subr.bf16.mxu0 0
      %3349 = vmatpush1.bf16.msra.mxu0 0
      %3350 = vmatprep.subr.bf16.mxu0 0
      %3351 = vmatpush1.bf16.msra.mxu0 0
      %3352 = vmatprep.subr.bf16.mxu0 0
      %3353 = vmatpush1.bf16.msra.mxu0 0
      %3354 = vmatprep.subr.bf16.mxu0 0
      %3355 = vmatpush1.bf16.msra.mxu0 0
      %3356 = vmatprep.subr.bf16.mxu0 0
      %3357 = vmatpush1.bf16.msra.mxu0 0
      %3358 = vmatprep.mubr.bf16.mxu0 0
      %3359 = vmatmul.mubr.bf16.gmra.mrb[0].mxu0 %v3251
      %v3360 = vpop.f32.mrb[0].mxu0
      %v3361 = vadd.f32 %v3297, %v3360
      %v3362 = vpop.f32.mrb[0].mxu0
      %v3363 = vpop.f32.mrb[0].mxu0
      %v3364 = vadd.f32 %v3300, %v3363
      %v3365 = vpop.f32.mrb[0].mxu0
      %3366 = vmatprep.mubr.bf16.mxu0 0
      %3367 = vmatmul.mubr.bf16.gmra.mrb[0].mxu0 %v3254
      %v3368 = vpop.f32.mrb[0].mxu0
      %v3369 = vadd.f32 %v3305, %v3368
      %v3370 = vpop.f32.mrb[0].mxu0
      %v3371 = vpop.f32.mrb[0].mxu0
      %v3372 = vadd.f32 %v3308, %v3371
      %v3373 = vpop.f32.mrb[0].mxu0
      %3374 = vmatprep.mubr.bf16.mxu0 0
      %3375 = vmatmul.mubr.bf16.gmra.mrb[0].mxu0 %v3257
      %v3376 = vpop.f32.mrb[0].mxu0
      %v3377 = vadd.f32 %v3313, %v3376
      %v3378 = vpop.f32.mrb[0].mxu0
      %v3379 = vpop.f32.mrb[0].mxu0
      %v3380 = vadd.f32 %v3316, %v3379
      %v3381 = vpop.f32.mrb[0].mxu0
      %3382 = vmatprep.mubr.bf16.mxu0 0
      %3383 = vmatmul.mubr.bf16.gmra.mrb[0].mxu0 %v3260
      %v3384 = vpop.f32.mrb[0].mxu0
      %v3385 = vadd.f32 %v3321, %v3384
      %v3386 = vpop.f32.mrb[0].mxu0
      %v3387 = vpop.f32.mrb[0].mxu0
      %v3388 = vpop.f32.mrb[0].mxu0
      %3389 = vdwg.mxu0
      %v3390 = vmax.f32 %v3361, 0.0
      %v3391 = vmax.f32 %v3364, 0.0
      %v3392 = vmax.f32 %v3369, 0.0
      %v3393 = vmax.f32 %v3372, 0.0
      %v3394 = vmax.f32 %v3377, 0.0
      %v3395 = vmax.f32 %v3380, 0.0
      %v3396 = vmax.f32 %v3385, 0.0
      %3397 = vst.msk [vmem:[%s199] sm:$0xff] %vm1245, %v3390
      %3398 = vst.msk [vmem:[%s199 + $0x8] sm:$0xff] %vm1245, %v3391
      %3399 = vst.msk [vmem:[%s199 + $0x10] sm:$0xff] %vm1245, %v3392
      %3400 = vst.msk [vmem:[%s199 + $0x18] sm:$0xff] %vm1245, %v3393
      %3401 = vst.msk [vmem:[%s199 + $0x20] sm:$0xff] %vm1245, %v3394
      %3402 = vst.msk [vmem:[%s199 + $0x28] sm:$0xff] %vm1245, %v3395
      %3403 = vst.msk [vmem:[%s199 + $0x30] sm:$0xff] %vm1245, %v3396
      %s3404 = smul.u32 7, %s15
      %p3405 = scmp.lt.s32.totalorder %s3404, 13
      %s3406 = scalar_select %p3405, %s3404, 13
      %s3407 = smul.addr %s3406, 8
      %s3408 = scalar_lea.vmem %s4, %s3407
      // Predicated region
      $region37: #{encoder_forward.1} parent=35 // pred_check
        %p3409 = pneg %p122
      $region38: #{encoder_forward.1} parent=35 // pred_check_branch
        %3411 = sbr.rel (%p3409) target = $region40
      $region39: #{encoder_forward.1} parent=35 // pred_region
        %s3412 = smul.u32 7, %s15
      $region40: #{encoder_forward.1} parent=35 // pred_fallthru
        _
    $region36: #{encoder_forward.1} parent=5 // pred_fallthru
      _
    %p3413 = scmp.le.s32.totalorder 2, %s10
    // Predicated region
    $region41: #{encoder_forward.1} parent=5 // pred_check
      %p3414 = pneg %p3413
    $region42: #{encoder_forward.1} parent=5 // pred_check_branch
      %3416 = sbr.rel (%p3414) target = $region44
    $region43: #{encoder_forward.1} parent=5 // pred_region
      %s3417 = ssub.s32 %s10, 2
      // Predicated region
      $region45: #{encoder_forward.1} parent=43 // pred_check
        %p3418 = pneg %p128
      $region46: #{encoder_forward.1} parent=43 // pred_check_branch
        %3420 = sbr.rel (%p3418) target = $region48
      $region47: #{encoder_forward.1} parent=43 // pred_region
        %s3421 = smul.u32 7, %s16
        %p3422 = scmp.lt.s32.totalorder %s3421, 13
        %s3423 = scalar_select %p3422, %s3421, 13
        %s3424 = smul.addr %s3423, 8
        %s3425 = scalar_lea.vmem %s4, %s3424
      $region48: #{encoder_forward.1} parent=43 // pred_fallthru
        _
    $region44: #{encoder_forward.1} parent=5 // pred_fallthru
      _
  $region6: #{encoder_forward.1} parent=0 // loop_footer
    %s14 = sadd.s32 1, %s10
  $region7: #{encoder_forward.1} parent=0 // loop_footer_branch
    %9 = sbr.rel target = $region3
  $region8: #{encoder_forward.1} parent=0 // loop_exit
    _

</llo_original>
